<compile_context>
chip_gen: v6e
topology: v6e:2x2x1
jax: 0.10.0
libtpu: 0.0.40
codegen_flags: <defaults>
</compile_context>

<pallas_src>
import functools
import math

import jax
import jax.numpy as jnp
from jax import lax
from jax.experimental import pallas as pl
from jax.experimental.pallas import tpu as pltpu

# ---- config (small shapes consistent with the module) ----
VOCAB = 64
CTX = 32            # context_length == block_size
EMB = 32
N_HEADS = 4
N_LAYERS = 2
HEAD_DIM = EMB // N_HEADS
HIDDEN = 4 * EMB
EPS = 1e-5
V_PAD = 128         # lane-dense padded logits width (multiple of 128 >= VOCAB)
NEG_INF = -1e30     # finite mask sentinel (NaN-safe vs. -inf)


# ---------------- in-kernel math helpers ----------------
def _layernorm(x, scale, shift):
    mean = jnp.mean(x, axis=-1, keepdims=True)
    var = jnp.mean((x - mean) ** 2, axis=-1, keepdims=True)   # unbiased=False
    return scale * ((x - mean) * lax.rsqrt(var + EPS)) + shift


def _gelu(x):
    c = math.sqrt(2.0 / math.pi)
    return 0.5 * x * (1.0 + jnp.tanh(c * (x + 0.044715 * x * x * x)))


# ---------------- fused GPT kernel ----------------
def _gpt_kernel(x_ref, wq_ref, wk_ref, wv_ref, wo_ref, w1_ref, w2_ref,
                b1_ref, vecs_ref, fln_ref, wout_ref, out_ref, *, batch, seq_len):
    f32 = jnp.float32
    bf16 = jnp.bfloat16
    B, T = batch, seq_len

    x = x_ref[...]                      # (M, D) f32 residual stream, M = B*T
    M = x.shape[0]

    # (T, T) causal additive bias, built once; no integer div/mod.
    rows = lax.broadcasted_iota(jnp.int32, (T, T), 0)
    cols = lax.broadcasted_iota(jnp.int32, (T, T), 1)
    causal_bias = jnp.where(rows >= cols, 0.0, NEG_INF).astype(f32)

    for l in range(N_LAYERS):           # static unroll over layers
        vec = vecs_ref[l]               # (6, D) f32
        ln1_s, ln1_b = vec[0:1], vec[1:2]
        ln2_s, ln2_b = vec[2:3], vec[3:4]
        ob, b2 = vec[4:5], vec[5:6]
        b1 = b1_ref[l]                  # (1, 4D) f32

        # ---- attention sub-block ----
        shortcut = x
        hn = _layernorm(x, ln1_s, ln1_b)          # f32
        hn_b = hn.astype(bf16)                    # MXU operand

        attn = jnp.zeros((M, EMB), f32)
        for h in range(N_HEADS):                  # static unroll over heads
            # per-head projections straight out of small matmuls
            # (1/sqrt(HEAD_DIM) already folded into wq on the host)
            q = jnp.dot(hn_b, wq_ref[l, h], preferred_element_type=f32).astype(bf16)
            k = jnp.dot(hn_b, wk_ref[l, h], preferred_element_type=f32).astype(bf16)
            v = jnp.dot(hn_b, wv_ref[l, h], preferred_element_type=f32).astype(bf16)

            parts = []
            for b in range(B):                    # per-(head, batch) T x T tile
                qg = q[b * T:(b + 1) * T]         # sublane-aligned slices
                kg = k[b * T:(b + 1) * T]
                vg = v[b * T:(b + 1) * T]
                s = lax.dot_general(qg, kg, (((1,), (1,)), ((), ())),
                                    preferred_element_type=f32)      # (T, T)
                s = s + causal_bias
                mx = jnp.max(s, axis=-1, keepdims=True)
                p = jnp.exp(s - mx)
                denom = jnp.sum(p, axis=-1, keepdims=True)
                p = p * pl.reciprocal(denom, approx=True)
                parts.append(jnp.dot(p.astype(bf16), vg,
                                     preferred_element_type=f32))    # (T, Hd)
            ctx = jnp.concatenate(parts, axis=0)                      # (M, Hd)

            # out-projection: accumulate per-head contribution (no lane concat)
            attn = attn + jnp.dot(ctx.astype(bf16), wo_ref[l, h],
                                  preferred_element_type=f32)         # (M, D)

        x = attn + ob + shortcut

        # ---- feed-forward sub-block ----
        shortcut = x
        hn = _layernorm(x, ln2_s, ln2_b)
        hidden = jnp.dot(hn.astype(bf16), w1_ref[l],
                         preferred_element_type=f32) + b1
        hidden = _gelu(hidden)
        x = jnp.dot(hidden.astype(bf16), w2_ref[l],
                    preferred_element_type=f32) + b2 + shortcut

    # ---- final LayerNorm + LM head (lane-dense padded output) ----
    fln = fln_ref[...]                  # (2, D): scale, shift
    hn = _layernorm(x, fln[0:1], fln[1:2])
    out_ref[...] = jnp.dot(hn.astype(bf16), wout_ref[...],
                           preferred_element_type=f32)


# ---------------- wrapper ----------------
def gpt_forward(params, in_idx):
    B, T = in_idx.shape
    # glue: embedding lookups (gather stays in plain JAX)
    tok = params["tok_emb"][in_idx]                 # (B, T, D)
    pos = params["pos_emb"][:T]                     # (T, D)
    x = (tok + pos).reshape(B * T, EMB).astype(jnp.float32)   # drop_emb identity

    L, D, H, Hd = N_LAYERS, EMB, N_HEADS, HEAD_DIM
    inv_sqrt = 1.0 / math.sqrt(Hd)

    # Host-side (one-off, free) weight relayout:
    #   * q/k/v head-blocked (L, H, D, Hd); 1/sqrt(Hd) folded into Wq.
    #   * out_proj split along its input dim -> (L, H, Hd, D).
    #   * all MXU operands cast to bf16 (kernel accumulates in f32).
    wq = (params["w_q"] * inv_sqrt).reshape(L, D, H, Hd).transpose(0, 2, 1, 3)
    wq = wq.astype(jnp.bfloat16)
    wk = params["w_k"].reshape(L, D, H, Hd).transpose(0, 2, 1, 3).astype(jnp.bfloat16)
    wv = params["w_v"].reshape(L, D, H, Hd).transpose(0, 2, 1, 3).astype(jnp.bfloat16)
    wo = params["w_o"].reshape(L, H, Hd, D).astype(jnp.bfloat16)
    w1 = params["w_1"].astype(jnp.bfloat16)
    w2 = params["w_2"].astype(jnp.bfloat16)
    # pad LM head to 128 lanes so the kernel's only HBM write is lane-dense
    w_out_p = jnp.zeros((D, V_PAD), jnp.float32).at[:, :VOCAB].set(params["w_out"])
    w_out_p = w_out_p.astype(jnp.bfloat16)

    operands = (x, wq, wk, wv, wo, w1, w2,
                params["b_1"], params["vecs"], params["fln"], w_out_p)

    # No grid -> single invocation, single-buffered whole-array VMEM refs.
    vmem = pl.BlockSpec(memory_space=pltpu.MemorySpace.VMEM)
    kernel = functools.partial(_gpt_kernel, batch=B, seq_len=T)
    out = pl.pallas_call(
        kernel,
        out_shape=jax.ShapeDtypeStruct((B * T, V_PAD), jnp.float32),
        in_specs=[vmem] * len(operands),
        out_specs=vmem,
    )(*operands)

    logits = out[:, :VOCAB].reshape(B, T, VOCAB)
    return logits, None                             # (logits, loss=None)


# ---------------- deterministic init ----------------
def init_params(key):
    ks = jax.random.split(key, 12)

    def nrm(k, shape):
        return (0.02 * jax.random.normal(k, shape)).astype(jnp.float32)

    # vecs rows per layer: 0 ln1_scale, 1 ln1_shift, 2 ln2_scale, 3 ln2_shift,
    #                      4 out_proj bias, 5 ff linear2 bias
    vecs = jnp.zeros((N_LAYERS, 6, EMB), jnp.float32)
    vecs = vecs.at[:, 0, :].set(1.0)
    vecs = vecs.at[:, 2, :].set(1.0)
    vecs = vecs.at[:, 4, :].set(nrm(ks[7], (N_LAYERS, EMB)))
    vecs = vecs.at[:, 5, :].set(nrm(ks[8], (N_LAYERS, EMB)))

    return {
        "tok_emb": nrm(ks[0], (VOCAB, EMB)),
        "pos_emb": nrm(ks[1], (CTX, EMB)),
        "w_q":   nrm(ks[2],  (N_LAYERS, EMB, EMB)),
        "w_k":   nrm(ks[10], (N_LAYERS, EMB, EMB)),
        "w_v":   nrm(ks[11], (N_LAYERS, EMB, EMB)),
        "w_o":   nrm(ks[3],  (N_LAYERS, EMB, EMB)),
        "w_1":   nrm(ks[4],  (N_LAYERS, EMB, HIDDEN)),
        "w_2":   nrm(ks[5],  (N_LAYERS, HIDDEN, EMB)),
        "b_1":   nrm(ks[9],  (N_LAYERS, 1, HIDDEN)),
        "vecs":  vecs,
        "fln":   jnp.concatenate([jnp.ones((1, EMB), jnp.float32),
                                  jnp.zeros((1, EMB), jnp.float32)], axis=0),
        "w_out": nrm(ks[6], (EMB, VOCAB)),
    }


# ---------------- plain-JAX reference (fp32, matches the PyTorch module) ----
def ref_forward(params, in_idx):
    B, T = in_idx.shape

    def ln(x, s, b):
        m = x.mean(-1, keepdims=True)
        v = ((x - m) ** 2).mean(-1, keepdims=True)
        return s * (x - m) / jnp.sqrt(v + EPS) + b

    x = params["tok_emb"][in_idx] + params["pos_emb"][:T]
    for l in range(N_LAYERS):
        vec = params["vecs"][l]
        ln1_s, ln1_b, ln2_s, ln2_b, ob, b2 = (vec[i] for i in range(6))
        wq, wk, wv, wo = (params[n][l] for n in ("w_q", "w_k", "w_v", "w_o"))
        w1, b1, w2 = params["w_1"][l], params["b_1"][l][0], params["w_2"][l]

        sc = x
        h = ln(x, ln1_s, ln1_b)
        q = (h @ wq).reshape(B, T, N_HEADS, HEAD_DIM).transpose(0, 2, 1, 3)
        k = (h @ wk).reshape(B, T, N_HEADS, HEAD_DIM).transpose(0, 2, 1, 3)
        v = (h @ wv).reshape(B, T, N_HEADS, HEAD_DIM).transpose(0, 2, 1, 3)
        scores = q @ jnp.swapaxes(k, -1, -2)
        mask = jnp.triu(jnp.ones((T, T), bool), 1)
        scores = jnp.where(mask, -jnp.inf, scores)
        w = jax.nn.softmax(scores / math.sqrt(HEAD_DIM), axis=-1)
        ctx = (w @ v).transpose(0, 2, 1, 3).reshape(B, T, EMB)
        x = ctx @ wo + ob + sc

        sc = x
        h = ln(x, ln2_s, ln2_b)
        x = _gelu(h @ w1 + b1) @ w2 + b2 + sc

    x = ln(x, params["fln"][0], params["fln"][1])
    return x @ params["w_out"]


if __name__ == "__main__":
    key = jax.random.PRNGKey(0)
    params = init_params(key)

    B, T = 2, 8
    in_idx = jax.random.randint(jax.random.fold_in(key, 999), (B, T), 0, VOCAB,
                                dtype=jnp.int32)

    logits, loss = gpt_forward(params, in_idx)
    logits = jax.block_until_ready(logits)

    assert logits.shape == (B, T, VOCAB), logits.shape
    assert loss is None

    ref = ref_forward(params, in_idx)
    assert bool(jnp.all(jnp.isfinite(logits)))
    assert bool(jnp.allclose(logits, ref, atol=1e-2, rtol=1e-2)), \
        float(jnp.max(jnp.abs(logits - ref)))

    print("KERNEL_OK")
</pallas_src>

<mosaic_0001>
module attributes {stable_mosaic.version = 11 : i64} {
  func.func @_gpt_kernel(%arg0: memref<16x32xf32, #tpu.memory_space<vmem>>, %arg1: memref<2x4x32x8xbf16, #tpu.memory_space<vmem>>, %arg2: memref<2x4x32x8xbf16, #tpu.memory_space<vmem>>, %arg3: memref<2x4x32x8xbf16, #tpu.memory_space<vmem>>, %arg4: memref<2x4x8x32xbf16, #tpu.memory_space<vmem>>, %arg5: memref<2x32x128xbf16, #tpu.memory_space<vmem>>, %arg6: memref<2x128x32xbf16, #tpu.memory_space<vmem>>, %arg7: memref<2x1x128xf32, #tpu.memory_space<vmem>>, %arg8: memref<2x6x32xf32, #tpu.memory_space<vmem>>, %arg9: memref<2x32xf32, #tpu.memory_space<vmem>>, %arg10: memref<32x128xbf16, #tpu.memory_space<vmem>>, %arg11: memref<16x128xf32, #tpu.memory_space<vmem>>) attributes {dimension_semantics = [], scalar_prefetch = 0 : i64, scratch_operands = 0 : i64, tpu.core_type = #tpu.core_type<tc>} {
    %c0 = arith.constant 0 : index
    %c0_0 = arith.constant 0 : index
    %0 = vector.load %arg0[%c0, %c0_0] : memref<16x32xf32, #tpu.memory_space<vmem>>, vector<16x32xf32>
    %1 = tpu.iota {dimensions = array<i32: 0>} : vector<8x8xi32>
    %2 = tpu.iota {dimensions = array<i32: 1>} : vector<8x8xi32>
    %3 = arith.cmpi sge, %1, %2 : vector<8x8xi32>
    %cst = arith.constant 0.000000e+00 : f32
    %cst_1 = arith.constant -1.000000e+30 : f32
    %4 = vector.broadcast %cst : f32 to vector<8x8xf32>
    %5 = vector.broadcast %cst_1 : f32 to vector<8x8xf32>
    %6 = arith.select %3, %4, %5 : vector<8x8xi1>, vector<8x8xf32>
    %c0_2 = arith.constant 0 : index
    %c0_3 = arith.constant 0 : index
    %c0_4 = arith.constant 0 : index
    %7 = vector.load %arg8[%c0_2, %c0_3, %c0_4] : memref<2x6x32xf32, #tpu.memory_space<vmem>>, vector<1x6x32xf32>
    %8 = vector.shape_cast %7 : vector<1x6x32xf32> to vector<6x32xf32>
    %9 = vector.extract_strided_slice %8 {offsets = [0, 0], sizes = [1, 32], strides = [1, 1]} : vector<6x32xf32> to vector<1x32xf32>
    %10 = vector.extract_strided_slice %8 {offsets = [1, 0], sizes = [1, 32], strides = [1, 1]} : vector<6x32xf32> to vector<1x32xf32>
    %11 = vector.extract_strided_slice %8 {offsets = [2, 0], sizes = [1, 32], strides = [1, 1]} : vector<6x32xf32> to vector<1x32xf32>
    %12 = vector.extract_strided_slice %8 {offsets = [3, 0], sizes = [1, 32], strides = [1, 1]} : vector<6x32xf32> to vector<1x32xf32>
    %13 = vector.extract_strided_slice %8 {offsets = [4, 0], sizes = [1, 32], strides = [1, 1]} : vector<6x32xf32> to vector<1x32xf32>
    %14 = vector.extract_strided_slice %8 {offsets = [5, 0], sizes = [1, 32], strides = [1, 1]} : vector<6x32xf32> to vector<1x32xf32>
    %c0_5 = arith.constant 0 : index
    %c0_6 = arith.constant 0 : index
    %c0_7 = arith.constant 0 : index
    %15 = vector.load %arg7[%c0_5, %c0_6, %c0_7] : memref<2x1x128xf32, #tpu.memory_space<vmem>>, vector<1x1x128xf32>
    %16 = vector.shape_cast %15 : vector<1x1x128xf32> to vector<1x128xf32>
    %cst_8 = arith.constant dense<0.000000e+00> : vector<16xf32>
    %17 = vector.multi_reduction <add>, %0, %cst_8 [1] : vector<16x32xf32> to vector<16xf32>
    %18 = vector.shape_cast %17 : vector<16xf32> to vector<16x1xf32>
    %cst_9 = arith.constant 3.200000e+01 : f32
    %19 = vector.broadcast %cst_9 : f32 to vector<16x1xf32>
    %20 = arith.divf %18, %19 : vector<16x1xf32>
    %21 = vector.broadcast %20 : vector<16x1xf32> to vector<16x32xf32>
    %22 = arith.subf %0, %21 : vector<16x32xf32>
    %23 = arith.mulf %22, %22 : vector<16x32xf32>
    %cst_10 = arith.constant dense<0.000000e+00> : vector<16xf32>
    %24 = vector.multi_reduction <add>, %23, %cst_10 [1] : vector<16x32xf32> to vector<16xf32>
    %25 = vector.shape_cast %24 : vector<16xf32> to vector<16x1xf32>
    %cst_11 = arith.constant 3.200000e+01 : f32
    %26 = vector.broadcast %cst_11 : f32 to vector<16x1xf32>
    %27 = arith.divf %25, %26 : vector<16x1xf32>
    %28 = vector.broadcast %20 : vector<16x1xf32> to vector<16x32xf32>
    %29 = arith.subf %0, %28 : vector<16x32xf32>
    %cst_12 = arith.constant 9.99999974E-6 : f32
    %30 = vector.broadcast %cst_12 : f32 to vector<16x1xf32>
    %31 = arith.addf %27, %30 : vector<16x1xf32>
    %32 = math.rsqrt %31 : vector<16x1xf32>
    %33 = vector.broadcast %32 : vector<16x1xf32> to vector<16x32xf32>
    %34 = arith.mulf %29, %33 : vector<16x32xf32>
    %35 = vector.broadcast %9 : vector<1x32xf32> to vector<16x32xf32>
    %36 = arith.mulf %35, %34 : vector<16x32xf32>
    %37 = vector.broadcast %10 : vector<1x32xf32> to vector<16x32xf32>
    %38 = arith.addf %36, %37 : vector<16x32xf32>
    %39 = arith.truncf %38 : vector<16x32xf32> to vector<16x32xbf16>
    %cst_13 = arith.constant 0.000000e+00 : f32
    %40 = vector.broadcast %cst_13 : f32 to vector<16x32xf32>
    %c0_14 = arith.constant 0 : index
    %c0_15 = arith.constant 0 : index
    %c0_16 = arith.constant 0 : index
    %c0_17 = arith.constant 0 : index
    %41 = vector.load %arg1[%c0_14, %c0_15, %c0_16, %c0_17] : memref<2x4x32x8xbf16, #tpu.memory_space<vmem>>, vector<1x1x32x8xbf16>
    %42 = vector.shape_cast %41 : vector<1x1x32x8xbf16> to vector<32x8xbf16>
    %cst_18 = arith.constant dense<0.000000e+00> : vector<16x8xf32>
    %43 = tpu.matmul %39, %42, %cst_18 {dimension_numbers = #tpu.dot_dimension_numbers<[1], [0], [0], [1], [0, 0, 1, 1], [], []>} : vector<16x32xbf16>, vector<32x8xbf16>, vector<16x8xf32> -> vector<16x8xf32>
    %44 = arith.truncf %43 : vector<16x8xf32> to vector<16x8xbf16>
    %c0_19 = arith.constant 0 : index
    %c0_20 = arith.constant 0 : index
    %c0_21 = arith.constant 0 : index
    %c0_22 = arith.constant 0 : index
    %45 = vector.load %arg2[%c0_19, %c0_20, %c0_21, %c0_22] : memref<2x4x32x8xbf16, #tpu.memory_space<vmem>>, vector<1x1x32x8xbf16>
    %46 = vector.shape_cast %45 : vector<1x1x32x8xbf16> to vector<32x8xbf16>
    %cst_23 = arith.constant dense<0.000000e+00> : vector<16x8xf32>
    %47 = tpu.matmul %39, %46, %cst_23 {dimension_numbers = #tpu.dot_dimension_numbers<[1], [0], [0], [1], [0, 0, 1, 1], [], []>} : vector<16x32xbf16>, vector<32x8xbf16>, vector<16x8xf32> -> vector<16x8xf32>
    %48 = arith.truncf %47 : vector<16x8xf32> to vector<16x8xbf16>
    %c0_24 = arith.constant 0 : index
    %c0_25 = arith.constant 0 : index
    %c0_26 = arith.constant 0 : index
    %c0_27 = arith.constant 0 : index
    %49 = vector.load %arg3[%c0_24, %c0_25, %c0_26, %c0_27] : memref<2x4x32x8xbf16, #tpu.memory_space<vmem>>, vector<1x1x32x8xbf16>
    %50 = vector.shape_cast %49 : vector<1x1x32x8xbf16> to vector<32x8xbf16>
    %cst_28 = arith.constant dense<0.000000e+00> : vector<16x8xf32>
    %51 = tpu.matmul %39, %50, %cst_28 {dimension_numbers = #tpu.dot_dimension_numbers<[1], [0], [0], [1], [0, 0, 1, 1], [], []>} : vector<16x32xbf16>, vector<32x8xbf16>, vector<16x8xf32> -> vector<16x8xf32>
    %52 = arith.truncf %51 : vector<16x8xf32> to vector<16x8xbf16>
    %53 = vector.extract_strided_slice %44 {offsets = [0, 0], sizes = [8, 8], strides = [1, 1]} : vector<16x8xbf16> to vector<8x8xbf16>
    %54 = vector.extract_strided_slice %48 {offsets = [0, 0], sizes = [8, 8], strides = [1, 1]} : vector<16x8xbf16> to vector<8x8xbf16>
    %55 = vector.extract_strided_slice %52 {offsets = [0, 0], sizes = [8, 8], strides = [1, 1]} : vector<16x8xbf16> to vector<8x8xbf16>
    %cst_29 = arith.constant dense<0.000000e+00> : vector<8x8xf32>
    %56 = tpu.matmul %53, %54, %cst_29 {dimension_numbers = #tpu.dot_dimension_numbers<[1], [1], [0], [0], [0, 0, 1, 0], [], []>} : vector<8x8xbf16>, vector<8x8xbf16>, vector<8x8xf32> -> vector<8x8xf32>
    %57 = arith.addf %56, %6 : vector<8x8xf32>
    %cst_30 = arith.constant dense<0xFF800000> : vector<8xf32>
    %58 = vector.multi_reduction <maximumf>, %57, %cst_30 [1] : vector<8x8xf32> to vector<8xf32>
    %59 = vector.shape_cast %58 : vector<8xf32> to vector<8x1xf32>
    %60 = vector.broadcast %59 : vector<8x1xf32> to vector<8x8xf32>
    %61 = arith.subf %57, %60 : vector<8x8xf32>
    %62 = math.exp %61 : vector<8x8xf32>
    %cst_31 = arith.constant dense<0.000000e+00> : vector<8xf32>
    %63 = vector.multi_reduction <add>, %62, %cst_31 [1] : vector<8x8xf32> to vector<8xf32>
    %64 = vector.shape_cast %63 : vector<8xf32> to vector<8x1xf32>
    %65 = tpu.reciprocal %64 {approx = true} : vector<8x1xf32> -> vector<8x1xf32>
    %66 = vector.broadcast %65 : vector<8x1xf32> to vector<8x8xf32>
    %67 = arith.mulf %62, %66 : vector<8x8xf32>
    %68 = arith.truncf %67 : vector<8x8xf32> to vector<8x8xbf16>
    %cst_32 = arith.constant dense<0.000000e+00> : vector<8x8xf32>
    %69 = tpu.matmul %68, %55, %cst_32 {dimension_numbers = #tpu.dot_dimension_numbers<[1], [0], [0], [1], [0, 0, 1, 1], [], []>} : vector<8x8xbf16>, vector<8x8xbf16>, vector<8x8xf32> -> vector<8x8xf32>
    %70 = vector.extract_strided_slice %44 {offsets = [8, 0], sizes = [8, 8], strides = [1, 1]} : vector<16x8xbf16> to vector<8x8xbf16>
    %71 = vector.extract_strided_slice %48 {offsets = [8, 0], sizes = [8, 8], strides = [1, 1]} : vector<16x8xbf16> to vector<8x8xbf16>
    %72 = vector.extract_strided_slice %52 {offsets = [8, 0], sizes = [8, 8], strides = [1, 1]} : vector<16x8xbf16> to vector<8x8xbf16>
    %cst_33 = arith.constant dense<0.000000e+00> : vector<8x8xf32>
    %73 = tpu.matmul %70, %71, %cst_33 {dimension_numbers = #tpu.dot_dimension_numbers<[1], [1], [0], [0], [0, 0, 1, 0], [], []>} : vector<8x8xbf16>, vector<8x8xbf16>, vector<8x8xf32> -> vector<8x8xf32>
    %74 = arith.addf %73, %6 : vector<8x8xf32>
    %cst_34 = arith.constant dense<0xFF800000> : vector<8xf32>
    %75 = vector.multi_reduction <maximumf>, %74, %cst_34 [1] : vector<8x8xf32> to vector<8xf32>
    %76 = vector.shape_cast %75 : vector<8xf32> to vector<8x1xf32>
    %77 = vector.broadcast %76 : vector<8x1xf32> to vector<8x8xf32>
    %78 = arith.subf %74, %77 : vector<8x8xf32>
    %79 = math.exp %78 : vector<8x8xf32>
    %cst_35 = arith.constant dense<0.000000e+00> : vector<8xf32>
    %80 = vector.multi_reduction <add>, %79, %cst_35 [1] : vector<8x8xf32> to vector<8xf32>
    %81 = vector.shape_cast %80 : vector<8xf32> to vector<8x1xf32>
    %82 = tpu.reciprocal %81 {approx = true} : vector<8x1xf32> -> vector<8x1xf32>
    %83 = vector.broadcast %82 : vector<8x1xf32> to vector<8x8xf32>
    %84 = arith.mulf %79, %83 : vector<8x8xf32>
    %85 = arith.truncf %84 : vector<8x8xf32> to vector<8x8xbf16>
    %cst_36 = arith.constant dense<0.000000e+00> : vector<8x8xf32>
    %86 = tpu.matmul %85, %72, %cst_36 {dimension_numbers = #tpu.dot_dimension_numbers<[1], [0], [0], [1], [0, 0, 1, 1], [], []>} : vector<8x8xbf16>, vector<8x8xbf16>, vector<8x8xf32> -> vector<8x8xf32>
    %87 = tpu.concatenate %69, %86 in 0 : vector<8x8xf32>, vector<8x8xf32> -> vector<16x8xf32>
    %88 = arith.truncf %87 : vector<16x8xf32> to vector<16x8xbf16>
    %c0_37 = arith.constant 0 : index
    %c0_38 = arith.constant 0 : index
    %c0_39 = arith.constant 0 : index
    %c0_40 = arith.constant 0 : index
    %89 = vector.load %arg4[%c0_37, %c0_38, %c0_39, %c0_40] : memref<2x4x8x32xbf16, #tpu.memory_space<vmem>>, vector<1x1x8x32xbf16>
    %90 = vector.shape_cast %89 : vector<1x1x8x32xbf16> to vector<8x32xbf16>
    %cst_41 = arith.constant dense<0.000000e+00> : vector<16x32xf32>
    %91 = tpu.matmul %88, %90, %cst_41 {dimension_numbers = #tpu.dot_dimension_numbers<[1], [0], [0], [1], [0, 0, 1, 1], [], []>} : vector<16x8xbf16>, vector<8x32xbf16>, vector<16x32xf32> -> vector<16x32xf32>
    %92 = arith.addf %40, %91 : vector<16x32xf32>
    %c0_42 = arith.constant 0 : index
    %c1 = arith.constant 1 : index
    %c0_43 = arith.constant 0 : index
    %c0_44 = arith.constant 0 : index
    %93 = vector.load %arg1[%c0_42, %c1, %c0_43, %c0_44] : memref<2x4x32x8xbf16, #tpu.memory_space<vmem>>, vector<1x1x32x8xbf16>
    %94 = vector.shape_cast %93 : vector<1x1x32x8xbf16> to vector<32x8xbf16>
    %cst_45 = arith.constant dense<0.000000e+00> : vector<16x8xf32>
    %95 = tpu.matmul %39, %94, %cst_45 {dimension_numbers = #tpu.dot_dimension_numbers<[1], [0], [0], [1], [0, 0, 1, 1], [], []>} : vector<16x32xbf16>, vector<32x8xbf16>, vector<16x8xf32> -> vector<16x8xf32>
    %96 = arith.truncf %95 : vector<16x8xf32> to vector<16x8xbf16>
    %c0_46 = arith.constant 0 : index
    %c1_47 = arith.constant 1 : index
    %c0_48 = arith.constant 0 : index
    %c0_49 = arith.constant 0 : index
    %97 = vector.load %arg2[%c0_46, %c1_47, %c0_48, %c0_49] : memref<2x4x32x8xbf16, #tpu.memory_space<vmem>>, vector<1x1x32x8xbf16>
    %98 = vector.shape_cast %97 : vector<1x1x32x8xbf16> to vector<32x8xbf16>
    %cst_50 = arith.constant dense<0.000000e+00> : vector<16x8xf32>
    %99 = tpu.matmul %39, %98, %cst_50 {dimension_numbers = #tpu.dot_dimension_numbers<[1], [0], [0], [1], [0, 0, 1, 1], [], []>} : vector<16x32xbf16>, vector<32x8xbf16>, vector<16x8xf32> -> vector<16x8xf32>
    %100 = arith.truncf %99 : vector<16x8xf32> to vector<16x8xbf16>
    %c0_51 = arith.constant 0 : index
    %c1_52 = arith.constant 1 : index
    %c0_53 = arith.constant 0 : index
    %c0_54 = arith.constant 0 : index
    %101 = vector.load %arg3[%c0_51, %c1_52, %c0_53, %c0_54] : memref<2x4x32x8xbf16, #tpu.memory_space<vmem>>, vector<1x1x32x8xbf16>
    %102 = vector.shape_cast %101 : vector<1x1x32x8xbf16> to vector<32x8xbf16>
    %cst_55 = arith.constant dense<0.000000e+00> : vector<16x8xf32>
    %103 = tpu.matmul %39, %102, %cst_55 {dimension_numbers = #tpu.dot_dimension_numbers<[1], [0], [0], [1], [0, 0, 1, 1], [], []>} : vector<16x32xbf16>, vector<32x8xbf16>, vector<16x8xf32> -> vector<16x8xf32>
    %104 = arith.truncf %103 : vector<16x8xf32> to vector<16x8xbf16>
    %105 = vector.extract_strided_slice %96 {offsets = [0, 0], sizes = [8, 8], strides = [1, 1]} : vector<16x8xbf16> to vector<8x8xbf16>
    %106 = vector.extract_strided_slice %100 {offsets = [0, 0], sizes = [8, 8], strides = [1, 1]} : vector<16x8xbf16> to vector<8x8xbf16>
    %107 = vector.extract_strided_slice %104 {offsets = [0, 0], sizes = [8, 8], strides = [1, 1]} : vector<16x8xbf16> to vector<8x8xbf16>
    %cst_56 = arith.constant dense<0.000000e+00> : vector<8x8xf32>
    %108 = tpu.matmul %105, %106, %cst_56 {dimension_numbers = #tpu.dot_dimension_numbers<[1], [1], [0], [0], [0, 0, 1, 0], [], []>} : vector<8x8xbf16>, vector<8x8xbf16>, vector<8x8xf32> -> vector<8x8xf32>
    %109 = arith.addf %108, %6 : vector<8x8xf32>
    %cst_57 = arith.constant dense<0xFF800000> : vector<8xf32>
    %110 = vector.multi_reduction <maximumf>, %109, %cst_57 [1] : vector<8x8xf32> to vector<8xf32>
    %111 = vector.shape_cast %110 : vector<8xf32> to vector<8x1xf32>
    %112 = vector.broadcast %111 : vector<8x1xf32> to vector<8x8xf32>
    %113 = arith.subf %109, %112 : vector<8x8xf32>
    %114 = math.exp %113 : vector<8x8xf32>
    %cst_58 = arith.constant dense<0.000000e+00> : vector<8xf32>
    %115 = vector.multi_reduction <add>, %114, %cst_58 [1] : vector<8x8xf32> to vector<8xf32>
    %116 = vector.shape_cast %115 : vector<8xf32> to vector<8x1xf32>
    %117 = tpu.reciprocal %116 {approx = true} : vector<8x1xf32> -> vector<8x1xf32>
    %118 = vector.broadcast %117 : vector<8x1xf32> to vector<8x8xf32>
    %119 = arith.mulf %114, %118 : vector<8x8xf32>
    %120 = arith.truncf %119 : vector<8x8xf32> to vector<8x8xbf16>
    %cst_59 = arith.constant dense<0.000000e+00> : vector<8x8xf32>
    %121 = tpu.matmul %120, %107, %cst_59 {dimension_numbers = #tpu.dot_dimension_numbers<[1], [0], [0], [1], [0, 0, 1, 1], [], []>} : vector<8x8xbf16>, vector<8x8xbf16>, vector<8x8xf32> -> vector<8x8xf32>
    %122 = vector.extract_strided_slice %96 {offsets = [8, 0], sizes = [8, 8], strides = [1, 1]} : vector<16x8xbf16> to vector<8x8xbf16>
    %123 = vector.extract_strided_slice %100 {offsets = [8, 0], sizes = [8, 8], strides = [1, 1]} : vector<16x8xbf16> to vector<8x8xbf16>
    %124 = vector.extract_strided_slice %104 {offsets = [8, 0], sizes = [8, 8], strides = [1, 1]} : vector<16x8xbf16> to vector<8x8xbf16>
    %cst_60 = arith.constant dense<0.000000e+00> : vector<8x8xf32>
    %125 = tpu.matmul %122, %123, %cst_60 {dimension_numbers = #tpu.dot_dimension_numbers<[1], [1], [0], [0], [0, 0, 1, 0], [], []>} : vector<8x8xbf16>, vector<8x8xbf16>, vector<8x8xf32> -> vector<8x8xf32>
    %126 = arith.addf %125, %6 : vector<8x8xf32>
    %cst_61 = arith.constant dense<0xFF800000> : vector<8xf32>
    %127 = vector.multi_reduction <maximumf>, %126, %cst_61 [1] : vector<8x8xf32> to vector<8xf32>
    %128 = vector.shape_cast %127 : vector<8xf32> to vector<8x1xf32>
    %129 = vector.broadcast %128 : vector<8x1xf32> to vector<8x8xf32>
    %130 = arith.subf %126, %129 : vector<8x8xf32>
    %131 = math.exp %130 : vector<8x8xf32>
    %cst_62 = arith.constant dense<0.000000e+00> : vector<8xf32>
    %132 = vector.multi_reduction <add>, %131, %cst_62 [1] : vector<8x8xf32> to vector<8xf32>
    %133 = vector.shape_cast %132 : vector<8xf32> to vector<8x1xf32>
    %134 = tpu.reciprocal %133 {approx = true} : vector<8x1xf32> -> vector<8x1xf32>
    %135 = vector.broadcast %134 : vector<8x1xf32> to vector<8x8xf32>
    %136 = arith.mulf %131, %135 : vector<8x8xf32>
    %137 = arith.truncf %136 : vector<8x8xf32> to vector<8x8xbf16>
    %cst_63 = arith.constant dense<0.000000e+00> : vector<8x8xf32>
    %138 = tpu.matmul %137, %124, %cst_63 {dimension_numbers = #tpu.dot_dimension_numbers<[1], [0], [0], [1], [0, 0, 1, 1], [], []>} : vector<8x8xbf16>, vector<8x8xbf16>, vector<8x8xf32> -> vector<8x8xf32>
    %139 = tpu.concatenate %121, %138 in 0 : vector<8x8xf32>, vector<8x8xf32> -> vector<16x8xf32>
    %140 = arith.truncf %139 : vector<16x8xf32> to vector<16x8xbf16>
    %c0_64 = arith.constant 0 : index
    %c1_65 = arith.constant 1 : index
    %c0_66 = arith.constant 0 : index
    %c0_67 = arith.constant 0 : index
    %141 = vector.load %arg4[%c0_64, %c1_65, %c0_66, %c0_67] : memref<2x4x8x32xbf16, #tpu.memory_space<vmem>>, vector<1x1x8x32xbf16>
    %142 = vector.shape_cast %141 : vector<1x1x8x32xbf16> to vector<8x32xbf16>
    %cst_68 = arith.constant dense<0.000000e+00> : vector<16x32xf32>
    %143 = tpu.matmul %140, %142, %cst_68 {dimension_numbers = #tpu.dot_dimension_numbers<[1], [0], [0], [1], [0, 0, 1, 1], [], []>} : vector<16x8xbf16>, vector<8x32xbf16>, vector<16x32xf32> -> vector<16x32xf32>
    %144 = arith.addf %92, %143 : vector<16x32xf32>
    %c0_69 = arith.constant 0 : index
    %c2 = arith.constant 2 : index
    %c0_70 = arith.constant 0 : index
    %c0_71 = arith.constant 0 : index
    %145 = vector.load %arg1[%c0_69, %c2, %c0_70, %c0_71] : memref<2x4x32x8xbf16, #tpu.memory_space<vmem>>, vector<1x1x32x8xbf16>
    %146 = vector.shape_cast %145 : vector<1x1x32x8xbf16> to vector<32x8xbf16>
    %cst_72 = arith.constant dense<0.000000e+00> : vector<16x8xf32>
    %147 = tpu.matmul %39, %146, %cst_72 {dimension_numbers = #tpu.dot_dimension_numbers<[1], [0], [0], [1], [0, 0, 1, 1], [], []>} : vector<16x32xbf16>, vector<32x8xbf16>, vector<16x8xf32> -> vector<16x8xf32>
    %148 = arith.truncf %147 : vector<16x8xf32> to vector<16x8xbf16>
    %c0_73 = arith.constant 0 : index
    %c2_74 = arith.constant 2 : index
    %c0_75 = arith.constant 0 : index
    %c0_76 = arith.constant 0 : index
    %149 = vector.load %arg2[%c0_73, %c2_74, %c0_75, %c0_76] : memref<2x4x32x8xbf16, #tpu.memory_space<vmem>>, vector<1x1x32x8xbf16>
    %150 = vector.shape_cast %149 : vector<1x1x32x8xbf16> to vector<32x8xbf16>
    %cst_77 = arith.constant dense<0.000000e+00> : vector<16x8xf32>
    %151 = tpu.matmul %39, %150, %cst_77 {dimension_numbers = #tpu.dot_dimension_numbers<[1], [0], [0], [1], [0, 0, 1, 1], [], []>} : vector<16x32xbf16>, vector<32x8xbf16>, vector<16x8xf32> -> vector<16x8xf32>
    %152 = arith.truncf %151 : vector<16x8xf32> to vector<16x8xbf16>
    %c0_78 = arith.constant 0 : index
    %c2_79 = arith.constant 2 : index
    %c0_80 = arith.constant 0 : index
    %c0_81 = arith.constant 0 : index
    %153 = vector.load %arg3[%c0_78, %c2_79, %c0_80, %c0_81] : memref<2x4x32x8xbf16, #tpu.memory_space<vmem>>, vector<1x1x32x8xbf16>
    %154 = vector.shape_cast %153 : vector<1x1x32x8xbf16> to vector<32x8xbf16>
    %cst_82 = arith.constant dense<0.000000e+00> : vector<16x8xf32>
    %155 = tpu.matmul %39, %154, %cst_82 {dimension_numbers = #tpu.dot_dimension_numbers<[1], [0], [0], [1], [0, 0, 1, 1], [], []>} : vector<16x32xbf16>, vector<32x8xbf16>, vector<16x8xf32> -> vector<16x8xf32>
    %156 = arith.truncf %155 : vector<16x8xf32> to vector<16x8xbf16>
    %157 = vector.extract_strided_slice %148 {offsets = [0, 0], sizes = [8, 8], strides = [1, 1]} : vector<16x8xbf16> to vector<8x8xbf16>
    %158 = vector.extract_strided_slice %152 {offsets = [0, 0], sizes = [8, 8], strides = [1, 1]} : vector<16x8xbf16> to vector<8x8xbf16>
    %159 = vector.extract_strided_slice %156 {offsets = [0, 0], sizes = [8, 8], strides = [1, 1]} : vector<16x8xbf16> to vector<8x8xbf16>
    %cst_83 = arith.constant dense<0.000000e+00> : vector<8x8xf32>
    %160 = tpu.matmul %157, %158, %cst_83 {dimension_numbers = #tpu.dot_dimension_numbers<[1], [1], [0], [0], [0, 0, 1, 0], [], []>} : vector<8x8xbf16>, vector<8x8xbf16>, vector<8x8xf32> -> vector<8x8xf32>
    %161 = arith.addf %160, %6 : vector<8x8xf32>
    %cst_84 = arith.constant dense<0xFF800000> : vector<8xf32>
    %162 = vector.multi_reduction <maximumf>, %161, %cst_84 [1] : vector<8x8xf32> to vector<8xf32>
    %163 = vector.shape_cast %162 : vector<8xf32> to vector<8x1xf32>
    %164 = vector.broadcast %163 : vector<8x1xf32> to vector<8x8xf32>
    %165 = arith.subf %161, %164 : vector<8x8xf32>
    %166 = math.exp %165 : vector<8x8xf32>
    %cst_85 = arith.constant dense<0.000000e+00> : vector<8xf32>
    %167 = vector.multi_reduction <add>, %166, %cst_85 [1] : vector<8x8xf32> to vector<8xf32>
    %168 = vector.shape_cast %167 : vector<8xf32> to vector<8x1xf32>
    %169 = tpu.reciprocal %168 {approx = true} : vector<8x1xf32> -> vector<8x1xf32>
    %170 = vector.broadcast %169 : vector<8x1xf32> to vector<8x8xf32>
    %171 = arith.mulf %166, %170 : vector<8x8xf32>
    %172 = arith.truncf %171 : vector<8x8xf32> to vector<8x8xbf16>
    %cst_86 = arith.constant dense<0.000000e+00> : vector<8x8xf32>
    %173 = tpu.matmul %172, %159, %cst_86 {dimension_numbers = #tpu.dot_dimension_numbers<[1], [0], [0], [1], [0, 0, 1, 1], [], []>} : vector<8x8xbf16>, vector<8x8xbf16>, vector<8x8xf32> -> vector<8x8xf32>
    %174 = vector.extract_strided_slice %148 {offsets = [8, 0], sizes = [8, 8], strides = [1, 1]} : vector<16x8xbf16> to vector<8x8xbf16>
    %175 = vector.extract_strided_slice %152 {offsets = [8, 0], sizes = [8, 8], strides = [1, 1]} : vector<16x8xbf16> to vector<8x8xbf16>
    %176 = vector.extract_strided_slice %156 {offsets = [8, 0], sizes = [8, 8], strides = [1, 1]} : vector<16x8xbf16> to vector<8x8xbf16>
    %cst_87 = arith.constant dense<0.000000e+00> : vector<8x8xf32>
    %177 = tpu.matmul %174, %175, %cst_87 {dimension_numbers = #tpu.dot_dimension_numbers<[1], [1], [0], [0], [0, 0, 1, 0], [], []>} : vector<8x8xbf16>, vector<8x8xbf16>, vector<8x8xf32> -> vector<8x8xf32>
    %178 = arith.addf %177, %6 : vector<8x8xf32>
    %cst_88 = arith.constant dense<0xFF800000> : vector<8xf32>
    %179 = vector.multi_reduction <maximumf>, %178, %cst_88 [1] : vector<8x8xf32> to vector<8xf32>
    %180 = vector.shape_cast %179 : vector<8xf32> to vector<8x1xf32>
    %181 = vector.broadcast %180 : vector<8x1xf32> to vector<8x8xf32>
    %182 = arith.subf %178, %181 : vector<8x8xf32>
    %183 = math.exp %182 : vector<8x8xf32>
    %cst_89 = arith.constant dense<0.000000e+00> : vector<8xf32>
    %184 = vector.multi_reduction <add>, %183, %cst_89 [1] : vector<8x8xf32> to vector<8xf32>
    %185 = vector.shape_cast %184 : vector<8xf32> to vector<8x1xf32>
    %186 = tpu.reciprocal %185 {approx = true} : vector<8x1xf32> -> vector<8x1xf32>
    %187 = vector.broadcast %186 : vector<8x1xf32> to vector<8x8xf32>
    %188 = arith.mulf %183, %187 : vector<8x8xf32>
    %189 = arith.truncf %188 : vector<8x8xf32> to vector<8x8xbf16>
    %cst_90 = arith.constant dense<0.000000e+00> : vector<8x8xf32>
    %190 = tpu.matmul %189, %176, %cst_90 {dimension_numbers = #tpu.dot_dimension_numbers<[1], [0], [0], [1], [0, 0, 1, 1], [], []>} : vector<8x8xbf16>, vector<8x8xbf16>, vector<8x8xf32> -> vector<8x8xf32>
    %191 = tpu.concatenate %173, %190 in 0 : vector<8x8xf32>, vector<8x8xf32> -> vector<16x8xf32>
    %192 = arith.truncf %191 : vector<16x8xf32> to vector<16x8xbf16>
    %c0_91 = arith.constant 0 : index
    %c2_92 = arith.constant 2 : index
    %c0_93 = arith.constant 0 : index
    %c0_94 = arith.constant 0 : index
    %193 = vector.load %arg4[%c0_91, %c2_92, %c0_93, %c0_94] : memref<2x4x8x32xbf16, #tpu.memory_space<vmem>>, vector<1x1x8x32xbf16>
    %194 = vector.shape_cast %193 : vector<1x1x8x32xbf16> to vector<8x32xbf16>
    %cst_95 = arith.constant dense<0.000000e+00> : vector<16x32xf32>
    %195 = tpu.matmul %192, %194, %cst_95 {dimension_numbers = #tpu.dot_dimension_numbers<[1], [0], [0], [1], [0, 0, 1, 1], [], []>} : vector<16x8xbf16>, vector<8x32xbf16>, vector<16x32xf32> -> vector<16x32xf32>
    %196 = arith.addf %144, %195 : vector<16x32xf32>
    %c0_96 = arith.constant 0 : index
    %c3 = arith.constant 3 : index
    %c0_97 = arith.constant 0 : index
    %c0_98 = arith.constant 0 : index
    %197 = vector.load %arg1[%c0_96, %c3, %c0_97, %c0_98] : memref<2x4x32x8xbf16, #tpu.memory_space<vmem>>, vector<1x1x32x8xbf16>
    %198 = vector.shape_cast %197 : vector<1x1x32x8xbf16> to vector<32x8xbf16>
    %cst_99 = arith.constant dense<0.000000e+00> : vector<16x8xf32>
    %199 = tpu.matmul %39, %198, %cst_99 {dimension_numbers = #tpu.dot_dimension_numbers<[1], [0], [0], [1], [0, 0, 1, 1], [], []>} : vector<16x32xbf16>, vector<32x8xbf16>, vector<16x8xf32> -> vector<16x8xf32>
    %200 = arith.truncf %199 : vector<16x8xf32> to vector<16x8xbf16>
    %c0_100 = arith.constant 0 : index
    %c3_101 = arith.constant 3 : index
    %c0_102 = arith.constant 0 : index
    %c0_103 = arith.constant 0 : index
    %201 = vector.load %arg2[%c0_100, %c3_101, %c0_102, %c0_103] : memref<2x4x32x8xbf16, #tpu.memory_space<vmem>>, vector<1x1x32x8xbf16>
    %202 = vector.shape_cast %201 : vector<1x1x32x8xbf16> to vector<32x8xbf16>
    %cst_104 = arith.constant dense<0.000000e+00> : vector<16x8xf32>
    %203 = tpu.matmul %39, %202, %cst_104 {dimension_numbers = #tpu.dot_dimension_numbers<[1], [0], [0], [1], [0, 0, 1, 1], [], []>} : vector<16x32xbf16>, vector<32x8xbf16>, vector<16x8xf32> -> vector<16x8xf32>
    %204 = arith.truncf %203 : vector<16x8xf32> to vector<16x8xbf16>
    %c0_105 = arith.constant 0 : index
    %c3_106 = arith.constant 3 : index
    %c0_107 = arith.constant 0 : index
    %c0_108 = arith.constant 0 : index
    %205 = vector.load %arg3[%c0_105, %c3_106, %c0_107, %c0_108] : memref<2x4x32x8xbf16, #tpu.memory_space<vmem>>, vector<1x1x32x8xbf16>
    %206 = vector.shape_cast %205 : vector<1x1x32x8xbf16> to vector<32x8xbf16>
    %cst_109 = arith.constant dense<0.000000e+00> : vector<16x8xf32>
    %207 = tpu.matmul %39, %206, %cst_109 {dimension_numbers = #tpu.dot_dimension_numbers<[1], [0], [0], [1], [0, 0, 1, 1], [], []>} : vector<16x32xbf16>, vector<32x8xbf16>, vector<16x8xf32> -> vector<16x8xf32>
    %208 = arith.truncf %207 : vector<16x8xf32> to vector<16x8xbf16>
    %209 = vector.extract_strided_slice %200 {offsets = [0, 0], sizes = [8, 8], strides = [1, 1]} : vector<16x8xbf16> to vector<8x8xbf16>
    %210 = vector.extract_strided_slice %204 {offsets = [0, 0], sizes = [8, 8], strides = [1, 1]} : vector<16x8xbf16> to vector<8x8xbf16>
    %211 = vector.extract_strided_slice %208 {offsets = [0, 0], sizes = [8, 8], strides = [1, 1]} : vector<16x8xbf16> to vector<8x8xbf16>
    %cst_110 = arith.constant dense<0.000000e+00> : vector<8x8xf32>
    %212 = tpu.matmul %209, %210, %cst_110 {dimension_numbers = #tpu.dot_dimension_numbers<[1], [1], [0], [0], [0, 0, 1, 0], [], []>} : vector<8x8xbf16>, vector<8x8xbf16>, vector<8x8xf32> -> vector<8x8xf32>
    %213 = arith.addf %212, %6 : vector<8x8xf32>
    %cst_111 = arith.constant dense<0xFF800000> : vector<8xf32>
    %214 = vector.multi_reduction <maximumf>, %213, %cst_111 [1] : vector<8x8xf32> to vector<8xf32>
    %215 = vector.shape_cast %214 : vector<8xf32> to vector<8x1xf32>
    %216 = vector.broadcast %215 : vector<8x1xf32> to vector<8x8xf32>
    %217 = arith.subf %213, %216 : vector<8x8xf32>
    %218 = math.exp %217 : vector<8x8xf32>
    %cst_112 = arith.constant dense<0.000000e+00> : vector<8xf32>
    %219 = vector.multi_reduction <add>, %218, %cst_112 [1] : vector<8x8xf32> to vector<8xf32>
    %220 = vector.shape_cast %219 : vector<8xf32> to vector<8x1xf32>
    %221 = tpu.reciprocal %220 {approx = true} : vector<8x1xf32> -> vector<8x1xf32>
    %222 = vector.broadcast %221 : vector<8x1xf32> to vector<8x8xf32>
    %223 = arith.mulf %218, %222 : vector<8x8xf32>
    %224 = arith.truncf %223 : vector<8x8xf32> to vector<8x8xbf16>
    %cst_113 = arith.constant dense<0.000000e+00> : vector<8x8xf32>
    %225 = tpu.matmul %224, %211, %cst_113 {dimension_numbers = #tpu.dot_dimension_numbers<[1], [0], [0], [1], [0, 0, 1, 1], [], []>} : vector<8x8xbf16>, vector<8x8xbf16>, vector<8x8xf32> -> vector<8x8xf32>
    %226 = vector.extract_strided_slice %200 {offsets = [8, 0], sizes = [8, 8], strides = [1, 1]} : vector<16x8xbf16> to vector<8x8xbf16>
    %227 = vector.extract_strided_slice %204 {offsets = [8, 0], sizes = [8, 8], strides = [1, 1]} : vector<16x8xbf16> to vector<8x8xbf16>
    %228 = vector.extract_strided_slice %208 {offsets = [8, 0], sizes = [8, 8], strides = [1, 1]} : vector<16x8xbf16> to vector<8x8xbf16>
    %cst_114 = arith.constant dense<0.000000e+00> : vector<8x8xf32>
    %229 = tpu.matmul %226, %227, %cst_114 {dimension_numbers = #tpu.dot_dimension_numbers<[1], [1], [0], [0], [0, 0, 1, 0], [], []>} : vector<8x8xbf16>, vector<8x8xbf16>, vector<8x8xf32> -> vector<8x8xf32>
    %230 = arith.addf %229, %6 : vector<8x8xf32>
    %cst_115 = arith.constant dense<0xFF800000> : vector<8xf32>
    %231 = vector.multi_reduction <maximumf>, %230, %cst_115 [1] : vector<8x8xf32> to vector<8xf32>
    %232 = vector.shape_cast %231 : vector<8xf32> to vector<8x1xf32>
    %233 = vector.broadcast %232 : vector<8x1xf32> to vector<8x8xf32>
    %234 = arith.subf %230, %233 : vector<8x8xf32>
    %235 = math.exp %234 : vector<8x8xf32>
    %cst_116 = arith.constant dense<0.000000e+00> : vector<8xf32>
    %236 = vector.multi_reduction <add>, %235, %cst_116 [1] : vector<8x8xf32> to vector<8xf32>
    %237 = vector.shape_cast %236 : vector<8xf32> to vector<8x1xf32>
    %238 = tpu.reciprocal %237 {approx = true} : vector<8x1xf32> -> vector<8x1xf32>
    %239 = vector.broadcast %238 : vector<8x1xf32> to vector<8x8xf32>
    %240 = arith.mulf %235, %239 : vector<8x8xf32>
    %241 = arith.truncf %240 : vector<8x8xf32> to vector<8x8xbf16>
    %cst_117 = arith.constant dense<0.000000e+00> : vector<8x8xf32>
    %242 = tpu.matmul %241, %228, %cst_117 {dimension_numbers = #tpu.dot_dimension_numbers<[1], [0], [0], [1], [0, 0, 1, 1], [], []>} : vector<8x8xbf16>, vector<8x8xbf16>, vector<8x8xf32> -> vector<8x8xf32>
    %243 = tpu.concatenate %225, %242 in 0 : vector<8x8xf32>, vector<8x8xf32> -> vector<16x8xf32>
    %244 = arith.truncf %243 : vector<16x8xf32> to vector<16x8xbf16>
    %c0_118 = arith.constant 0 : index
    %c3_119 = arith.constant 3 : index
    %c0_120 = arith.constant 0 : index
    %c0_121 = arith.constant 0 : index
    %245 = vector.load %arg4[%c0_118, %c3_119, %c0_120, %c0_121] : memref<2x4x8x32xbf16, #tpu.memory_space<vmem>>, vector<1x1x8x32xbf16>
    %246 = vector.shape_cast %245 : vector<1x1x8x32xbf16> to vector<8x32xbf16>
    %cst_122 = arith.constant dense<0.000000e+00> : vector<16x32xf32>
    %247 = tpu.matmul %244, %246, %cst_122 {dimension_numbers = #tpu.dot_dimension_numbers<[1], [0], [0], [1], [0, 0, 1, 1], [], []>} : vector<16x8xbf16>, vector<8x32xbf16>, vector<16x32xf32> -> vector<16x32xf32>
    %248 = arith.addf %196, %247 : vector<16x32xf32>
    %249 = vector.broadcast %13 : vector<1x32xf32> to vector<16x32xf32>
    %250 = arith.addf %248, %249 : vector<16x32xf32>
    %251 = arith.addf %250, %0 : vector<16x32xf32>
    %cst_123 = arith.constant dense<0.000000e+00> : vector<16xf32>
    %252 = vector.multi_reduction <add>, %251, %cst_123 [1] : vector<16x32xf32> to vector<16xf32>
    %253 = vector.shape_cast %252 : vector<16xf32> to vector<16x1xf32>
    %cst_124 = arith.constant 3.200000e+01 : f32
    %254 = vector.broadcast %cst_124 : f32 to vector<16x1xf32>
    %255 = arith.divf %253, %254 : vector<16x1xf32>
    %256 = vector.broadcast %255 : vector<16x1xf32> to vector<16x32xf32>
    %257 = arith.subf %251, %256 : vector<16x32xf32>
    %258 = arith.mulf %257, %257 : vector<16x32xf32>
    %cst_125 = arith.constant dense<0.000000e+00> : vector<16xf32>
    %259 = vector.multi_reduction <add>, %258, %cst_125 [1] : vector<16x32xf32> to vector<16xf32>
    %260 = vector.shape_cast %259 : vector<16xf32> to vector<16x1xf32>
    %cst_126 = arith.constant 3.200000e+01 : f32
    %261 = vector.broadcast %cst_126 : f32 to vector<16x1xf32>
    %262 = arith.divf %260, %261 : vector<16x1xf32>
    %263 = vector.broadcast %255 : vector<16x1xf32> to vector<16x32xf32>
    %264 = arith.subf %251, %263 : vector<16x32xf32>
    %cst_127 = arith.constant 9.99999974E-6 : f32
    %265 = vector.broadcast %cst_127 : f32 to vector<16x1xf32>
    %266 = arith.addf %262, %265 : vector<16x1xf32>
    %267 = math.rsqrt %266 : vector<16x1xf32>
    %268 = vector.broadcast %267 : vector<16x1xf32> to vector<16x32xf32>
    %269 = arith.mulf %264, %268 : vector<16x32xf32>
    %270 = vector.broadcast %11 : vector<1x32xf32> to vector<16x32xf32>
    %271 = arith.mulf %270, %269 : vector<16x32xf32>
    %272 = vector.broadcast %12 : vector<1x32xf32> to vector<16x32xf32>
    %273 = arith.addf %271, %272 : vector<16x32xf32>
    %274 = arith.truncf %273 : vector<16x32xf32> to vector<16x32xbf16>
    %c0_128 = arith.constant 0 : index
    %c0_129 = arith.constant 0 : index
    %c0_130 = arith.constant 0 : index
    %275 = vector.load %arg5[%c0_128, %c0_129, %c0_130] : memref<2x32x128xbf16, #tpu.memory_space<vmem>>, vector<1x32x128xbf16>
    %276 = vector.shape_cast %275 : vector<1x32x128xbf16> to vector<32x128xbf16>
    %cst_131 = arith.constant dense<0.000000e+00> : vector<16x128xf32>
    %277 = tpu.matmul %274, %276, %cst_131 {dimension_numbers = #tpu.dot_dimension_numbers<[1], [0], [0], [1], [0, 0, 1, 1], [], []>} : vector<16x32xbf16>, vector<32x128xbf16>, vector<16x128xf32> -> vector<16x128xf32>
    %278 = vector.broadcast %16 : vector<1x128xf32> to vector<16x128xf32>
    %279 = arith.addf %277, %278 : vector<16x128xf32>
    %cst_132 = arith.constant 5.000000e-01 : f32
    %280 = vector.broadcast %cst_132 : f32 to vector<16x128xf32>
    %281 = arith.mulf %280, %279 : vector<16x128xf32>
    %cst_133 = arith.constant 4.471500e-02 : f32
    %282 = vector.broadcast %cst_133 : f32 to vector<16x128xf32>
    %283 = arith.mulf %282, %279 : vector<16x128xf32>
    %284 = arith.mulf %283, %279 : vector<16x128xf32>
    %285 = arith.mulf %284, %279 : vector<16x128xf32>
    %286 = arith.addf %279, %285 : vector<16x128xf32>
    %cst_134 = arith.constant 0.797884583 : f32
    %287 = vector.broadcast %cst_134 : f32 to vector<16x128xf32>
    %288 = arith.mulf %287, %286 : vector<16x128xf32>
    %289 = math.tanh %288 : vector<16x128xf32>
    %cst_135 = arith.constant 1.000000e+00 : f32
    %290 = vector.broadcast %cst_135 : f32 to vector<16x128xf32>
    %291 = arith.addf %290, %289 : vector<16x128xf32>
    %292 = arith.mulf %281, %291 : vector<16x128xf32>
    %293 = arith.truncf %292 : vector<16x128xf32> to vector<16x128xbf16>
    %c0_136 = arith.constant 0 : index
    %c0_137 = arith.constant 0 : index
    %c0_138 = arith.constant 0 : index
    %294 = vector.load %arg6[%c0_136, %c0_137, %c0_138] : memref<2x128x32xbf16, #tpu.memory_space<vmem>>, vector<1x128x32xbf16>
    %295 = vector.shape_cast %294 : vector<1x128x32xbf16> to vector<128x32xbf16>
    %cst_139 = arith.constant dense<0.000000e+00> : vector<16x32xf32>
    %296 = tpu.matmul %293, %295, %cst_139 {dimension_numbers = #tpu.dot_dimension_numbers<[1], [0], [0], [1], [0, 0, 1, 1], [], []>} : vector<16x128xbf16>, vector<128x32xbf16>, vector<16x32xf32> -> vector<16x32xf32>
    %297 = vector.broadcast %14 : vector<1x32xf32> to vector<16x32xf32>
    %298 = arith.addf %296, %297 : vector<16x32xf32>
    %299 = arith.addf %298, %251 : vector<16x32xf32>
    %c1_140 = arith.constant 1 : index
    %c0_141 = arith.constant 0 : index
    %c0_142 = arith.constant 0 : index
    %300 = vector.load %arg8[%c1_140, %c0_141, %c0_142] : memref<2x6x32xf32, #tpu.memory_space<vmem>>, vector<1x6x32xf32>
    %301 = vector.shape_cast %300 : vector<1x6x32xf32> to vector<6x32xf32>
    %302 = vector.extract_strided_slice %301 {offsets = [0, 0], sizes = [1, 32], strides = [1, 1]} : vector<6x32xf32> to vector<1x32xf32>
    %303 = vector.extract_strided_slice %301 {offsets = [1, 0], sizes = [1, 32], strides = [1, 1]} : vector<6x32xf32> to vector<1x32xf32>
    %304 = vector.extract_strided_slice %301 {offsets = [2, 0], sizes = [1, 32], strides = [1, 1]} : vector<6x32xf32> to vector<1x32xf32>
    %305 = vector.extract_strided_slice %301 {offsets = [3, 0], sizes = [1, 32], strides = [1, 1]} : vector<6x32xf32> to vector<1x32xf32>
    %306 = vector.extract_strided_slice %301 {offsets = [4, 0], sizes = [1, 32], strides = [1, 1]} : vector<6x32xf32> to vector<1x32xf32>
    %307 = vector.extract_strided_slice %301 {offsets = [5, 0], sizes = [1, 32], strides = [1, 1]} : vector<6x32xf32> to vector<1x32xf32>
    %c1_143 = arith.constant 1 : index
    %c0_144 = arith.constant 0 : index
    %c0_145 = arith.constant 0 : index
    %308 = vector.load %arg7[%c1_143, %c0_144, %c0_145] : memref<2x1x128xf32, #tpu.memory_space<vmem>>, vector<1x1x128xf32>
    %309 = vector.shape_cast %308 : vector<1x1x128xf32> to vector<1x128xf32>
    %cst_146 = arith.constant dense<0.000000e+00> : vector<16xf32>
    %310 = vector.multi_reduction <add>, %299, %cst_146 [1] : vector<16x32xf32> to vector<16xf32>
    %311 = vector.shape_cast %310 : vector<16xf32> to vector<16x1xf32>
    %cst_147 = arith.constant 3.200000e+01 : f32
    %312 = vector.broadcast %cst_147 : f32 to vector<16x1xf32>
    %313 = arith.divf %311, %312 : vector<16x1xf32>
    %314 = vector.broadcast %313 : vector<16x1xf32> to vector<16x32xf32>
    %315 = arith.subf %299, %314 : vector<16x32xf32>
    %316 = arith.mulf %315, %315 : vector<16x32xf32>
    %cst_148 = arith.constant dense<0.000000e+00> : vector<16xf32>
    %317 = vector.multi_reduction <add>, %316, %cst_148 [1] : vector<16x32xf32> to vector<16xf32>
    %318 = vector.shape_cast %317 : vector<16xf32> to vector<16x1xf32>
    %cst_149 = arith.constant 3.200000e+01 : f32
    %319 = vector.broadcast %cst_149 : f32 to vector<16x1xf32>
    %320 = arith.divf %318, %319 : vector<16x1xf32>
    %321 = vector.broadcast %313 : vector<16x1xf32> to vector<16x32xf32>
    %322 = arith.subf %299, %321 : vector<16x32xf32>
    %cst_150 = arith.constant 9.99999974E-6 : f32
    %323 = vector.broadcast %cst_150 : f32 to vector<16x1xf32>
    %324 = arith.addf %320, %323 : vector<16x1xf32>
    %325 = math.rsqrt %324 : vector<16x1xf32>
    %326 = vector.broadcast %325 : vector<16x1xf32> to vector<16x32xf32>
    %327 = arith.mulf %322, %326 : vector<16x32xf32>
    %328 = vector.broadcast %302 : vector<1x32xf32> to vector<16x32xf32>
    %329 = arith.mulf %328, %327 : vector<16x32xf32>
    %330 = vector.broadcast %303 : vector<1x32xf32> to vector<16x32xf32>
    %331 = arith.addf %329, %330 : vector<16x32xf32>
    %332 = arith.truncf %331 : vector<16x32xf32> to vector<16x32xbf16>
    %cst_151 = arith.constant 0.000000e+00 : f32
    %333 = vector.broadcast %cst_151 : f32 to vector<16x32xf32>
    %c1_152 = arith.constant 1 : index
    %c0_153 = arith.constant 0 : index
    %c0_154 = arith.constant 0 : index
    %c0_155 = arith.constant 0 : index
    %334 = vector.load %arg1[%c1_152, %c0_153, %c0_154, %c0_155] : memref<2x4x32x8xbf16, #tpu.memory_space<vmem>>, vector<1x1x32x8xbf16>
    %335 = vector.shape_cast %334 : vector<1x1x32x8xbf16> to vector<32x8xbf16>
    %cst_156 = arith.constant dense<0.000000e+00> : vector<16x8xf32>
    %336 = tpu.matmul %332, %335, %cst_156 {dimension_numbers = #tpu.dot_dimension_numbers<[1], [0], [0], [1], [0, 0, 1, 1], [], []>} : vector<16x32xbf16>, vector<32x8xbf16>, vector<16x8xf32> -> vector<16x8xf32>
    %337 = arith.truncf %336 : vector<16x8xf32> to vector<16x8xbf16>
    %c1_157 = arith.constant 1 : index
    %c0_158 = arith.constant 0 : index
    %c0_159 = arith.constant 0 : index
    %c0_160 = arith.constant 0 : index
    %338 = vector.load %arg2[%c1_157, %c0_158, %c0_159, %c0_160] : memref<2x4x32x8xbf16, #tpu.memory_space<vmem>>, vector<1x1x32x8xbf16>
    %339 = vector.shape_cast %338 : vector<1x1x32x8xbf16> to vector<32x8xbf16>
    %cst_161 = arith.constant dense<0.000000e+00> : vector<16x8xf32>
    %340 = tpu.matmul %332, %339, %cst_161 {dimension_numbers = #tpu.dot_dimension_numbers<[1], [0], [0], [1], [0, 0, 1, 1], [], []>} : vector<16x32xbf16>, vector<32x8xbf16>, vector<16x8xf32> -> vector<16x8xf32>
    %341 = arith.truncf %340 : vector<16x8xf32> to vector<16x8xbf16>
    %c1_162 = arith.constant 1 : index
    %c0_163 = arith.constant 0 : index
    %c0_164 = arith.constant 0 : index
    %c0_165 = arith.constant 0 : index
    %342 = vector.load %arg3[%c1_162, %c0_163, %c0_164, %c0_165] : memref<2x4x32x8xbf16, #tpu.memory_space<vmem>>, vector<1x1x32x8xbf16>
    %343 = vector.shape_cast %342 : vector<1x1x32x8xbf16> to vector<32x8xbf16>
    %cst_166 = arith.constant dense<0.000000e+00> : vector<16x8xf32>
    %344 = tpu.matmul %332, %343, %cst_166 {dimension_numbers = #tpu.dot_dimension_numbers<[1], [0], [0], [1], [0, 0, 1, 1], [], []>} : vector<16x32xbf16>, vector<32x8xbf16>, vector<16x8xf32> -> vector<16x8xf32>
    %345 = arith.truncf %344 : vector<16x8xf32> to vector<16x8xbf16>
    %346 = vector.extract_strided_slice %337 {offsets = [0, 0], sizes = [8, 8], strides = [1, 1]} : vector<16x8xbf16> to vector<8x8xbf16>
    %347 = vector.extract_strided_slice %341 {offsets = [0, 0], sizes = [8, 8], strides = [1, 1]} : vector<16x8xbf16> to vector<8x8xbf16>
    %348 = vector.extract_strided_slice %345 {offsets = [0, 0], sizes = [8, 8], strides = [1, 1]} : vector<16x8xbf16> to vector<8x8xbf16>
    %cst_167 = arith.constant dense<0.000000e+00> : vector<8x8xf32>
    %349 = tpu.matmul %346, %347, %cst_167 {dimension_numbers = #tpu.dot_dimension_numbers<[1], [1], [0], [0], [0, 0, 1, 0], [], []>} : vector<8x8xbf16>, vector<8x8xbf16>, vector<8x8xf32> -> vector<8x8xf32>
    %350 = arith.addf %349, %6 : vector<8x8xf32>
    %cst_168 = arith.constant dense<0xFF800000> : vector<8xf32>
    %351 = vector.multi_reduction <maximumf>, %350, %cst_168 [1] : vector<8x8xf32> to vector<8xf32>
    %352 = vector.shape_cast %351 : vector<8xf32> to vector<8x1xf32>
    %353 = vector.broadcast %352 : vector<8x1xf32> to vector<8x8xf32>
    %354 = arith.subf %350, %353 : vector<8x8xf32>
    %355 = math.exp %354 : vector<8x8xf32>
    %cst_169 = arith.constant dense<0.000000e+00> : vector<8xf32>
    %356 = vector.multi_reduction <add>, %355, %cst_169 [1] : vector<8x8xf32> to vector<8xf32>
    %357 = vector.shape_cast %356 : vector<8xf32> to vector<8x1xf32>
    %358 = tpu.reciprocal %357 {approx = true} : vector<8x1xf32> -> vector<8x1xf32>
    %359 = vector.broadcast %358 : vector<8x1xf32> to vector<8x8xf32>
    %360 = arith.mulf %355, %359 : vector<8x8xf32>
    %361 = arith.truncf %360 : vector<8x8xf32> to vector<8x8xbf16>
    %cst_170 = arith.constant dense<0.000000e+00> : vector<8x8xf32>
    %362 = tpu.matmul %361, %348, %cst_170 {dimension_numbers = #tpu.dot_dimension_numbers<[1], [0], [0], [1], [0, 0, 1, 1], [], []>} : vector<8x8xbf16>, vector<8x8xbf16>, vector<8x8xf32> -> vector<8x8xf32>
    %363 = vector.extract_strided_slice %337 {offsets = [8, 0], sizes = [8, 8], strides = [1, 1]} : vector<16x8xbf16> to vector<8x8xbf16>
    %364 = vector.extract_strided_slice %341 {offsets = [8, 0], sizes = [8, 8], strides = [1, 1]} : vector<16x8xbf16> to vector<8x8xbf16>
    %365 = vector.extract_strided_slice %345 {offsets = [8, 0], sizes = [8, 8], strides = [1, 1]} : vector<16x8xbf16> to vector<8x8xbf16>
    %cst_171 = arith.constant dense<0.000000e+00> : vector<8x8xf32>
    %366 = tpu.matmul %363, %364, %cst_171 {dimension_numbers = #tpu.dot_dimension_numbers<[1], [1], [0], [0], [0, 0, 1, 0], [], []>} : vector<8x8xbf16>, vector<8x8xbf16>, vector<8x8xf32> -> vector<8x8xf32>
    %367 = arith.addf %366, %6 : vector<8x8xf32>
    %cst_172 = arith.constant dense<0xFF800000> : vector<8xf32>
    %368 = vector.multi_reduction <maximumf>, %367, %cst_172 [1] : vector<8x8xf32> to vector<8xf32>
    %369 = vector.shape_cast %368 : vector<8xf32> to vector<8x1xf32>
    %370 = vector.broadcast %369 : vector<8x1xf32> to vector<8x8xf32>
    %371 = arith.subf %367, %370 : vector<8x8xf32>
    %372 = math.exp %371 : vector<8x8xf32>
    %cst_173 = arith.constant dense<0.000000e+00> : vector<8xf32>
    %373 = vector.multi_reduction <add>, %372, %cst_173 [1] : vector<8x8xf32> to vector<8xf32>
    %374 = vector.shape_cast %373 : vector<8xf32> to vector<8x1xf32>
    %375 = tpu.reciprocal %374 {approx = true} : vector<8x1xf32> -> vector<8x1xf32>
    %376 = vector.broadcast %375 : vector<8x1xf32> to vector<8x8xf32>
    %377 = arith.mulf %372, %376 : vector<8x8xf32>
    %378 = arith.truncf %377 : vector<8x8xf32> to vector<8x8xbf16>
    %cst_174 = arith.constant dense<0.000000e+00> : vector<8x8xf32>
    %379 = tpu.matmul %378, %365, %cst_174 {dimension_numbers = #tpu.dot_dimension_numbers<[1], [0], [0], [1], [0, 0, 1, 1], [], []>} : vector<8x8xbf16>, vector<8x8xbf16>, vector<8x8xf32> -> vector<8x8xf32>
    %380 = tpu.concatenate %362, %379 in 0 : vector<8x8xf32>, vector<8x8xf32> -> vector<16x8xf32>
    %381 = arith.truncf %380 : vector<16x8xf32> to vector<16x8xbf16>
    %c1_175 = arith.constant 1 : index
    %c0_176 = arith.constant 0 : index
    %c0_177 = arith.constant 0 : index
    %c0_178 = arith.constant 0 : index
    %382 = vector.load %arg4[%c1_175, %c0_176, %c0_177, %c0_178] : memref<2x4x8x32xbf16, #tpu.memory_space<vmem>>, vector<1x1x8x32xbf16>
    %383 = vector.shape_cast %382 : vector<1x1x8x32xbf16> to vector<8x32xbf16>
    %cst_179 = arith.constant dense<0.000000e+00> : vector<16x32xf32>
    %384 = tpu.matmul %381, %383, %cst_179 {dimension_numbers = #tpu.dot_dimension_numbers<[1], [0], [0], [1], [0, 0, 1, 1], [], []>} : vector<16x8xbf16>, vector<8x32xbf16>, vector<16x32xf32> -> vector<16x32xf32>
    %385 = arith.addf %333, %384 : vector<16x32xf32>
    %c1_180 = arith.constant 1 : index
    %c1_181 = arith.constant 1 : index
    %c0_182 = arith.constant 0 : index
    %c0_183 = arith.constant 0 : index
    %386 = vector.load %arg1[%c1_180, %c1_181, %c0_182, %c0_183] : memref<2x4x32x8xbf16, #tpu.memory_space<vmem>>, vector<1x1x32x8xbf16>
    %387 = vector.shape_cast %386 : vector<1x1x32x8xbf16> to vector<32x8xbf16>
    %cst_184 = arith.constant dense<0.000000e+00> : vector<16x8xf32>
    %388 = tpu.matmul %332, %387, %cst_184 {dimension_numbers = #tpu.dot_dimension_numbers<[1], [0], [0], [1], [0, 0, 1, 1], [], []>} : vector<16x32xbf16>, vector<32x8xbf16>, vector<16x8xf32> -> vector<16x8xf32>
    %389 = arith.truncf %388 : vector<16x8xf32> to vector<16x8xbf16>
    %c1_185 = arith.constant 1 : index
    %c1_186 = arith.constant 1 : index
    %c0_187 = arith.constant 0 : index
    %c0_188 = arith.constant 0 : index
    %390 = vector.load %arg2[%c1_185, %c1_186, %c0_187, %c0_188] : memref<2x4x32x8xbf16, #tpu.memory_space<vmem>>, vector<1x1x32x8xbf16>
    %391 = vector.shape_cast %390 : vector<1x1x32x8xbf16> to vector<32x8xbf16>
    %cst_189 = arith.constant dense<0.000000e+00> : vector<16x8xf32>
    %392 = tpu.matmul %332, %391, %cst_189 {dimension_numbers = #tpu.dot_dimension_numbers<[1], [0], [0], [1], [0, 0, 1, 1], [], []>} : vector<16x32xbf16>, vector<32x8xbf16>, vector<16x8xf32> -> vector<16x8xf32>
    %393 = arith.truncf %392 : vector<16x8xf32> to vector<16x8xbf16>
    %c1_190 = arith.constant 1 : index
    %c1_191 = arith.constant 1 : index
    %c0_192 = arith.constant 0 : index
    %c0_193 = arith.constant 0 : index
    %394 = vector.load %arg3[%c1_190, %c1_191, %c0_192, %c0_193] : memref<2x4x32x8xbf16, #tpu.memory_space<vmem>>, vector<1x1x32x8xbf16>
    %395 = vector.shape_cast %394 : vector<1x1x32x8xbf16> to vector<32x8xbf16>
    %cst_194 = arith.constant dense<0.000000e+00> : vector<16x8xf32>
    %396 = tpu.matmul %332, %395, %cst_194 {dimension_numbers = #tpu.dot_dimension_numbers<[1], [0], [0], [1], [0, 0, 1, 1], [], []>} : vector<16x32xbf16>, vector<32x8xbf16>, vector<16x8xf32> -> vector<16x8xf32>
    %397 = arith.truncf %396 : vector<16x8xf32> to vector<16x8xbf16>
    %398 = vector.extract_strided_slice %389 {offsets = [0, 0], sizes = [8, 8], strides = [1, 1]} : vector<16x8xbf16> to vector<8x8xbf16>
    %399 = vector.extract_strided_slice %393 {offsets = [0, 0], sizes = [8, 8], strides = [1, 1]} : vector<16x8xbf16> to vector<8x8xbf16>
    %400 = vector.extract_strided_slice %397 {offsets = [0, 0], sizes = [8, 8], strides = [1, 1]} : vector<16x8xbf16> to vector<8x8xbf16>
    %cst_195 = arith.constant dense<0.000000e+00> : vector<8x8xf32>
    %401 = tpu.matmul %398, %399, %cst_195 {dimension_numbers = #tpu.dot_dimension_numbers<[1], [1], [0], [0], [0, 0, 1, 0], [], []>} : vector<8x8xbf16>, vector<8x8xbf16>, vector<8x8xf32> -> vector<8x8xf32>
    %402 = arith.addf %401, %6 : vector<8x8xf32>
    %cst_196 = arith.constant dense<0xFF800000> : vector<8xf32>
    %403 = vector.multi_reduction <maximumf>, %402, %cst_196 [1] : vector<8x8xf32> to vector<8xf32>
    %404 = vector.shape_cast %403 : vector<8xf32> to vector<8x1xf32>
    %405 = vector.broadcast %404 : vector<8x1xf32> to vector<8x8xf32>
    %406 = arith.subf %402, %405 : vector<8x8xf32>
    %407 = math.exp %406 : vector<8x8xf32>
    %cst_197 = arith.constant dense<0.000000e+00> : vector<8xf32>
    %408 = vector.multi_reduction <add>, %407, %cst_197 [1] : vector<8x8xf32> to vector<8xf32>
    %409 = vector.shape_cast %408 : vector<8xf32> to vector<8x1xf32>
    %410 = tpu.reciprocal %409 {approx = true} : vector<8x1xf32> -> vector<8x1xf32>
    %411 = vector.broadcast %410 : vector<8x1xf32> to vector<8x8xf32>
    %412 = arith.mulf %407, %411 : vector<8x8xf32>
    %413 = arith.truncf %412 : vector<8x8xf32> to vector<8x8xbf16>
    %cst_198 = arith.constant dense<0.000000e+00> : vector<8x8xf32>
    %414 = tpu.matmul %413, %400, %cst_198 {dimension_numbers = #tpu.dot_dimension_numbers<[1], [0], [0], [1], [0, 0, 1, 1], [], []>} : vector<8x8xbf16>, vector<8x8xbf16>, vector<8x8xf32> -> vector<8x8xf32>
    %415 = vector.extract_strided_slice %389 {offsets = [8, 0], sizes = [8, 8], strides = [1, 1]} : vector<16x8xbf16> to vector<8x8xbf16>
    %416 = vector.extract_strided_slice %393 {offsets = [8, 0], sizes = [8, 8], strides = [1, 1]} : vector<16x8xbf16> to vector<8x8xbf16>
    %417 = vector.extract_strided_slice %397 {offsets = [8, 0], sizes = [8, 8], strides = [1, 1]} : vector<16x8xbf16> to vector<8x8xbf16>
    %cst_199 = arith.constant dense<0.000000e+00> : vector<8x8xf32>
    %418 = tpu.matmul %415, %416, %cst_199 {dimension_numbers = #tpu.dot_dimension_numbers<[1], [1], [0], [0], [0, 0, 1, 0], [], []>} : vector<8x8xbf16>, vector<8x8xbf16>, vector<8x8xf32> -> vector<8x8xf32>
    %419 = arith.addf %418, %6 : vector<8x8xf32>
    %cst_200 = arith.constant dense<0xFF800000> : vector<8xf32>
    %420 = vector.multi_reduction <maximumf>, %419, %cst_200 [1] : vector<8x8xf32> to vector<8xf32>
    %421 = vector.shape_cast %420 : vector<8xf32> to vector<8x1xf32>
    %422 = vector.broadcast %421 : vector<8x1xf32> to vector<8x8xf32>
    %423 = arith.subf %419, %422 : vector<8x8xf32>
    %424 = math.exp %423 : vector<8x8xf32>
    %cst_201 = arith.constant dense<0.000000e+00> : vector<8xf32>
    %425 = vector.multi_reduction <add>, %424, %cst_201 [1] : vector<8x8xf32> to vector<8xf32>
    %426 = vector.shape_cast %425 : vector<8xf32> to vector<8x1xf32>
    %427 = tpu.reciprocal %426 {approx = true} : vector<8x1xf32> -> vector<8x1xf32>
    %428 = vector.broadcast %427 : vector<8x1xf32> to vector<8x8xf32>
    %429 = arith.mulf %424, %428 : vector<8x8xf32>
    %430 = arith.truncf %429 : vector<8x8xf32> to vector<8x8xbf16>
    %cst_202 = arith.constant dense<0.000000e+00> : vector<8x8xf32>
    %431 = tpu.matmul %430, %417, %cst_202 {dimension_numbers = #tpu.dot_dimension_numbers<[1], [0], [0], [1], [0, 0, 1, 1], [], []>} : vector<8x8xbf16>, vector<8x8xbf16>, vector<8x8xf32> -> vector<8x8xf32>
    %432 = tpu.concatenate %414, %431 in 0 : vector<8x8xf32>, vector<8x8xf32> -> vector<16x8xf32>
    %433 = arith.truncf %432 : vector<16x8xf32> to vector<16x8xbf16>
    %c1_203 = arith.constant 1 : index
    %c1_204 = arith.constant 1 : index
    %c0_205 = arith.constant 0 : index
    %c0_206 = arith.constant 0 : index
    %434 = vector.load %arg4[%c1_203, %c1_204, %c0_205, %c0_206] : memref<2x4x8x32xbf16, #tpu.memory_space<vmem>>, vector<1x1x8x32xbf16>
    %435 = vector.shape_cast %434 : vector<1x1x8x32xbf16> to vector<8x32xbf16>
    %cst_207 = arith.constant dense<0.000000e+00> : vector<16x32xf32>
    %436 = tpu.matmul %433, %435, %cst_207 {dimension_numbers = #tpu.dot_dimension_numbers<[1], [0], [0], [1], [0, 0, 1, 1], [], []>} : vector<16x8xbf16>, vector<8x32xbf16>, vector<16x32xf32> -> vector<16x32xf32>
    %437 = arith.addf %385, %436 : vector<16x32xf32>
    %c1_208 = arith.constant 1 : index
    %c2_209 = arith.constant 2 : index
    %c0_210 = arith.constant 0 : index
    %c0_211 = arith.constant 0 : index
    %438 = vector.load %arg1[%c1_208, %c2_209, %c0_210, %c0_211] : memref<2x4x32x8xbf16, #tpu.memory_space<vmem>>, vector<1x1x32x8xbf16>
    %439 = vector.shape_cast %438 : vector<1x1x32x8xbf16> to vector<32x8xbf16>
    %cst_212 = arith.constant dense<0.000000e+00> : vector<16x8xf32>
    %440 = tpu.matmul %332, %439, %cst_212 {dimension_numbers = #tpu.dot_dimension_numbers<[1], [0], [0], [1], [0, 0, 1, 1], [], []>} : vector<16x32xbf16>, vector<32x8xbf16>, vector<16x8xf32> -> vector<16x8xf32>
    %441 = arith.truncf %440 : vector<16x8xf32> to vector<16x8xbf16>
    %c1_213 = arith.constant 1 : index
    %c2_214 = arith.constant 2 : index
    %c0_215 = arith.constant 0 : index
    %c0_216 = arith.constant 0 : index
    %442 = vector.load %arg2[%c1_213, %c2_214, %c0_215, %c0_216] : memref<2x4x32x8xbf16, #tpu.memory_space<vmem>>, vector<1x1x32x8xbf16>
    %443 = vector.shape_cast %442 : vector<1x1x32x8xbf16> to vector<32x8xbf16>
    %cst_217 = arith.constant dense<0.000000e+00> : vector<16x8xf32>
    %444 = tpu.matmul %332, %443, %cst_217 {dimension_numbers = #tpu.dot_dimension_numbers<[1], [0], [0], [1], [0, 0, 1, 1], [], []>} : vector<16x32xbf16>, vector<32x8xbf16>, vector<16x8xf32> -> vector<16x8xf32>
    %445 = arith.truncf %444 : vector<16x8xf32> to vector<16x8xbf16>
    %c1_218 = arith.constant 1 : index
    %c2_219 = arith.constant 2 : index
    %c0_220 = arith.constant 0 : index
    %c0_221 = arith.constant 0 : index
    %446 = vector.load %arg3[%c1_218, %c2_219, %c0_220, %c0_221] : memref<2x4x32x8xbf16, #tpu.memory_space<vmem>>, vector<1x1x32x8xbf16>
    %447 = vector.shape_cast %446 : vector<1x1x32x8xbf16> to vector<32x8xbf16>
    %cst_222 = arith.constant dense<0.000000e+00> : vector<16x8xf32>
    %448 = tpu.matmul %332, %447, %cst_222 {dimension_numbers = #tpu.dot_dimension_numbers<[1], [0], [0], [1], [0, 0, 1, 1], [], []>} : vector<16x32xbf16>, vector<32x8xbf16>, vector<16x8xf32> -> vector<16x8xf32>
    %449 = arith.truncf %448 : vector<16x8xf32> to vector<16x8xbf16>
    %450 = vector.extract_strided_slice %441 {offsets = [0, 0], sizes = [8, 8], strides = [1, 1]} : vector<16x8xbf16> to vector<8x8xbf16>
    %451 = vector.extract_strided_slice %445 {offsets = [0, 0], sizes = [8, 8], strides = [1, 1]} : vector<16x8xbf16> to vector<8x8xbf16>
    %452 = vector.extract_strided_slice %449 {offsets = [0, 0], sizes = [8, 8], strides = [1, 1]} : vector<16x8xbf16> to vector<8x8xbf16>
    %cst_223 = arith.constant dense<0.000000e+00> : vector<8x8xf32>
    %453 = tpu.matmul %450, %451, %cst_223 {dimension_numbers = #tpu.dot_dimension_numbers<[1], [1], [0], [0], [0, 0, 1, 0], [], []>} : vector<8x8xbf16>, vector<8x8xbf16>, vector<8x8xf32> -> vector<8x8xf32>
    %454 = arith.addf %453, %6 : vector<8x8xf32>
    %cst_224 = arith.constant dense<0xFF800000> : vector<8xf32>
    %455 = vector.multi_reduction <maximumf>, %454, %cst_224 [1] : vector<8x8xf32> to vector<8xf32>
    %456 = vector.shape_cast %455 : vector<8xf32> to vector<8x1xf32>
    %457 = vector.broadcast %456 : vector<8x1xf32> to vector<8x8xf32>
    %458 = arith.subf %454, %457 : vector<8x8xf32>
    %459 = math.exp %458 : vector<8x8xf32>
    %cst_225 = arith.constant dense<0.000000e+00> : vector<8xf32>
    %460 = vector.multi_reduction <add>, %459, %cst_225 [1] : vector<8x8xf32> to vector<8xf32>
    %461 = vector.shape_cast %460 : vector<8xf32> to vector<8x1xf32>
    %462 = tpu.reciprocal %461 {approx = true} : vector<8x1xf32> -> vector<8x1xf32>
    %463 = vector.broadcast %462 : vector<8x1xf32> to vector<8x8xf32>
    %464 = arith.mulf %459, %463 : vector<8x8xf32>
    %465 = arith.truncf %464 : vector<8x8xf32> to vector<8x8xbf16>
    %cst_226 = arith.constant dense<0.000000e+00> : vector<8x8xf32>
    %466 = tpu.matmul %465, %452, %cst_226 {dimension_numbers = #tpu.dot_dimension_numbers<[1], [0], [0], [1], [0, 0, 1, 1], [], []>} : vector<8x8xbf16>, vector<8x8xbf16>, vector<8x8xf32> -> vector<8x8xf32>
    %467 = vector.extract_strided_slice %441 {offsets = [8, 0], sizes = [8, 8], strides = [1, 1]} : vector<16x8xbf16> to vector<8x8xbf16>
    %468 = vector.extract_strided_slice %445 {offsets = [8, 0], sizes = [8, 8], strides = [1, 1]} : vector<16x8xbf16> to vector<8x8xbf16>
    %469 = vector.extract_strided_slice %449 {offsets = [8, 0], sizes = [8, 8], strides = [1, 1]} : vector<16x8xbf16> to vector<8x8xbf16>
    %cst_227 = arith.constant dense<0.000000e+00> : vector<8x8xf32>
    %470 = tpu.matmul %467, %468, %cst_227 {dimension_numbers = #tpu.dot_dimension_numbers<[1], [1], [0], [0], [0, 0, 1, 0], [], []>} : vector<8x8xbf16>, vector<8x8xbf16>, vector<8x8xf32> -> vector<8x8xf32>
    %471 = arith.addf %470, %6 : vector<8x8xf32>
    %cst_228 = arith.constant dense<0xFF800000> : vector<8xf32>
    %472 = vector.multi_reduction <maximumf>, %471, %cst_228 [1] : vector<8x8xf32> to vector<8xf32>
    %473 = vector.shape_cast %472 : vector<8xf32> to vector<8x1xf32>
    %474 = vector.broadcast %473 : vector<8x1xf32> to vector<8x8xf32>
    %475 = arith.subf %471, %474 : vector<8x8xf32>
    %476 = math.exp %475 : vector<8x8xf32>
    %cst_229 = arith.constant dense<0.000000e+00> : vector<8xf32>
    %477 = vector.multi_reduction <add>, %476, %cst_229 [1] : vector<8x8xf32> to vector<8xf32>
    %478 = vector.shape_cast %477 : vector<8xf32> to vector<8x1xf32>
    %479 = tpu.reciprocal %478 {approx = true} : vector<8x1xf32> -> vector<8x1xf32>
    %480 = vector.broadcast %479 : vector<8x1xf32> to vector<8x8xf32>
    %481 = arith.mulf %476, %480 : vector<8x8xf32>
    %482 = arith.truncf %481 : vector<8x8xf32> to vector<8x8xbf16>
    %cst_230 = arith.constant dense<0.000000e+00> : vector<8x8xf32>
    %483 = tpu.matmul %482, %469, %cst_230 {dimension_numbers = #tpu.dot_dimension_numbers<[1], [0], [0], [1], [0, 0, 1, 1], [], []>} : vector<8x8xbf16>, vector<8x8xbf16>, vector<8x8xf32> -> vector<8x8xf32>
    %484 = tpu.concatenate %466, %483 in 0 : vector<8x8xf32>, vector<8x8xf32> -> vector<16x8xf32>
    %485 = arith.truncf %484 : vector<16x8xf32> to vector<16x8xbf16>
    %c1_231 = arith.constant 1 : index
    %c2_232 = arith.constant 2 : index
    %c0_233 = arith.constant 0 : index
    %c0_234 = arith.constant 0 : index
    %486 = vector.load %arg4[%c1_231, %c2_232, %c0_233, %c0_234] : memref<2x4x8x32xbf16, #tpu.memory_space<vmem>>, vector<1x1x8x32xbf16>
    %487 = vector.shape_cast %486 : vector<1x1x8x32xbf16> to vector<8x32xbf16>
    %cst_235 = arith.constant dense<0.000000e+00> : vector<16x32xf32>
    %488 = tpu.matmul %485, %487, %cst_235 {dimension_numbers = #tpu.dot_dimension_numbers<[1], [0], [0], [1], [0, 0, 1, 1], [], []>} : vector<16x8xbf16>, vector<8x32xbf16>, vector<16x32xf32> -> vector<16x32xf32>
    %489 = arith.addf %437, %488 : vector<16x32xf32>
    %c1_236 = arith.constant 1 : index
    %c3_237 = arith.constant 3 : index
    %c0_238 = arith.constant 0 : index
    %c0_239 = arith.constant 0 : index
    %490 = vector.load %arg1[%c1_236, %c3_237, %c0_238, %c0_239] : memref<2x4x32x8xbf16, #tpu.memory_space<vmem>>, vector<1x1x32x8xbf16>
    %491 = vector.shape_cast %490 : vector<1x1x32x8xbf16> to vector<32x8xbf16>
    %cst_240 = arith.constant dense<0.000000e+00> : vector<16x8xf32>
    %492 = tpu.matmul %332, %491, %cst_240 {dimension_numbers = #tpu.dot_dimension_numbers<[1], [0], [0], [1], [0, 0, 1, 1], [], []>} : vector<16x32xbf16>, vector<32x8xbf16>, vector<16x8xf32> -> vector<16x8xf32>
    %493 = arith.truncf %492 : vector<16x8xf32> to vector<16x8xbf16>
    %c1_241 = arith.constant 1 : index
    %c3_242 = arith.constant 3 : index
    %c0_243 = arith.constant 0 : index
    %c0_244 = arith.constant 0 : index
    %494 = vector.load %arg2[%c1_241, %c3_242, %c0_243, %c0_244] : memref<2x4x32x8xbf16, #tpu.memory_space<vmem>>, vector<1x1x32x8xbf16>
    %495 = vector.shape_cast %494 : vector<1x1x32x8xbf16> to vector<32x8xbf16>
    %cst_245 = arith.constant dense<0.000000e+00> : vector<16x8xf32>
    %496 = tpu.matmul %332, %495, %cst_245 {dimension_numbers = #tpu.dot_dimension_numbers<[1], [0], [0], [1], [0, 0, 1, 1], [], []>} : vector<16x32xbf16>, vector<32x8xbf16>, vector<16x8xf32> -> vector<16x8xf32>
    %497 = arith.truncf %496 : vector<16x8xf32> to vector<16x8xbf16>
    %c1_246 = arith.constant 1 : index
    %c3_247 = arith.constant 3 : index
    %c0_248 = arith.constant 0 : index
    %c0_249 = arith.constant 0 : index
    %498 = vector.load %arg3[%c1_246, %c3_247, %c0_248, %c0_249] : memref<2x4x32x8xbf16, #tpu.memory_space<vmem>>, vector<1x1x32x8xbf16>
    %499 = vector.shape_cast %498 : vector<1x1x32x8xbf16> to vector<32x8xbf16>
    %cst_250 = arith.constant dense<0.000000e+00> : vector<16x8xf32>
    %500 = tpu.matmul %332, %499, %cst_250 {dimension_numbers = #tpu.dot_dimension_numbers<[1], [0], [0], [1], [0, 0, 1, 1], [], []>} : vector<16x32xbf16>, vector<32x8xbf16>, vector<16x8xf32> -> vector<16x8xf32>
    %501 = arith.truncf %500 : vector<16x8xf32> to vector<16x8xbf16>
    %502 = vector.extract_strided_slice %493 {offsets = [0, 0], sizes = [8, 8], strides = [1, 1]} : vector<16x8xbf16> to vector<8x8xbf16>
    %503 = vector.extract_strided_slice %497 {offsets = [0, 0], sizes = [8, 8], strides = [1, 1]} : vector<16x8xbf16> to vector<8x8xbf16>
    %504 = vector.extract_strided_slice %501 {offsets = [0, 0], sizes = [8, 8], strides = [1, 1]} : vector<16x8xbf16> to vector<8x8xbf16>
    %cst_251 = arith.constant dense<0.000000e+00> : vector<8x8xf32>
    %505 = tpu.matmul %502, %503, %cst_251 {dimension_numbers = #tpu.dot_dimension_numbers<[1], [1], [0], [0], [0, 0, 1, 0], [], []>} : vector<8x8xbf16>, vector<8x8xbf16>, vector<8x8xf32> -> vector<8x8xf32>
    %506 = arith.addf %505, %6 : vector<8x8xf32>
    %cst_252 = arith.constant dense<0xFF800000> : vector<8xf32>
    %507 = vector.multi_reduction <maximumf>, %506, %cst_252 [1] : vector<8x8xf32> to vector<8xf32>
    %508 = vector.shape_cast %507 : vector<8xf32> to vector<8x1xf32>
    %509 = vector.broadcast %508 : vector<8x1xf32> to vector<8x8xf32>
    %510 = arith.subf %506, %509 : vector<8x8xf32>
    %511 = math.exp %510 : vector<8x8xf32>
    %cst_253 = arith.constant dense<0.000000e+00> : vector<8xf32>
    %512 = vector.multi_reduction <add>, %511, %cst_253 [1] : vector<8x8xf32> to vector<8xf32>
    %513 = vector.shape_cast %512 : vector<8xf32> to vector<8x1xf32>
    %514 = tpu.reciprocal %513 {approx = true} : vector<8x1xf32> -> vector<8x1xf32>
    %515 = vector.broadcast %514 : vector<8x1xf32> to vector<8x8xf32>
    %516 = arith.mulf %511, %515 : vector<8x8xf32>
    %517 = arith.truncf %516 : vector<8x8xf32> to vector<8x8xbf16>
    %cst_254 = arith.constant dense<0.000000e+00> : vector<8x8xf32>
    %518 = tpu.matmul %517, %504, %cst_254 {dimension_numbers = #tpu.dot_dimension_numbers<[1], [0], [0], [1], [0, 0, 1, 1], [], []>} : vector<8x8xbf16>, vector<8x8xbf16>, vector<8x8xf32> -> vector<8x8xf32>
    %519 = vector.extract_strided_slice %493 {offsets = [8, 0], sizes = [8, 8], strides = [1, 1]} : vector<16x8xbf16> to vector<8x8xbf16>
    %520 = vector.extract_strided_slice %497 {offsets = [8, 0], sizes = [8, 8], strides = [1, 1]} : vector<16x8xbf16> to vector<8x8xbf16>
    %521 = vector.extract_strided_slice %501 {offsets = [8, 0], sizes = [8, 8], strides = [1, 1]} : vector<16x8xbf16> to vector<8x8xbf16>
    %cst_255 = arith.constant dense<0.000000e+00> : vector<8x8xf32>
    %522 = tpu.matmul %519, %520, %cst_255 {dimension_numbers = #tpu.dot_dimension_numbers<[1], [1], [0], [0], [0, 0, 1, 0], [], []>} : vector<8x8xbf16>, vector<8x8xbf16>, vector<8x8xf32> -> vector<8x8xf32>
    %523 = arith.addf %522, %6 : vector<8x8xf32>
    %cst_256 = arith.constant dense<0xFF800000> : vector<8xf32>
    %524 = vector.multi_reduction <maximumf>, %523, %cst_256 [1] : vector<8x8xf32> to vector<8xf32>
    %525 = vector.shape_cast %524 : vector<8xf32> to vector<8x1xf32>
    %526 = vector.broadcast %525 : vector<8x1xf32> to vector<8x8xf32>
    %527 = arith.subf %523, %526 : vector<8x8xf32>
    %528 = math.exp %527 : vector<8x8xf32>
    %cst_257 = arith.constant dense<0.000000e+00> : vector<8xf32>
    %529 = vector.multi_reduction <add>, %528, %cst_257 [1] : vector<8x8xf32> to vector<8xf32>
    %530 = vector.shape_cast %529 : vector<8xf32> to vector<8x1xf32>
    %531 = tpu.reciprocal %530 {approx = true} : vector<8x1xf32> -> vector<8x1xf32>
    %532 = vector.broadcast %531 : vector<8x1xf32> to vector<8x8xf32>
    %533 = arith.mulf %528, %532 : vector<8x8xf32>
    %534 = arith.truncf %533 : vector<8x8xf32> to vector<8x8xbf16>
    %cst_258 = arith.constant dense<0.000000e+00> : vector<8x8xf32>
    %535 = tpu.matmul %534, %521, %cst_258 {dimension_numbers = #tpu.dot_dimension_numbers<[1], [0], [0], [1], [0, 0, 1, 1], [], []>} : vector<8x8xbf16>, vector<8x8xbf16>, vector<8x8xf32> -> vector<8x8xf32>
    %536 = tpu.concatenate %518, %535 in 0 : vector<8x8xf32>, vector<8x8xf32> -> vector<16x8xf32>
    %537 = arith.truncf %536 : vector<16x8xf32> to vector<16x8xbf16>
    %c1_259 = arith.constant 1 : index
    %c3_260 = arith.constant 3 : index
    %c0_261 = arith.constant 0 : index
    %c0_262 = arith.constant 0 : index
    %538 = vector.load %arg4[%c1_259, %c3_260, %c0_261, %c0_262] : memref<2x4x8x32xbf16, #tpu.memory_space<vmem>>, vector<1x1x8x32xbf16>
    %539 = vector.shape_cast %538 : vector<1x1x8x32xbf16> to vector<8x32xbf16>
    %cst_263 = arith.constant dense<0.000000e+00> : vector<16x32xf32>
    %540 = tpu.matmul %537, %539, %cst_263 {dimension_numbers = #tpu.dot_dimension_numbers<[1], [0], [0], [1], [0, 0, 1, 1], [], []>} : vector<16x8xbf16>, vector<8x32xbf16>, vector<16x32xf32> -> vector<16x32xf32>
    %541 = arith.addf %489, %540 : vector<16x32xf32>
    %542 = vector.broadcast %306 : vector<1x32xf32> to vector<16x32xf32>
    %543 = arith.addf %541, %542 : vector<16x32xf32>
    %544 = arith.addf %543, %299 : vector<16x32xf32>
    %cst_264 = arith.constant dense<0.000000e+00> : vector<16xf32>
    %545 = vector.multi_reduction <add>, %544, %cst_264 [1] : vector<16x32xf32> to vector<16xf32>
    %546 = vector.shape_cast %545 : vector<16xf32> to vector<16x1xf32>
    %cst_265 = arith.constant 3.200000e+01 : f32
    %547 = vector.broadcast %cst_265 : f32 to vector<16x1xf32>
    %548 = arith.divf %546, %547 : vector<16x1xf32>
    %549 = vector.broadcast %548 : vector<16x1xf32> to vector<16x32xf32>
    %550 = arith.subf %544, %549 : vector<16x32xf32>
    %551 = arith.mulf %550, %550 : vector<16x32xf32>
    %cst_266 = arith.constant dense<0.000000e+00> : vector<16xf32>
    %552 = vector.multi_reduction <add>, %551, %cst_266 [1] : vector<16x32xf32> to vector<16xf32>
    %553 = vector.shape_cast %552 : vector<16xf32> to vector<16x1xf32>
    %cst_267 = arith.constant 3.200000e+01 : f32
    %554 = vector.broadcast %cst_267 : f32 to vector<16x1xf32>
    %555 = arith.divf %553, %554 : vector<16x1xf32>
    %556 = vector.broadcast %548 : vector<16x1xf32> to vector<16x32xf32>
    %557 = arith.subf %544, %556 : vector<16x32xf32>
    %cst_268 = arith.constant 9.99999974E-6 : f32
    %558 = vector.broadcast %cst_268 : f32 to vector<16x1xf32>
    %559 = arith.addf %555, %558 : vector<16x1xf32>
    %560 = math.rsqrt %559 : vector<16x1xf32>
    %561 = vector.broadcast %560 : vector<16x1xf32> to vector<16x32xf32>
    %562 = arith.mulf %557, %561 : vector<16x32xf32>
    %563 = vector.broadcast %304 : vector<1x32xf32> to vector<16x32xf32>
    %564 = arith.mulf %563, %562 : vector<16x32xf32>
    %565 = vector.broadcast %305 : vector<1x32xf32> to vector<16x32xf32>
    %566 = arith.addf %564, %565 : vector<16x32xf32>
    %567 = arith.truncf %566 : vector<16x32xf32> to vector<16x32xbf16>
    %c1_269 = arith.constant 1 : index
    %c0_270 = arith.constant 0 : index
    %c0_271 = arith.constant 0 : index
    %568 = vector.load %arg5[%c1_269, %c0_270, %c0_271] : memref<2x32x128xbf16, #tpu.memory_space<vmem>>, vector<1x32x128xbf16>
    %569 = vector.shape_cast %568 : vector<1x32x128xbf16> to vector<32x128xbf16>
    %cst_272 = arith.constant dense<0.000000e+00> : vector<16x128xf32>
    %570 = tpu.matmul %567, %569, %cst_272 {dimension_numbers = #tpu.dot_dimension_numbers<[1], [0], [0], [1], [0, 0, 1, 1], [], []>} : vector<16x32xbf16>, vector<32x128xbf16>, vector<16x128xf32> -> vector<16x128xf32>
    %571 = vector.broadcast %309 : vector<1x128xf32> to vector<16x128xf32>
    %572 = arith.addf %570, %571 : vector<16x128xf32>
    %cst_273 = arith.constant 5.000000e-01 : f32
    %573 = vector.broadcast %cst_273 : f32 to vector<16x128xf32>
    %574 = arith.mulf %573, %572 : vector<16x128xf32>
    %cst_274 = arith.constant 4.471500e-02 : f32
    %575 = vector.broadcast %cst_274 : f32 to vector<16x128xf32>
    %576 = arith.mulf %575, %572 : vector<16x128xf32>
    %577 = arith.mulf %576, %572 : vector<16x128xf32>
    %578 = arith.mulf %577, %572 : vector<16x128xf32>
    %579 = arith.addf %572, %578 : vector<16x128xf32>
    %cst_275 = arith.constant 0.797884583 : f32
    %580 = vector.broadcast %cst_275 : f32 to vector<16x128xf32>
    %581 = arith.mulf %580, %579 : vector<16x128xf32>
    %582 = math.tanh %581 : vector<16x128xf32>
    %cst_276 = arith.constant 1.000000e+00 : f32
    %583 = vector.broadcast %cst_276 : f32 to vector<16x128xf32>
    %584 = arith.addf %583, %582 : vector<16x128xf32>
    %585 = arith.mulf %574, %584 : vector<16x128xf32>
    %586 = arith.truncf %585 : vector<16x128xf32> to vector<16x128xbf16>
    %c1_277 = arith.constant 1 : index
    %c0_278 = arith.constant 0 : index
    %c0_279 = arith.constant 0 : index
    %587 = vector.load %arg6[%c1_277, %c0_278, %c0_279] : memref<2x128x32xbf16, #tpu.memory_space<vmem>>, vector<1x128x32xbf16>
    %588 = vector.shape_cast %587 : vector<1x128x32xbf16> to vector<128x32xbf16>
    %cst_280 = arith.constant dense<0.000000e+00> : vector<16x32xf32>
    %589 = tpu.matmul %586, %588, %cst_280 {dimension_numbers = #tpu.dot_dimension_numbers<[1], [0], [0], [1], [0, 0, 1, 1], [], []>} : vector<16x128xbf16>, vector<128x32xbf16>, vector<16x32xf32> -> vector<16x32xf32>
    %590 = vector.broadcast %307 : vector<1x32xf32> to vector<16x32xf32>
    %591 = arith.addf %589, %590 : vector<16x32xf32>
    %592 = arith.addf %591, %544 : vector<16x32xf32>
    %c0_281 = arith.constant 0 : index
    %c0_282 = arith.constant 0 : index
    %593 = vector.load %arg9[%c0_281, %c0_282] : memref<2x32xf32, #tpu.memory_space<vmem>>, vector<2x32xf32>
    %594 = vector.extract_strided_slice %593 {offsets = [0, 0], sizes = [1, 32], strides = [1, 1]} : vector<2x32xf32> to vector<1x32xf32>
    %595 = vector.extract_strided_slice %593 {offsets = [1, 0], sizes = [1, 32], strides = [1, 1]} : vector<2x32xf32> to vector<1x32xf32>
    %cst_283 = arith.constant dense<0.000000e+00> : vector<16xf32>
    %596 = vector.multi_reduction <add>, %592, %cst_283 [1] : vector<16x32xf32> to vector<16xf32>
    %597 = vector.shape_cast %596 : vector<16xf32> to vector<16x1xf32>
    %cst_284 = arith.constant 3.200000e+01 : f32
    %598 = vector.broadcast %cst_284 : f32 to vector<16x1xf32>
    %599 = arith.divf %597, %598 : vector<16x1xf32>
    %600 = vector.broadcast %599 : vector<16x1xf32> to vector<16x32xf32>
    %601 = arith.subf %592, %600 : vector<16x32xf32>
    %602 = arith.mulf %601, %601 : vector<16x32xf32>
    %cst_285 = arith.constant dense<0.000000e+00> : vector<16xf32>
    %603 = vector.multi_reduction <add>, %602, %cst_285 [1] : vector<16x32xf32> to vector<16xf32>
    %604 = vector.shape_cast %603 : vector<16xf32> to vector<16x1xf32>
    %cst_286 = arith.constant 3.200000e+01 : f32
    %605 = vector.broadcast %cst_286 : f32 to vector<16x1xf32>
    %606 = arith.divf %604, %605 : vector<16x1xf32>
    %607 = vector.broadcast %599 : vector<16x1xf32> to vector<16x32xf32>
    %608 = arith.subf %592, %607 : vector<16x32xf32>
    %cst_287 = arith.constant 9.99999974E-6 : f32
    %609 = vector.broadcast %cst_287 : f32 to vector<16x1xf32>
    %610 = arith.addf %606, %609 : vector<16x1xf32>
    %611 = math.rsqrt %610 : vector<16x1xf32>
    %612 = vector.broadcast %611 : vector<16x1xf32> to vector<16x32xf32>
    %613 = arith.mulf %608, %612 : vector<16x32xf32>
    %614 = vector.broadcast %594 : vector<1x32xf32> to vector<16x32xf32>
    %615 = arith.mulf %614, %613 : vector<16x32xf32>
    %616 = vector.broadcast %595 : vector<1x32xf32> to vector<16x32xf32>
    %617 = arith.addf %615, %616 : vector<16x32xf32>
    %618 = arith.truncf %617 : vector<16x32xf32> to vector<16x32xbf16>
    %c0_288 = arith.constant 0 : index
    %c0_289 = arith.constant 0 : index
    %619 = vector.load %arg10[%c0_288, %c0_289] : memref<32x128xbf16, #tpu.memory_space<vmem>>, vector<32x128xbf16>
    %cst_290 = arith.constant dense<0.000000e+00> : vector<16x128xf32>
    %620 = tpu.matmul %618, %619, %cst_290 {dimension_numbers = #tpu.dot_dimension_numbers<[1], [0], [0], [1], [0, 0, 1, 1], [], []>} : vector<16x32xbf16>, vector<32x128xbf16>, vector<16x128xf32> -> vector<16x128xf32>
    %c0_291 = arith.constant 0 : index
    %c0_292 = arith.constant 0 : index
    %621 = vector.load %arg11[%c0_291, %c0_292] : memref<16x128xf32, #tpu.memory_space<vmem>>, vector<16x128xf32>
    tpu.vector_store %arg11[%c0_291, %c0_292], %620 {strides = array<i32>} : memref<16x128xf32, #tpu.memory_space<vmem>>, vector<16x128xf32>,
    return
  }
}

</mosaic_0001>

<llo_original>
// kernel: tpu_custom_call.1
$region0: #{tpu_custom_call.1}
  #allocation0 [shape = 'u32[]', space=smem, size = 0x4, offset = 0x4, fixed_abs, tag = 'smem constant byte address 0x4 - core index']
  #allocation1 [shape = 'u32[144,128]{1,0:T(1,128)}', space=vmem, size = 0x12000, scoped, tag = 'internal scratch']
  %s0 = inlined_call_operand.vmem [shape: f32[16,32], index: 0, kind: input, shape index: {}]
  %s1 = inlined_call_operand.vmem [shape: bf16[2,4,32,8], index: 1, kind: input, shape index: {}]
  %s2 = inlined_call_operand.vmem [shape: bf16[2,4,32,8], index: 2, kind: input, shape index: {}]
  %s3 = inlined_call_operand.vmem [shape: bf16[2,4,32,8], index: 3, kind: input, shape index: {}]
  %s4 = inlined_call_operand.vmem [shape: bf16[2,4,8,32], index: 4, kind: input, shape index: {}]
  %s5 = inlined_call_operand.vmem [shape: bf16[2,32,128], index: 5, kind: input, shape index: {}]
  %s6 = inlined_call_operand.vmem [shape: bf16[2,128,32], index: 6, kind: input, shape index: {}]
  %s7 = inlined_call_operand.vmem [shape: f32[2,1,128], index: 7, kind: input, shape index: {}]
  %s8 = inlined_call_operand.vmem [shape: f32[2,6,32], index: 8, kind: input, shape index: {}]
  %s9 = inlined_call_operand.vmem [shape: f32[2,32], index: 9, kind: input, shape index: {}]
  %s10 = inlined_call_operand.vmem [shape: bf16[32,128], index: 10, kind: input, shape index: {}]
  %s11 = inlined_call_operand.hbm [shape: f32[16,128], index: 11, kind: output, shape index: {}]
  %s12 = sld [smem:[#allocation0]]
  $region54: #{tpu_custom_call.1} parent=0
    _
  %s14 = ssub.s32 1, %s12
  %s15 = scalar_select 0, %s14, %s12
  $region1: #{tpu_custom_call.1} parent=0
    #allocation2 [shape = 'u8[8192]{0}', space=vmem, size = 0x2000, scoped, tag = 'output window, operand 0, single buffered']
    #allocation3 [shape = 's32[1]{0}', space=sflag, size = 0x4, scoped, tag = 'scoped memory for tpu_custom_call.1']
    %16 = vsyncpa [#allocation3], 0
    // Predicated region
    $region2: #{tpu_custom_call.1} parent=1 // pred_check
      _
    $region3: #{tpu_custom_call.1} parent=1 // pred_check_branch
      %18 = sbr.rel (0) target = $region5
    $region4: #{tpu_custom_call.1} parent=1 // pred_region
      _
    $region5: #{tpu_custom_call.1} parent=1 // pred_fallthru
      _
    // Predicated region
    $region6: #{tpu_custom_call.1} parent=1 // pred_check
      _
    $region7: #{tpu_custom_call.1} parent=1 // pred_check_branch
      %20 = sbr.rel (0) target = $region9
    $region8: #{tpu_custom_call.1} parent=1 // pred_region
      _
    $region9: #{tpu_custom_call.1} parent=1 // pred_fallthru
      _
    // Predicated region
    $region10: #{tpu_custom_call.1} parent=1 // pred_check
      _
    $region11: #{tpu_custom_call.1} parent=1 // pred_check_branch
      %22 = sbr.rel (0) target = $region13
    $region12: #{tpu_custom_call.1} parent=1 // pred_region
      _
    $region13: #{tpu_custom_call.1} parent=1 // pred_fallthru
      _
    // Predicated region
    $region14: #{tpu_custom_call.1} parent=1 // pred_check
      _
    $region15: #{tpu_custom_call.1} parent=1 // pred_check_branch
      %24 = sbr.rel (0) target = $region17
    $region16: #{tpu_custom_call.1} parent=1 // pred_region
      _
    $region17: #{tpu_custom_call.1} parent=1 // pred_fallthru
      _
    // Predicated region
    $region18: #{tpu_custom_call.1} parent=1 // pred_check
      _
    $region19: #{tpu_custom_call.1} parent=1 // pred_check_branch
      %26 = sbr.rel (0) target = $region21
    $region20: #{tpu_custom_call.1} parent=1 // pred_region
      _
    $region21: #{tpu_custom_call.1} parent=1 // pred_fallthru
      _
    // Predicated region
    $region22: #{tpu_custom_call.1} parent=1 // pred_check
      _
    $region23: #{tpu_custom_call.1} parent=1 // pred_check_branch
      %28 = sbr.rel (0) target = $region25
    $region24: #{tpu_custom_call.1} parent=1 // pred_region
      _
    $region25: #{tpu_custom_call.1} parent=1 // pred_fallthru
      _
    // Predicated region
    $region26: #{tpu_custom_call.1} parent=1 // pred_check
      _
    $region27: #{tpu_custom_call.1} parent=1 // pred_check_branch
      %30 = sbr.rel (0) target = $region29
    $region28: #{tpu_custom_call.1} parent=1 // pred_region
      _
    $region29: #{tpu_custom_call.1} parent=1 // pred_fallthru
      _
    // Predicated region
    $region30: #{tpu_custom_call.1} parent=1 // pred_check
      _
    $region31: #{tpu_custom_call.1} parent=1 // pred_check_branch
      %32 = sbr.rel (0) target = $region33
    $region32: #{tpu_custom_call.1} parent=1 // pred_region
      _
    $region33: #{tpu_custom_call.1} parent=1 // pred_fallthru
      _
    // Predicated region
    $region34: #{tpu_custom_call.1} parent=1 // pred_check
      _
    $region35: #{tpu_custom_call.1} parent=1 // pred_check_branch
      %34 = sbr.rel (0) target = $region37
    $region36: #{tpu_custom_call.1} parent=1 // pred_region
      _
    $region37: #{tpu_custom_call.1} parent=1 // pred_fallthru
      _
    // Predicated region
    $region38: #{tpu_custom_call.1} parent=1 // pred_check
      _
    $region39: #{tpu_custom_call.1} parent=1 // pred_check_branch
      %36 = sbr.rel (0) target = $region41
    $region40: #{tpu_custom_call.1} parent=1 // pred_region
      _
    $region41: #{tpu_custom_call.1} parent=1 // pred_fallthru
      _
    // Predicated region
    $region42: #{tpu_custom_call.1} parent=1 // pred_check
      _
    $region43: #{tpu_custom_call.1} parent=1 // pred_check_branch
      %38 = sbr.rel (0) target = $region45
    $region44: #{tpu_custom_call.1} parent=1 // pred_region
      _
    $region45: #{tpu_custom_call.1} parent=1 // pred_fallthru
      _
    %v40 = vld [vmem:[%s0] sm:$0xff]
    %v41 = vld [vmem:[%s0 + $0x8] sm:$0xff]
    %v42 = vlaneseq
    %v43 = vshrl.u32 %v42, 7
    %v44 = vlaneseq
    %v45 = vand.u32 %v44, 127
    %vm46 = vcmp.ge.s32.totalorder %v43, %v45
    %v47 = vsel %vm46, 0.0, -1e+30
    %v48 = vld [vmem:[%s8] sm:$0x3f]
    %v49 = vld [vmem:[%s7] sm:$0x1]
    %vm50 = vcmask 261120
    %v51 = vsel %vm50, %v40, 0.0
    %52 = vadd.xlane.f32.xlu0 %v51
    %v53 = vpop.xlane.xlu0 %52
    %v54 = vsel %vm50, %v41, 0.0
    %55 = vadd.xlane.f32.xlu0 %v54
    %v56 = vpop.xlane.xlu0 %55
    %v57 = vrcp.pop 32.0
    %v58 = vmul.f32 %v53, %v57
    %v59 = vmul.f32 %v56, %v57
    %v60 = vsub.f32 %v40, %v58
    %v61 = vsub.f32 %v41, %v59
    %v62 = vmul.f32 %v60, %v60
    %v63 = vmul.f32 %v61, %v61
    %v64 = vsel %vm50, %v62, 0.0
    %65 = vadd.xlane.f32.xlu0 %v64
    %v66 = vpop.xlane.xlu0 %65
    %v67 = vsel %vm50, %v63, 0.0
    %68 = vadd.xlane.f32.xlu0 %v67
    %v69 = vpop.xlane.xlu0 %68
    %v70 = vmul.f32 %v66, %v57
    %v71 = vmul.f32 %v69, %v57
    %v72 = vadd.f32 %v70, 1e-05
    %v73 = vadd.f32 %v71, 1e-05
    %v74 = vrsqrt.pop %v72
    %v75 = vrsqrt.pop %v73
    %v76 = vmul.f32 %v60, %v74
    %v77 = vmul.f32 %v61, %v75
    %v78 = vlaneseq
    %v79 = vshrl.u32 %v78, 7
    %v80 = vsub.s32 0, %v79
    %v81 = vrot.slane %v48, %v80
    %v82 = vmul.f32 %v81, %v76
    %v83 = vmul.f32 %v81, %v77
    %v84 = vlaneseq
    %v85 = vshrl.u32 %v84, 7
    %v86 = vsub.s32 1, %v85
    %v87 = vrot.slane %v48, %v86
    %v88 = vadd.f32 %v82, %v87
    %v89 = vadd.f32 %v83, %v87
    %v90 = vpack.c.bf16 %v89, %v88
    %v91 = vld [vmem:[%s1] sm:$0xf]
    %v92 = vld [vmem:[%s1 + $0x4] sm:$0xf]
    %v93 = vld [vmem:[%s1 + $0x8] sm:$0xf]
    %v94 = vld [vmem:[%s1 + $0xc] sm:$0xf]
    %v99 = vunpack.c.l.b16 %v91
    %v100 = vunpack.c.l.b16 %v92
    %v101 = vunpack.c.l.b16 %v93
    %v102 = vunpack.c.l.b16 %v94
    %v103 = vpack.c.b16 %v100, %v99
    %v104 = vpack.c.b16 %v102, %v101
    %v108 = vsel %vm50, %v90, 0
    %110 = vmatprep.subr.bf16.mxu0 0
    %111 = vmatpush1.bf16.msra.mxu0 0
    %112 = vmatprep.subr.bf16.mxu0 0
    %113 = vmatpush1.bf16.msra.mxu0 0
    %114 = vmatprep.subr.bf16.mxu0 0
    %115 = vmatpush1.bf16.msra.mxu0 0
    %116 = vmatprep.subr.bf16.mxu0 0
    %117 = vmatpush1.bf16.msra.mxu0 0
    %118 = vmatprep.subr.bf16.mxu0 0
    %119 = vmatpush1.bf16.msra.mxu0 0
    %120 = vmatprep.subr.bf16.mxu0 0
    %121 = vmatpush1.bf16.msra.mxu0 0
    %122 = vmatprep.subr.bf16.mxu0 0
    %123 = vmatpush1.bf16.msra.mxu0 %v104
    %124 = vmatprep.subr.bf16.mxu0 0
    %125 = vmatpush1.bf16.msra.mxu0 %v103
    %126 = vmatprep.subr.bf16.mxu0 0
    %127 = vmatpush2.bf16.msra.mxu0 0
    %128 = vmatprep.subr.bf16.mxu0 0
    %129 = vmatpush2.bf16.msra.mxu0 0
    %130 = vmatprep.subr.bf16.mxu0 0
    %131 = vmatpush2.bf16.msra.mxu0 0
    %132 = vmatprep.subr.bf16.mxu0 0
    %133 = vmatpush2.bf16.msra.mxu0 0
    %134 = vmatprep.subr.bf16.mxu0 0
    %135 = vmatpush2.bf16.msra.mxu0 0
    %136 = vmatprep.subr.bf16.mxu0 0
    %137 = vmatpush2.bf16.msra.mxu0 0
    %138 = vmatprep.subr.bf16.mxu0 0
    %139 = vmatpush2.bf16.msra.mxu0 0
    %140 = vmatprep.subr.bf16.mxu0 0
    %141 = vmatpush2.bf16.msra.mxu0 0
    %142 = vmatprep.mubr.bf16.mxu0 0
    %143 = vmatmul.mubr.bf16.gmra.mxu0 %v108
    %v144 = vpop.f32.mrf.mxu0
    %v145 = vadd.f32 0.0, %v144
    %v146 = vpop.f32.mrf.mxu0
    %v147 = vpop.f32.mrf.mxu0
    %v148 = vadd.f32 0.0, %v147
    %v149 = vpop.f32.mrf.mxu0
    %150 = vdwg.mxu0
    %v151 = vpack.c.bf16 %v148, %v145
    %v152 = vld [vmem:[%s2] sm:$0xf]
    %v153 = vld [vmem:[%s2 + $0x4] sm:$0xf]
    %v154 = vld [vmem:[%s2 + $0x8] sm:$0xf]
    %v155 = vld [vmem:[%s2 + $0xc] sm:$0xf]
    %v160 = vunpack.c.l.b16 %v152
    %v161 = vunpack.c.l.b16 %v153
    %v162 = vunpack.c.l.b16 %v154
    %v163 = vunpack.c.l.b16 %v155
    %v164 = vpack.c.b16 %v161, %v160
    %v165 = vpack.c.b16 %v163, %v162
    %168 = vmatprep.subr.bf16.mxu0 0
    %169 = vmatpush1.bf16.msra.mxu0 0
    %170 = vmatprep.subr.bf16.mxu0 0
    %171 = vmatpush1.bf16.msra.mxu0 0
    %172 = vmatprep.subr.bf16.mxu0 0
    %173 = vmatpush1.bf16.msra.mxu0 0
    %174 = vmatprep.subr.bf16.mxu0 0
    %175 = vmatpush1.bf16.msra.mxu0 0
    %176 = vmatprep.subr.bf16.mxu0 0
    %177 = vmatpush1.bf16.msra.mxu0 0
    %178 = vmatprep.subr.bf16.mxu0 0
    %179 = vmatpush1.bf16.msra.mxu0 0
    %180 = vmatprep.subr.bf16.mxu0 0
    %181 = vmatpush1.bf16.msra.mxu0 %v165
    %182 = vmatprep.subr.bf16.mxu0 0
    %183 = vmatpush1.bf16.msra.mxu0 %v164
    %184 = vmatprep.subr.bf16.mxu0 0
    %185 = vmatpush2.bf16.msra.mxu0 0
    %186 = vmatprep.subr.bf16.mxu0 0
    %187 = vmatpush2.bf16.msra.mxu0 0
    %188 = vmatprep.subr.bf16.mxu0 0
    %189 = vmatpush2.bf16.msra.mxu0 0
    %190 = vmatprep.subr.bf16.mxu0 0
    %191 = vmatpush2.bf16.msra.mxu0 0
    %192 = vmatprep.subr.bf16.mxu0 0
    %193 = vmatpush2.bf16.msra.mxu0 0
    %194 = vmatprep.subr.bf16.mxu0 0
    %195 = vmatpush2.bf16.msra.mxu0 0
    %196 = vmatprep.subr.bf16.mxu0 0
    %197 = vmatpush2.bf16.msra.mxu0 0
    %198 = vmatprep.subr.bf16.mxu0 0
    %199 = vmatpush2.bf16.msra.mxu0 0
    %200 = vmatprep.mubr.bf16.mxu0 0
    %201 = vmatmul.mubr.bf16.gmra.mxu0 %v108
    %v202 = vpop.f32.mrf.mxu0
    %v203 = vadd.f32 0.0, %v202
    %v204 = vpop.f32.mrf.mxu0
    %v205 = vpop.f32.mrf.mxu0
    %v206 = vadd.f32 0.0, %v205
    %v207 = vpop.f32.mrf.mxu0
    %208 = vdwg.mxu0
    %v209 = vpack.c.bf16 %v206, %v203
    %v210 = vld [vmem:[%s3] sm:$0xf]
    %v211 = vld [vmem:[%s3 + $0x4] sm:$0xf]
    %v212 = vld [vmem:[%s3 + $0x8] sm:$0xf]
    %v213 = vld [vmem:[%s3 + $0xc] sm:$0xf]
    %v218 = vunpack.c.l.b16 %v210
    %v219 = vunpack.c.l.b16 %v211
    %v220 = vunpack.c.l.b16 %v212
    %v221 = vunpack.c.l.b16 %v213
    %v222 = vpack.c.b16 %v219, %v218
    %v223 = vpack.c.b16 %v221, %v220
    %226 = vmatprep.subr.bf16.mxu0 0
    %227 = vmatpush1.bf16.msra.mxu0 0
    %228 = vmatprep.subr.bf16.mxu0 0
    %229 = vmatpush1.bf16.msra.mxu0 0
    %230 = vmatprep.subr.bf16.mxu0 0
    %231 = vmatpush1.bf16.msra.mxu0 0
    %232 = vmatprep.subr.bf16.mxu0 0
    %233 = vmatpush1.bf16.msra.mxu0 0
    %234 = vmatprep.subr.bf16.mxu0 0
    %235 = vmatpush1.bf16.msra.mxu0 0
    %236 = vmatprep.subr.bf16.mxu0 0
    %237 = vmatpush1.bf16.msra.mxu0 0
    %238 = vmatprep.subr.bf16.mxu0 0
    %239 = vmatpush1.bf16.msra.mxu0 %v223
    %240 = vmatprep.subr.bf16.mxu0 0
    %241 = vmatpush1.bf16.msra.mxu0 %v222
    %242 = vmatprep.subr.bf16.mxu0 0
    %243 = vmatpush2.bf16.msra.mxu0 0
    %244 = vmatprep.subr.bf16.mxu0 0
    %245 = vmatpush2.bf16.msra.mxu0 0
    %246 = vmatprep.subr.bf16.mxu0 0
    %247 = vmatpush2.bf16.msra.mxu0 0
    %248 = vmatprep.subr.bf16.mxu0 0
    %249 = vmatpush2.bf16.msra.mxu0 0
    %250 = vmatprep.subr.bf16.mxu0 0
    %251 = vmatpush2.bf16.msra.mxu0 0
    %252 = vmatprep.subr.bf16.mxu0 0
    %253 = vmatpush2.bf16.msra.mxu0 0
    %254 = vmatprep.subr.bf16.mxu0 0
    %255 = vmatpush2.bf16.msra.mxu0 0
    %256 = vmatprep.subr.bf16.mxu0 0
    %257 = vmatpush2.bf16.msra.mxu0 0
    %258 = vmatprep.mubr.bf16.mxu0 0
    %259 = vmatmul.mubr.bf16.gmra.mxu0 %v108
    %v260 = vpop.f32.mrf.mxu0
    %v261 = vadd.f32 0.0, %v260
    %v262 = vpop.f32.mrf.mxu0
    %v263 = vpop.f32.mrf.mxu0
    %v264 = vadd.f32 0.0, %v263
    %v265 = vpop.f32.mrf.mxu0
    %266 = vdwg.mxu0
    %v267 = vpack.c.bf16 %v264, %v261
    %vm268 = vcmask 64512
    %v270 = vsel %vm268, %v151, 0
    %v273 = vsel %vm268, %v209, 0
    %275 = vmatprep.subr.bf16.mxu0 0
    %276 = vmatpush1.bf16.xpose.msra.mxu0 0
    %277 = vmatprep.subr.bf16.mxu0 0
    %278 = vmatpush1.bf16.xpose.msra.mxu0 0
    %279 = vmatprep.subr.bf16.mxu0 0
    %280 = vmatpush1.bf16.xpose.msra.mxu0 0
    %281 = vmatprep.subr.bf16.mxu0 0
    %282 = vmatpush1.bf16.xpose.msra.mxu0 0
    %283 = vmatprep.subr.bf16.mxu0 0
    %284 = vmatpush1.bf16.xpose.msra.mxu0 0
    %285 = vmatprep.subr.bf16.mxu0 0
    %286 = vmatpush1.bf16.xpose.msra.mxu0 0
    %287 = vmatprep.subr.bf16.mxu0 0
    %288 = vmatpush1.bf16.xpose.msra.mxu0 0
    %289 = vmatprep.subr.bf16.mxu0 0
    %290 = vmatpush1.bf16.xpose.msra.mxu0 %v273
    %291 = vmatprep.subr.bf16.mxu0 0
    %292 = vmatpush2.bf16.xpose.msra.mxu0 0
    %293 = vmatprep.subr.bf16.mxu0 0
    %294 = vmatpush2.bf16.xpose.msra.mxu0 0
    %295 = vmatprep.subr.bf16.mxu0 0
    %296 = vmatpush2.bf16.xpose.msra.mxu0 0
    %297 = vmatprep.subr.bf16.mxu0 0
    %298 = vmatpush2.bf16.xpose.msra.mxu0 0
    %299 = vmatprep.subr.bf16.mxu0 0
    %300 = vmatpush2.bf16.xpose.msra.mxu0 0
    %301 = vmatprep.subr.bf16.mxu0 0
    %302 = vmatpush2.bf16.xpose.msra.mxu0 0
    %303 = vmatprep.subr.bf16.mxu0 0
    %304 = vmatpush2.bf16.xpose.msra.mxu0 0
    %305 = vmatprep.subr.bf16.mxu0 0
    %306 = vmatpush2.bf16.xpose.msra.mxu0 0
    %307 = vmatprep.mubr.bf16.mxu0 0
    %308 = vmatmul.mubr.bf16.gmra.mxu0 %v270
    %v309 = vpop.f32.mrf.mxu0
    %v310 = vadd.f32 %v47, %v309
    %v311 = vpop.f32.mrf.mxu0
    %v312 = vpop.f32.mrf.mxu0
    %v313 = vpop.f32.mrf.mxu0
    %314 = vdwg.mxu0
    %v315 = vsel %vm268, %v310, -inf
    %316 = vmax.xlane.f32.xlu0 %v315
    %v317 = vpop.xlane.xlu0 %316
    %v318 = vsub.f32 %v310, %v317
    %v319 = vmul.f32 %v318, 1.442695
    %v320 = vpow.pop %v319
    %v321 = vsel %vm268, %v320, 0.0
    %322 = vadd.xlane.f32.xlu0 %v321
    %v323 = vpop.xlane.xlu0 %322
    %v324 = vrcp.pop %v323
    %v325 = vmul.f32 %v320, %v324
    %v326 = vpack.c.bf16 %v325, %v325
    %v328 = vsel %vm268, %v326, 0
    %vm330 = vcmask 1043456
    %v332 = vsel %vm330, %v267, 0
    %334 = vmatprep.subr.bf16.mxu0 0
    %335 = vmatpush1.bf16.msra.mxu0 0
    %336 = vmatprep.subr.bf16.mxu0 0
    %337 = vmatpush1.bf16.msra.mxu0 0
    %338 = vmatprep.subr.bf16.mxu0 0
    %339 = vmatpush1.bf16.msra.mxu0 0
    %340 = vmatprep.subr.bf16.mxu0 0
    %341 = vmatpush1.bf16.msra.mxu0 0
    %342 = vmatprep.subr.bf16.mxu0 0
    %343 = vmatpush1.bf16.msra.mxu0 0
    %344 = vmatprep.subr.bf16.mxu0 0
    %345 = vmatpush1.bf16.msra.mxu0 0
    %346 = vmatprep.subr.bf16.mxu0 0
    %347 = vmatpush1.bf16.msra.mxu0 0
    %348 = vmatprep.subr.bf16.mxu0 0
    %349 = vmatpush1.bf16.msra.mxu0 %v332
    %350 = vmatprep.subr.bf16.mxu0 0
    %351 = vmatpush2.bf16.msra.mxu0 0
    %352 = vmatprep.subr.bf16.mxu0 0
    %353 = vmatpush2.bf16.msra.mxu0 0
    %354 = vmatprep.subr.bf16.mxu0 0
    %355 = vmatpush2.bf16.msra.mxu0 0
    %356 = vmatprep.subr.bf16.mxu0 0
    %357 = vmatpush2.bf16.msra.mxu0 0
    %358 = vmatprep.subr.bf16.mxu0 0
    %359 = vmatpush2.bf16.msra.mxu0 0
    %360 = vmatprep.subr.bf16.mxu0 0
    %361 = vmatpush2.bf16.msra.mxu0 0
    %362 = vmatprep.subr.bf16.mxu0 0
    %363 = vmatpush2.bf16.msra.mxu0 0
    %364 = vmatprep.subr.bf16.mxu0 0
    %365 = vmatpush2.bf16.msra.mxu0 0
    %366 = vmatprep.mubr.bf16.mxu0 0
    %367 = vmatmul.mubr.bf16.gmra.mxu0 %v328
    %v368 = vpop.f32.mrf.mxu0
    %v369 = vadd.f32 0.0, %v368
    %v370 = vpop.f32.mrf.mxu0
    %v371 = vpop.f32.mrf.mxu0
    %v372 = vpop.f32.mrf.mxu0
    %373 = vdwg.mxu0
    %v375 = vrot.slane %v151, 4
    %v377 = vrot.slane %v209, 4
    %v379 = vsel %vm268, %v375, 0
    %v382 = vsel %vm268, %v377, 0
    %384 = vmatprep.subr.bf16.mxu0 0
    %385 = vmatpush1.bf16.xpose.msra.mxu0 0
    %386 = vmatprep.subr.bf16.mxu0 0
    %387 = vmatpush1.bf16.xpose.msra.mxu0 0
    %388 = vmatprep.subr.bf16.mxu0 0
    %389 = vmatpush1.bf16.xpose.msra.mxu0 0
    %390 = vmatprep.subr.bf16.mxu0 0
    %391 = vmatpush1.bf16.xpose.msra.mxu0 0
    %392 = vmatprep.subr.bf16.mxu0 0
    %393 = vmatpush1.bf16.xpose.msra.mxu0 0
    %394 = vmatprep.subr.bf16.mxu0 0
    %395 = vmatpush1.bf16.xpose.msra.mxu0 0
    %396 = vmatprep.subr.bf16.mxu0 0
    %397 = vmatpush1.bf16.xpose.msra.mxu0 0
    %398 = vmatprep.subr.bf16.mxu0 0
    %399 = vmatpush1.bf16.xpose.msra.mxu0 %v382
    %400 = vmatprep.subr.bf16.mxu0 0
    %401 = vmatpush2.bf16.xpose.msra.mxu0 0
    %402 = vmatprep.subr.bf16.mxu0 0
    %403 = vmatpush2.bf16.xpose.msra.mxu0 0
    %404 = vmatprep.subr.bf16.mxu0 0
    %405 = vmatpush2.bf16.xpose.msra.mxu0 0
    %406 = vmatprep.subr.bf16.mxu0 0
    %407 = vmatpush2.bf16.xpose.msra.mxu0 0
    %408 = vmatprep.subr.bf16.mxu0 0
    %409 = vmatpush2.bf16.xpose.msra.mxu0 0
    %410 = vmatprep.subr.bf16.mxu0 0
    %411 = vmatpush2.bf16.xpose.msra.mxu0 0
    %412 = vmatprep.subr.bf16.mxu0 0
    %413 = vmatpush2.bf16.xpose.msra.mxu0 0
    %414 = vmatprep.subr.bf16.mxu0 0
    %415 = vmatpush2.bf16.xpose.msra.mxu0 0
    %416 = vmatprep.mubr.bf16.mxu0 0
    %417 = vmatmul.mubr.bf16.gmra.mxu0 %v379
    %v418 = vpop.f32.mrf.mxu0
    %v419 = vadd.f32 %v47, %v418
    %v420 = vpop.f32.mrf.mxu0
    %v421 = vpop.f32.mrf.mxu0
    %v422 = vpop.f32.mrf.mxu0
    %423 = vdwg.mxu0
    %v424 = vsel %vm268, %v419, -inf
    %425 = vmax.xlane.f32.xlu0 %v424
    %v426 = vpop.xlane.xlu0 %425
    %v427 = vsub.f32 %v419, %v426
    %v428 = vmul.f32 %v427, 1.442695
    %v429 = vpow.pop %v428
    %v430 = vsel %vm268, %v429, 0.0
    %431 = vadd.xlane.f32.xlu0 %v430
    %v432 = vpop.xlane.xlu0 %431
    %v433 = vrcp.pop %v432
    %v434 = vmul.f32 %v429, %v433
    %v435 = vpack.c.bf16 %v434, %v434
    %v437 = vrot.slane %v267, 4
    %v439 = vsel %vm268, %v435, 0
    %v442 = vsel %vm330, %v437, 0
    %444 = vmatprep.subr.bf16.mxu0 0
    %445 = vmatpush1.bf16.msra.mxu0 0
    %446 = vmatprep.subr.bf16.mxu0 0
    %447 = vmatpush1.bf16.msra.mxu0 0
    %448 = vmatprep.subr.bf16.mxu0 0
    %449 = vmatpush1.bf16.msra.mxu0 0
    %450 = vmatprep.subr.bf16.mxu0 0
    %451 = vmatpush1.bf16.msra.mxu0 0
    %452 = vmatprep.subr.bf16.mxu0 0
    %453 = vmatpush1.bf16.msra.mxu0 0
    %454 = vmatprep.subr.bf16.mxu0 0
    %455 = vmatpush1.bf16.msra.mxu0 0
    %456 = vmatprep.subr.bf16.mxu0 0
    %457 = vmatpush1.bf16.msra.mxu0 0
    %458 = vmatprep.subr.bf16.mxu0 0
    %459 = vmatpush1.bf16.msra.mxu0 %v442
    %460 = vmatprep.subr.bf16.mxu0 0
    %461 = vmatpush2.bf16.msra.mxu0 0
    %462 = vmatprep.subr.bf16.mxu0 0
    %463 = vmatpush2.bf16.msra.mxu0 0
    %464 = vmatprep.subr.bf16.mxu0 0
    %465 = vmatpush2.bf16.msra.mxu0 0
    %466 = vmatprep.subr.bf16.mxu0 0
    %467 = vmatpush2.bf16.msra.mxu0 0
    %468 = vmatprep.subr.bf16.mxu0 0
    %469 = vmatpush2.bf16.msra.mxu0 0
    %470 = vmatprep.subr.bf16.mxu0 0
    %471 = vmatpush2.bf16.msra.mxu0 0
    %472 = vmatprep.subr.bf16.mxu0 0
    %473 = vmatpush2.bf16.msra.mxu0 0
    %474 = vmatprep.subr.bf16.mxu0 0
    %475 = vmatpush2.bf16.msra.mxu0 0
    %476 = vmatprep.mubr.bf16.mxu0 0
    %477 = vmatmul.mubr.bf16.gmra.mxu0 %v439
    %v478 = vpop.f32.mrf.mxu0
    %v479 = vadd.f32 0.0, %v478
    %v480 = vpop.f32.mrf.mxu0
    %v481 = vpop.f32.mrf.mxu0
    %v482 = vpop.f32.mrf.mxu0
    %483 = vdwg.mxu0
    %v484 = vpack.c.bf16 %v479, %v369
    %v485 = vld [vmem:[%s4] sm:$0xf]
    %s486 = scalar_lea.vmem %s1, 16
    %v487 = vld [vmem:[%s486] sm:$0xf]
    %v488 = vld [vmem:[%s486 + $0x4] sm:$0xf]
    %v489 = vld [vmem:[%s486 + $0x8] sm:$0xf]
    %v490 = vld [vmem:[%s486 + $0xc] sm:$0xf]
    %v495 = vunpack.c.l.b16 %v487
    %v496 = vunpack.c.l.b16 %v488
    %v497 = vunpack.c.l.b16 %v489
    %v498 = vunpack.c.l.b16 %v490
    %v499 = vpack.c.b16 %v496, %v495
    %v500 = vpack.c.b16 %v498, %v497
    %503 = vmatprep.subr.bf16.mxu0 0
    %504 = vmatpush1.bf16.msra.mxu0 0
    %505 = vmatprep.subr.bf16.mxu0 0
    %506 = vmatpush1.bf16.msra.mxu0 0
    %507 = vmatprep.subr.bf16.mxu0 0
    %508 = vmatpush1.bf16.msra.mxu0 0
    %509 = vmatprep.subr.bf16.mxu0 0
    %510 = vmatpush1.bf16.msra.mxu0 0
    %511 = vmatprep.subr.bf16.mxu0 0
    %512 = vmatpush1.bf16.msra.mxu0 0
    %513 = vmatprep.subr.bf16.mxu0 0
    %514 = vmatpush1.bf16.msra.mxu0 0
    %515 = vmatprep.subr.bf16.mxu0 0
    %516 = vmatpush1.bf16.msra.mxu0 %v500
    %517 = vmatprep.subr.bf16.mxu0 0
    %518 = vmatpush1.bf16.msra.mxu0 %v499
    %519 = vmatprep.subr.bf16.mxu0 0
    %520 = vmatpush2.bf16.msra.mxu0 0
    %521 = vmatprep.subr.bf16.mxu0 0
    %522 = vmatpush2.bf16.msra.mxu0 0
    %523 = vmatprep.subr.bf16.mxu0 0
    %524 = vmatpush2.bf16.msra.mxu0 0
    %525 = vmatprep.subr.bf16.mxu0 0
    %526 = vmatpush2.bf16.msra.mxu0 0
    %527 = vmatprep.subr.bf16.mxu0 0
    %528 = vmatpush2.bf16.msra.mxu0 0
    %529 = vmatprep.subr.bf16.mxu0 0
    %530 = vmatpush2.bf16.msra.mxu0 0
    %531 = vmatprep.subr.bf16.mxu0 0
    %532 = vmatpush2.bf16.msra.mxu0 0
    %533 = vmatprep.subr.bf16.mxu0 0
    %534 = vmatpush2.bf16.msra.mxu0 0
    %535 = vmatprep.mubr.bf16.mxu0 0
    %536 = vmatmul.mubr.bf16.gmra.mxu0 %v108
    %v537 = vpop.f32.mrf.mxu0
    %v538 = vadd.f32 0.0, %v537
    %v539 = vpop.f32.mrf.mxu0
    %v540 = vpop.f32.mrf.mxu0
    %v541 = vadd.f32 0.0, %v540
    %v542 = vpop.f32.mrf.mxu0
    %543 = vdwg.mxu0
    %v544 = vpack.c.bf16 %v541, %v538
    %s545 = scalar_lea.vmem %s2, 16
    %v546 = vld [vmem:[%s545] sm:$0xf]
    %v547 = vld [vmem:[%s545 + $0x4] sm:$0xf]
    %v548 = vld [vmem:[%s545 + $0x8] sm:$0xf]
    %v549 = vld [vmem:[%s545 + $0xc] sm:$0xf]
    %v554 = vunpack.c.l.b16 %v546
    %v555 = vunpack.c.l.b16 %v547
    %v556 = vunpack.c.l.b16 %v548
    %v557 = vunpack.c.l.b16 %v549
    %v558 = vpack.c.b16 %v555, %v554
    %v559 = vpack.c.b16 %v557, %v556
    %562 = vmatprep.subr.bf16.mxu0 0
    %563 = vmatpush1.bf16.msra.mxu0 0
    %564 = vmatprep.subr.bf16.mxu0 0
    %565 = vmatpush1.bf16.msra.mxu0 0
    %566 = vmatprep.subr.bf16.mxu0 0
    %567 = vmatpush1.bf16.msra.mxu0 0
    %568 = vmatprep.subr.bf16.mxu0 0
    %569 = vmatpush1.bf16.msra.mxu0 0
    %570 = vmatprep.subr.bf16.mxu0 0
    %571 = vmatpush1.bf16.msra.mxu0 0
    %572 = vmatprep.subr.bf16.mxu0 0
    %573 = vmatpush1.bf16.msra.mxu0 0
    %574 = vmatprep.subr.bf16.mxu0 0
    %575 = vmatpush1.bf16.msra.mxu0 %v559
    %576 = vmatprep.subr.bf16.mxu0 0
    %577 = vmatpush1.bf16.msra.mxu0 %v558
    %578 = vmatprep.subr.bf16.mxu0 0
    %579 = vmatpush2.bf16.msra.mxu0 0
    %580 = vmatprep.subr.bf16.mxu0 0
    %581 = vmatpush2.bf16.msra.mxu0 0
    %582 = vmatprep.subr.bf16.mxu0 0
    %583 = vmatpush2.bf16.msra.mxu0 0
    %584 = vmatprep.subr.bf16.mxu0 0
    %585 = vmatpush2.bf16.msra.mxu0 0
    %586 = vmatprep.subr.bf16.mxu0 0
    %587 = vmatpush2.bf16.msra.mxu0 0
    %588 = vmatprep.subr.bf16.mxu0 0
    %589 = vmatpush2.bf16.msra.mxu0 0
    %590 = vmatprep.subr.bf16.mxu0 0
    %591 = vmatpush2.bf16.msra.mxu0 0
    %592 = vmatprep.subr.bf16.mxu0 0
    %593 = vmatpush2.bf16.msra.mxu0 0
    %594 = vmatprep.mubr.bf16.mxu0 0
    %595 = vmatmul.mubr.bf16.gmra.mxu0 %v108
    %v596 = vpop.f32.mrf.mxu0
    %v597 = vadd.f32 0.0, %v596
    %v598 = vpop.f32.mrf.mxu0
    %v599 = vpop.f32.mrf.mxu0
    %v600 = vadd.f32 0.0, %v599
    %v601 = vpop.f32.mrf.mxu0
    %602 = vdwg.mxu0
    %v603 = vpack.c.bf16 %v600, %v597
    %s604 = scalar_lea.vmem %s3, 16
    %v605 = vld [vmem:[%s604] sm:$0xf]
    %v606 = vld [vmem:[%s604 + $0x4] sm:$0xf]
    %v607 = vld [vmem:[%s604 + $0x8] sm:$0xf]
    %v608 = vld [vmem:[%s604 + $0xc] sm:$0xf]
    %v613 = vunpack.c.l.b16 %v605
    %v614 = vunpack.c.l.b16 %v606
    %v615 = vunpack.c.l.b16 %v607
    %v616 = vunpack.c.l.b16 %v608
    %v617 = vpack.c.b16 %v614, %v613
    %v618 = vpack.c.b16 %v616, %v615
    %621 = vmatprep.subr.bf16.mxu0 0
    %622 = vmatpush1.bf16.msra.mxu0 0
    %623 = vmatprep.subr.bf16.mxu0 0
    %624 = vmatpush1.bf16.msra.mxu0 0
    %625 = vmatprep.subr.bf16.mxu0 0
    %626 = vmatpush1.bf16.msra.mxu0 0
    %627 = vmatprep.subr.bf16.mxu0 0
    %628 = vmatpush1.bf16.msra.mxu0 0
    %629 = vmatprep.subr.bf16.mxu0 0
    %630 = vmatpush1.bf16.msra.mxu0 0
    %631 = vmatprep.subr.bf16.mxu0 0
    %632 = vmatpush1.bf16.msra.mxu0 0
    %633 = vmatprep.subr.bf16.mxu0 0
    %634 = vmatpush1.bf16.msra.mxu0 %v618
    %635 = vmatprep.subr.bf16.mxu0 0
    %636 = vmatpush1.bf16.msra.mxu0 %v617
    %637 = vmatprep.subr.bf16.mxu0 0
    %638 = vmatpush2.bf16.msra.mxu0 0
    %639 = vmatprep.subr.bf16.mxu0 0
    %640 = vmatpush2.bf16.msra.mxu0 0
    %641 = vmatprep.subr.bf16.mxu0 0
    %642 = vmatpush2.bf16.msra.mxu0 0
    %643 = vmatprep.subr.bf16.mxu0 0
    %644 = vmatpush2.bf16.msra.mxu0 0
    %645 = vmatprep.subr.bf16.mxu0 0
    %646 = vmatpush2.bf16.msra.mxu0 0
    %647 = vmatprep.subr.bf16.mxu0 0
    %648 = vmatpush2.bf16.msra.mxu0 0
    %649 = vmatprep.subr.bf16.mxu0 0
    %650 = vmatpush2.bf16.msra.mxu0 0
    %651 = vmatprep.subr.bf16.mxu0 0
    %652 = vmatpush2.bf16.msra.mxu0 0
    %653 = vmatprep.mubr.bf16.mxu0 0
    %654 = vmatmul.mubr.bf16.gmra.mxu0 %v108
    %v655 = vpop.f32.mrf.mxu0
    %v656 = vadd.f32 0.0, %v655
    %v657 = vpop.f32.mrf.mxu0
    %v658 = vpop.f32.mrf.mxu0
    %v659 = vadd.f32 0.0, %v658
    %v660 = vpop.f32.mrf.mxu0
    %661 = vdwg.mxu0
    %v662 = vpack.c.bf16 %v659, %v656
    %v664 = vsel %vm268, %v544, 0
    %v667 = vsel %vm268, %v603, 0
    %669 = vmatprep.subr.bf16.mxu0 0
    %670 = vmatpush1.bf16.xpose.msra.mxu0 0
    %671 = vmatprep.subr.bf16.mxu0 0
    %672 = vmatpush1.bf16.xpose.msra.mxu0 0
    %673 = vmatprep.subr.bf16.mxu0 0
    %674 = vmatpush1.bf16.xpose.msra.mxu0 0
    %675 = vmatprep.subr.bf16.mxu0 0
    %676 = vmatpush1.bf16.xpose.msra.mxu0 0
    %677 = vmatprep.subr.bf16.mxu0 0
    %678 = vmatpush1.bf16.xpose.msra.mxu0 0
    %679 = vmatprep.subr.bf16.mxu0 0
    %680 = vmatpush1.bf16.xpose.msra.mxu0 0
    %681 = vmatprep.subr.bf16.mxu0 0
    %682 = vmatpush1.bf16.xpose.msra.mxu0 0
    %683 = vmatprep.subr.bf16.mxu0 0
    %684 = vmatpush1.bf16.xpose.msra.mxu0 %v667
    %685 = vmatprep.subr.bf16.mxu0 0
    %686 = vmatpush2.bf16.xpose.msra.mxu0 0
    %687 = vmatprep.subr.bf16.mxu0 0
    %688 = vmatpush2.bf16.xpose.msra.mxu0 0
    %689 = vmatprep.subr.bf16.mxu0 0
    %690 = vmatpush2.bf16.xpose.msra.mxu0 0
    %691 = vmatprep.subr.bf16.mxu0 0
    %692 = vmatpush2.bf16.xpose.msra.mxu0 0
    %693 = vmatprep.subr.bf16.mxu0 0
    %694 = vmatpush2.bf16.xpose.msra.mxu0 0
    %695 = vmatprep.subr.bf16.mxu0 0
    %696 = vmatpush2.bf16.xpose.msra.mxu0 0
    %697 = vmatprep.subr.bf16.mxu0 0
    %698 = vmatpush2.bf16.xpose.msra.mxu0 0
    %699 = vmatprep.subr.bf16.mxu0 0
    %700 = vmatpush2.bf16.xpose.msra.mxu0 0
    %701 = vmatprep.mubr.bf16.mxu0 0
    %702 = vmatmul.mubr.bf16.gmra.mxu0 %v664
    %v703 = vpop.f32.mrf.mxu0
    %v704 = vadd.f32 %v47, %v703
    %v705 = vpop.f32.mrf.mxu0
    %v706 = vpop.f32.mrf.mxu0
    %v707 = vpop.f32.mrf.mxu0
    %708 = vdwg.mxu0
    %v709 = vsel %vm268, %v704, -inf
    %710 = vmax.xlane.f32.xlu0 %v709
    %v711 = vpop.xlane.xlu0 %710
    %v712 = vsub.f32 %v704, %v711
    %v713 = vmul.f32 %v712, 1.442695
    %v714 = vpow.pop %v713
    %v715 = vsel %vm268, %v714, 0.0
    %716 = vadd.xlane.f32.xlu0 %v715
    %v717 = vpop.xlane.xlu0 %716
    %v718 = vrcp.pop %v717
    %v719 = vmul.f32 %v714, %v718
    %v720 = vpack.c.bf16 %v719, %v719
    %v722 = vsel %vm268, %v720, 0
    %v725 = vsel %vm330, %v662, 0
    %727 = vmatprep.subr.bf16.mxu0 0
    %728 = vmatpush1.bf16.msra.mxu0 0
    %729 = vmatprep.subr.bf16.mxu0 0
    %730 = vmatpush1.bf16.msra.mxu0 0
    %731 = vmatprep.subr.bf16.mxu0 0
    %732 = vmatpush1.bf16.msra.mxu0 0
    %733 = vmatprep.subr.bf16.mxu0 0
    %734 = vmatpush1.bf16.msra.mxu0 0
    %735 = vmatprep.subr.bf16.mxu0 0
    %736 = vmatpush1.bf16.msra.mxu0 0
    %737 = vmatprep.subr.bf16.mxu0 0
    %738 = vmatpush1.bf16.msra.mxu0 0
    %739 = vmatprep.subr.bf16.mxu0 0
    %740 = vmatpush1.bf16.msra.mxu0 0
    %741 = vmatprep.subr.bf16.mxu0 0
    %742 = vmatpush1.bf16.msra.mxu0 %v725
    %743 = vmatprep.subr.bf16.mxu0 0
    %744 = vmatpush2.bf16.msra.mxu0 0
    %745 = vmatprep.subr.bf16.mxu0 0
    %746 = vmatpush2.bf16.msra.mxu0 0
    %747 = vmatprep.subr.bf16.mxu0 0
    %748 = vmatpush2.bf16.msra.mxu0 0
    %749 = vmatprep.subr.bf16.mxu0 0
    %750 = vmatpush2.bf16.msra.mxu0 0
    %751 = vmatprep.subr.bf16.mxu0 0
    %752 = vmatpush2.bf16.msra.mxu0 0
    %753 = vmatprep.subr.bf16.mxu0 0
    %754 = vmatpush2.bf16.msra.mxu0 0
    %755 = vmatprep.subr.bf16.mxu0 0
    %756 = vmatpush2.bf16.msra.mxu0 0
    %757 = vmatprep.subr.bf16.mxu0 0
    %758 = vmatpush2.bf16.msra.mxu0 0
    %759 = vmatprep.mubr.bf16.mxu0 0
    %760 = vmatmul.mubr.bf16.gmra.mxu0 %v722
    %v761 = vpop.f32.mrf.mxu0
    %v762 = vadd.f32 0.0, %v761
    %v763 = vpop.f32.mrf.mxu0
    %v764 = vpop.f32.mrf.mxu0
    %v765 = vpop.f32.mrf.mxu0
    %766 = vdwg.mxu0
    %v768 = vrot.slane %v544, 4
    %v770 = vrot.slane %v603, 4
    %v772 = vsel %vm268, %v768, 0
    %v775 = vsel %vm268, %v770, 0
    %777 = vmatprep.subr.bf16.mxu0 0
    %778 = vmatpush1.bf16.xpose.msra.mxu0 0
    %779 = vmatprep.subr.bf16.mxu0 0
    %780 = vmatpush1.bf16.xpose.msra.mxu0 0
    %781 = vmatprep.subr.bf16.mxu0 0
    %782 = vmatpush1.bf16.xpose.msra.mxu0 0
    %783 = vmatprep.subr.bf16.mxu0 0
    %784 = vmatpush1.bf16.xpose.msra.mxu0 0
    %785 = vmatprep.subr.bf16.mxu0 0
    %786 = vmatpush1.bf16.xpose.msra.mxu0 0
    %787 = vmatprep.subr.bf16.mxu0 0
    %788 = vmatpush1.bf16.xpose.msra.mxu0 0
    %789 = vmatprep.subr.bf16.mxu0 0
    %790 = vmatpush1.bf16.xpose.msra.mxu0 0
    %791 = vmatprep.subr.bf16.mxu0 0
    %792 = vmatpush1.bf16.xpose.msra.mxu0 %v775
    %793 = vmatprep.subr.bf16.mxu0 0
    %794 = vmatpush2.bf16.xpose.msra.mxu0 0
    %795 = vmatprep.subr.bf16.mxu0 0
    %796 = vmatpush2.bf16.xpose.msra.mxu0 0
    %797 = vmatprep.subr.bf16.mxu0 0
    %798 = vmatpush2.bf16.xpose.msra.mxu0 0
    %799 = vmatprep.subr.bf16.mxu0 0
    %800 = vmatpush2.bf16.xpose.msra.mxu0 0
    %801 = vmatprep.subr.bf16.mxu0 0
    %802 = vmatpush2.bf16.xpose.msra.mxu0 0
    %803 = vmatprep.subr.bf16.mxu0 0
    %804 = vmatpush2.bf16.xpose.msra.mxu0 0
    %805 = vmatprep.subr.bf16.mxu0 0
    %806 = vmatpush2.bf16.xpose.msra.mxu0 0
    %807 = vmatprep.subr.bf16.mxu0 0
    %808 = vmatpush2.bf16.xpose.msra.mxu0 0
    %809 = vmatprep.mubr.bf16.mxu0 0
    %810 = vmatmul.mubr.bf16.gmra.mxu0 %v772
    %v811 = vpop.f32.mrf.mxu0
    %v812 = vadd.f32 %v47, %v811
    %v813 = vpop.f32.mrf.mxu0
    %v814 = vpop.f32.mrf.mxu0
    %v815 = vpop.f32.mrf.mxu0
    %816 = vdwg.mxu0
    %v817 = vsel %vm268, %v812, -inf
    %818 = vmax.xlane.f32.xlu0 %v817
    %v819 = vpop.xlane.xlu0 %818
    %v820 = vsub.f32 %v812, %v819
    %v821 = vmul.f32 %v820, 1.442695
    %v822 = vpow.pop %v821
    %v823 = vsel %vm268, %v822, 0.0
    %824 = vadd.xlane.f32.xlu0 %v823
    %v825 = vpop.xlane.xlu0 %824
    %v826 = vrcp.pop %v825
    %v827 = vmul.f32 %v822, %v826
    %v828 = vpack.c.bf16 %v827, %v827
    %v830 = vrot.slane %v662, 4
    %v832 = vsel %vm268, %v828, 0
    %v835 = vsel %vm330, %v830, 0
    %837 = vmatprep.subr.bf16.mxu0 0
    %838 = vmatpush1.bf16.msra.mxu0 0
    %839 = vmatprep.subr.bf16.mxu0 0
    %840 = vmatpush1.bf16.msra.mxu0 0
    %841 = vmatprep.subr.bf16.mxu0 0
    %842 = vmatpush1.bf16.msra.mxu0 0
    %843 = vmatprep.subr.bf16.mxu0 0
    %844 = vmatpush1.bf16.msra.mxu0 0
    %845 = vmatprep.subr.bf16.mxu0 0
    %846 = vmatpush1.bf16.msra.mxu0 0
    %847 = vmatprep.subr.bf16.mxu0 0
    %848 = vmatpush1.bf16.msra.mxu0 0
    %849 = vmatprep.subr.bf16.mxu0 0
    %850 = vmatpush1.bf16.msra.mxu0 0
    %851 = vmatprep.subr.bf16.mxu0 0
    %852 = vmatpush1.bf16.msra.mxu0 %v835
    %853 = vmatprep.subr.bf16.mxu0 0
    %854 = vmatpush2.bf16.msra.mxu0 0
    %855 = vmatprep.subr.bf16.mxu0 0
    %856 = vmatpush2.bf16.msra.mxu0 0
    %857 = vmatprep.subr.bf16.mxu0 0
    %858 = vmatpush2.bf16.msra.mxu0 0
    %859 = vmatprep.subr.bf16.mxu0 0
    %860 = vmatpush2.bf16.msra.mxu0 0
    %861 = vmatprep.subr.bf16.mxu0 0
    %862 = vmatpush2.bf16.msra.mxu0 0
    %863 = vmatprep.subr.bf16.mxu0 0
    %864 = vmatpush2.bf16.msra.mxu0 0
    %865 = vmatprep.subr.bf16.mxu0 0
    %866 = vmatpush2.bf16.msra.mxu0 0
    %867 = vmatprep.subr.bf16.mxu0 0
    %868 = vmatpush2.bf16.msra.mxu0 0
    %869 = vmatprep.mubr.bf16.mxu0 0
    %870 = vmatmul.mubr.bf16.gmra.mxu0 %v832
    %v871 = vpop.f32.mrf.mxu0
    %v872 = vadd.f32 0.0, %v871
    %v873 = vpop.f32.mrf.mxu0
    %v874 = vpop.f32.mrf.mxu0
    %v875 = vpop.f32.mrf.mxu0
    %876 = vdwg.mxu0
    %v877 = vpack.c.bf16 %v872, %v762
    %s878 = scalar_lea.vmem %s4, 4
    %v879 = vld [vmem:[%s878] sm:$0xf]
    %v881 = vsel %vm268, %v877, 0
    %v884 = vsel %vm330, %v879, 0
    %886 = vmatprep.subr.bf16.mxu0 0
    %887 = vmatpush1.bf16.msra.mxu0 0
    %888 = vmatprep.subr.bf16.mxu0 0
    %889 = vmatpush1.bf16.msra.mxu0 0
    %890 = vmatprep.subr.bf16.mxu0 0
    %891 = vmatpush1.bf16.msra.mxu0 0
    %892 = vmatprep.subr.bf16.mxu0 0
    %893 = vmatpush1.bf16.msra.mxu0 0
    %894 = vmatprep.subr.bf16.mxu0 0
    %895 = vmatpush1.bf16.msra.mxu0 0
    %896 = vmatprep.subr.bf16.mxu0 0
    %897 = vmatpush1.bf16.msra.mxu0 0
    %898 = vmatprep.subr.bf16.mxu0 0
    %899 = vmatpush1.bf16.msra.mxu0 0
    %900 = vmatprep.subr.bf16.mxu0 0
    %901 = vmatpush1.bf16.msra.mxu0 %v884
    %902 = vmatprep.subr.bf16.mxu0 0
    %903 = vmatpush2.bf16.msra.mxu0 0
    %904 = vmatprep.subr.bf16.mxu0 0
    %905 = vmatpush2.bf16.msra.mxu0 0
    %906 = vmatprep.subr.bf16.mxu0 0
    %907 = vmatpush2.bf16.msra.mxu0 0
    %908 = vmatprep.subr.bf16.mxu0 0
    %909 = vmatpush2.bf16.msra.mxu0 0
    %910 = vmatprep.subr.bf16.mxu0 0
    %911 = vmatpush2.bf16.msra.mxu0 0
    %912 = vmatprep.subr.bf16.mxu0 0
    %913 = vmatpush2.bf16.msra.mxu0 0
    %914 = vmatprep.subr.bf16.mxu0 0
    %915 = vmatpush2.bf16.msra.mxu0 0
    %916 = vmatprep.subr.bf16.mxu0 0
    %917 = vmatpush2.bf16.msra.mxu0 0
    %918 = vmatprep.mubr.bf16.mxu0 0
    %919 = vmatmul.mubr.bf16.gmra.mxu0 %v881
    %v920 = vpop.f32.mrf.mxu0
    %v921 = vadd.f32 0.0, %v920
    %v922 = vpop.f32.mrf.mxu0
    %v923 = vpop.f32.mrf.mxu0
    %v924 = vadd.f32 0.0, %v923
    %v925 = vpop.f32.mrf.mxu0
    %926 = vdwg.mxu0
    %v928 = vsel %vm268, %v484, 0
    %v931 = vsel %vm330, %v485, 0
    %933 = vmatprep.subr.bf16.mxu0 0
    %934 = vmatpush1.bf16.msra.mxu0 0
    %935 = vmatprep.subr.bf16.mxu0 0
    %936 = vmatpush1.bf16.msra.mxu0 0
    %937 = vmatprep.subr.bf16.mxu0 0
    %938 = vmatpush1.bf16.msra.mxu0 0
    %939 = vmatprep.subr.bf16.mxu0 0
    %940 = vmatpush1.bf16.msra.mxu0 0
    %941 = vmatprep.subr.bf16.mxu0 0
    %942 = vmatpush1.bf16.msra.mxu0 0
    %943 = vmatprep.subr.bf16.mxu0 0
    %944 = vmatpush1.bf16.msra.mxu0 0
    %945 = vmatprep.subr.bf16.mxu0 0
    %946 = vmatpush1.bf16.msra.mxu0 0
    %947 = vmatprep.subr.bf16.mxu0 0
    %948 = vmatpush1.bf16.msra.mxu0 %v931
    %949 = vmatprep.subr.bf16.mxu0 0
    %950 = vmatpush2.bf16.msra.mxu0 0
    %951 = vmatprep.subr.bf16.mxu0 0
    %952 = vmatpush2.bf16.msra.mxu0 0
    %953 = vmatprep.subr.bf16.mxu0 0
    %954 = vmatpush2.bf16.msra.mxu0 0
    %955 = vmatprep.subr.bf16.mxu0 0
    %956 = vmatpush2.bf16.msra.mxu0 0
    %957 = vmatprep.subr.bf16.mxu0 0
    %958 = vmatpush2.bf16.msra.mxu0 0
    %959 = vmatprep.subr.bf16.mxu0 0
    %960 = vmatpush2.bf16.msra.mxu0 0
    %961 = vmatprep.subr.bf16.mxu0 0
    %962 = vmatpush2.bf16.msra.mxu0 0
    %963 = vmatprep.subr.bf16.mxu0 0
    %964 = vmatpush2.bf16.msra.mxu0 0
    %965 = vmatprep.mubr.bf16.mxu0 0
    %966 = vmatmul.mubr.bf16.gmra.mxu0 %v928
    %v967 = vpop.f32.mrf.mxu0
    %v968 = vadd.f32 %v921, %v967
    %v969 = vpop.f32.mrf.mxu0
    %v970 = vpop.f32.mrf.mxu0
    %v971 = vadd.f32 %v924, %v970
    %v972 = vpop.f32.mrf.mxu0
    %973 = vdwg.mxu0
    %s974 = scalar_lea.vmem %s1, 32
    %v975 = vld [vmem:[%s974] sm:$0xf]
    %v976 = vld [vmem:[%s974 + $0x4] sm:$0xf]
    %v977 = vld [vmem:[%s974 + $0x8] sm:$0xf]
    %v978 = vld [vmem:[%s974 + $0xc] sm:$0xf]
    %v983 = vunpack.c.l.b16 %v975
    %v984 = vunpack.c.l.b16 %v976
    %v985 = vunpack.c.l.b16 %v977
    %v986 = vunpack.c.l.b16 %v978
    %v987 = vpack.c.b16 %v984, %v983
    %v988 = vpack.c.b16 %v986, %v985
    %991 = vmatprep.subr.bf16.mxu0 0
    %992 = vmatpush1.bf16.msra.mxu0 0
    %993 = vmatprep.subr.bf16.mxu0 0
    %994 = vmatpush1.bf16.msra.mxu0 0
    %995 = vmatprep.subr.bf16.mxu0 0
    %996 = vmatpush1.bf16.msra.mxu0 0
    %997 = vmatprep.subr.bf16.mxu0 0
    %998 = vmatpush1.bf16.msra.mxu0 0
    %999 = vmatprep.subr.bf16.mxu0 0
    %1000 = vmatpush1.bf16.msra.mxu0 0
    %1001 = vmatprep.subr.bf16.mxu0 0
    %1002 = vmatpush1.bf16.msra.mxu0 0
    %1003 = vmatprep.subr.bf16.mxu0 0
    %1004 = vmatpush1.bf16.msra.mxu0 %v988
    %1005 = vmatprep.subr.bf16.mxu0 0
    %1006 = vmatpush1.bf16.msra.mxu0 %v987
    %1007 = vmatprep.subr.bf16.mxu0 0
    %1008 = vmatpush2.bf16.msra.mxu0 0
    %1009 = vmatprep.subr.bf16.mxu0 0
    %1010 = vmatpush2.bf16.msra.mxu0 0
    %1011 = vmatprep.subr.bf16.mxu0 0
    %1012 = vmatpush2.bf16.msra.mxu0 0
    %1013 = vmatprep.subr.bf16.mxu0 0
    %1014 = vmatpush2.bf16.msra.mxu0 0
    %1015 = vmatprep.subr.bf16.mxu0 0
    %1016 = vmatpush2.bf16.msra.mxu0 0
    %1017 = vmatprep.subr.bf16.mxu0 0
    %1018 = vmatpush2.bf16.msra.mxu0 0
    %1019 = vmatprep.subr.bf16.mxu0 0
    %1020 = vmatpush2.bf16.msra.mxu0 0
    %1021 = vmatprep.subr.bf16.mxu0 0
    %1022 = vmatpush2.bf16.msra.mxu0 0
    %1023 = vmatprep.mubr.bf16.mxu0 0
    %1024 = vmatmul.mubr.bf16.gmra.mxu0 %v108
    %v1025 = vpop.f32.mrf.mxu0
    %v1026 = vadd.f32 0.0, %v1025
    %v1027 = vpop.f32.mrf.mxu0
    %v1028 = vpop.f32.mrf.mxu0
    %v1029 = vadd.f32 0.0, %v1028
    %v1030 = vpop.f32.mrf.mxu0
    %1031 = vdwg.mxu0
    %v1032 = vpack.c.bf16 %v1029, %v1026
    %s1033 = scalar_lea.vmem %s2, 32
    %v1034 = vld [vmem:[%s1033] sm:$0xf]
    %v1035 = vld [vmem:[%s1033 + $0x4] sm:$0xf]
    %v1036 = vld [vmem:[%s1033 + $0x8] sm:$0xf]
    %v1037 = vld [vmem:[%s1033 + $0xc] sm:$0xf]
    %v1042 = vunpack.c.l.b16 %v1034
    %v1043 = vunpack.c.l.b16 %v1035
    %v1044 = vunpack.c.l.b16 %v1036
    %v1045 = vunpack.c.l.b16 %v1037
    %v1046 = vpack.c.b16 %v1043, %v1042
    %v1047 = vpack.c.b16 %v1045, %v1044
    %1050 = vmatprep.subr.bf16.mxu0 0
    %1051 = vmatpush1.bf16.msra.mxu0 0
    %1052 = vmatprep.subr.bf16.mxu0 0
    %1053 = vmatpush1.bf16.msra.mxu0 0
    %1054 = vmatprep.subr.bf16.mxu0 0
    %1055 = vmatpush1.bf16.msra.mxu0 0
    %1056 = vmatprep.subr.bf16.mxu0 0
    %1057 = vmatpush1.bf16.msra.mxu0 0
    %1058 = vmatprep.subr.bf16.mxu0 0
    %1059 = vmatpush1.bf16.msra.mxu0 0
    %1060 = vmatprep.subr.bf16.mxu0 0
    %1061 = vmatpush1.bf16.msra.mxu0 0
    %1062 = vmatprep.subr.bf16.mxu0 0
    %1063 = vmatpush1.bf16.msra.mxu0 %v1047
    %1064 = vmatprep.subr.bf16.mxu0 0
    %1065 = vmatpush1.bf16.msra.mxu0 %v1046
    %1066 = vmatprep.subr.bf16.mxu0 0
    %1067 = vmatpush2.bf16.msra.mxu0 0
    %1068 = vmatprep.subr.bf16.mxu0 0
    %1069 = vmatpush2.bf16.msra.mxu0 0
    %1070 = vmatprep.subr.bf16.mxu0 0
    %1071 = vmatpush2.bf16.msra.mxu0 0
    %1072 = vmatprep.subr.bf16.mxu0 0
    %1073 = vmatpush2.bf16.msra.mxu0 0
    %1074 = vmatprep.subr.bf16.mxu0 0
    %1075 = vmatpush2.bf16.msra.mxu0 0
    %1076 = vmatprep.subr.bf16.mxu0 0
    %1077 = vmatpush2.bf16.msra.mxu0 0
    %1078 = vmatprep.subr.bf16.mxu0 0
    %1079 = vmatpush2.bf16.msra.mxu0 0
    %1080 = vmatprep.subr.bf16.mxu0 0
    %1081 = vmatpush2.bf16.msra.mxu0 0
    %1082 = vmatprep.mubr.bf16.mxu0 0
    %1083 = vmatmul.mubr.bf16.gmra.mxu0 %v108
    %v1084 = vpop.f32.mrf.mxu0
    %v1085 = vadd.f32 0.0, %v1084
    %v1086 = vpop.f32.mrf.mxu0
    %v1087 = vpop.f32.mrf.mxu0
    %v1088 = vadd.f32 0.0, %v1087
    %v1089 = vpop.f32.mrf.mxu0
    %1090 = vdwg.mxu0
    %v1091 = vpack.c.bf16 %v1088, %v1085
    %s1092 = scalar_lea.vmem %s3, 32
    %v1093 = vld [vmem:[%s1092] sm:$0xf]
    %v1094 = vld [vmem:[%s1092 + $0x4] sm:$0xf]
    %v1095 = vld [vmem:[%s1092 + $0x8] sm:$0xf]
    %v1096 = vld [vmem:[%s1092 + $0xc] sm:$0xf]
    %v1101 = vunpack.c.l.b16 %v1093
    %v1102 = vunpack.c.l.b16 %v1094
    %v1103 = vunpack.c.l.b16 %v1095
    %v1104 = vunpack.c.l.b16 %v1096
    %v1105 = vpack.c.b16 %v1102, %v1101
    %v1106 = vpack.c.b16 %v1104, %v1103
    %1109 = vmatprep.subr.bf16.mxu0 0
    %1110 = vmatpush1.bf16.msra.mxu0 0
    %1111 = vmatprep.subr.bf16.mxu0 0
    %1112 = vmatpush1.bf16.msra.mxu0 0
    %1113 = vmatprep.subr.bf16.mxu0 0
    %1114 = vmatpush1.bf16.msra.mxu0 0
    %1115 = vmatprep.subr.bf16.mxu0 0
    %1116 = vmatpush1.bf16.msra.mxu0 0
    %1117 = vmatprep.subr.bf16.mxu0 0
    %1118 = vmatpush1.bf16.msra.mxu0 0
    %1119 = vmatprep.subr.bf16.mxu0 0
    %1120 = vmatpush1.bf16.msra.mxu0 0
    %1121 = vmatprep.subr.bf16.mxu0 0
    %1122 = vmatpush1.bf16.msra.mxu0 %v1106
    %1123 = vmatprep.subr.bf16.mxu0 0
    %1124 = vmatpush1.bf16.msra.mxu0 %v1105
    %1125 = vmatprep.subr.bf16.mxu0 0
    %1126 = vmatpush2.bf16.msra.mxu0 0
    %1127 = vmatprep.subr.bf16.mxu0 0
    %1128 = vmatpush2.bf16.msra.mxu0 0
    %1129 = vmatprep.subr.bf16.mxu0 0
    %1130 = vmatpush2.bf16.msra.mxu0 0
    %1131 = vmatprep.subr.bf16.mxu0 0
    %1132 = vmatpush2.bf16.msra.mxu0 0
    %1133 = vmatprep.subr.bf16.mxu0 0
    %1134 = vmatpush2.bf16.msra.mxu0 0
    %1135 = vmatprep.subr.bf16.mxu0 0
    %1136 = vmatpush2.bf16.msra.mxu0 0
    %1137 = vmatprep.subr.bf16.mxu0 0
    %1138 = vmatpush2.bf16.msra.mxu0 0
    %1139 = vmatprep.subr.bf16.mxu0 0
    %1140 = vmatpush2.bf16.msra.mxu0 0
    %1141 = vmatprep.mubr.bf16.mxu0 0
    %1142 = vmatmul.mubr.bf16.gmra.mxu0 %v108
    %v1143 = vpop.f32.mrf.mxu0
    %v1144 = vadd.f32 0.0, %v1143
    %v1145 = vpop.f32.mrf.mxu0
    %v1146 = vpop.f32.mrf.mxu0
    %v1147 = vadd.f32 0.0, %v1146
    %v1148 = vpop.f32.mrf.mxu0
    %1149 = vdwg.mxu0
    %v1150 = vpack.c.bf16 %v1147, %v1144
    %v1152 = vsel %vm268, %v1032, 0
    %v1155 = vsel %vm268, %v1091, 0
    %1157 = vmatprep.subr.bf16.mxu0 0
    %1158 = vmatpush1.bf16.xpose.msra.mxu0 0
    %1159 = vmatprep.subr.bf16.mxu0 0
    %1160 = vmatpush1.bf16.xpose.msra.mxu0 0
    %1161 = vmatprep.subr.bf16.mxu0 0
    %1162 = vmatpush1.bf16.xpose.msra.mxu0 0
    %1163 = vmatprep.subr.bf16.mxu0 0
    %1164 = vmatpush1.bf16.xpose.msra.mxu0 0
    %1165 = vmatprep.subr.bf16.mxu0 0
    %1166 = vmatpush1.bf16.xpose.msra.mxu0 0
    %1167 = vmatprep.subr.bf16.mxu0 0
    %1168 = vmatpush1.bf16.xpose.msra.mxu0 0
    %1169 = vmatprep.subr.bf16.mxu0 0
    %1170 = vmatpush1.bf16.xpose.msra.mxu0 0
    %1171 = vmatprep.subr.bf16.mxu0 0
    %1172 = vmatpush1.bf16.xpose.msra.mxu0 %v1155
    %1173 = vmatprep.subr.bf16.mxu0 0
    %1174 = vmatpush2.bf16.xpose.msra.mxu0 0
    %1175 = vmatprep.subr.bf16.mxu0 0
    %1176 = vmatpush2.bf16.xpose.msra.mxu0 0
    %1177 = vmatprep.subr.bf16.mxu0 0
    %1178 = vmatpush2.bf16.xpose.msra.mxu0 0
    %1179 = vmatprep.subr.bf16.mxu0 0
    %1180 = vmatpush2.bf16.xpose.msra.mxu0 0
    %1181 = vmatprep.subr.bf16.mxu0 0
    %1182 = vmatpush2.bf16.xpose.msra.mxu0 0
    %1183 = vmatprep.subr.bf16.mxu0 0
    %1184 = vmatpush2.bf16.xpose.msra.mxu0 0
    %1185 = vmatprep.subr.bf16.mxu0 0
    %1186 = vmatpush2.bf16.xpose.msra.mxu0 0
    %1187 = vmatprep.subr.bf16.mxu0 0
    %1188 = vmatpush2.bf16.xpose.msra.mxu0 0
    %1189 = vmatprep.mubr.bf16.mxu0 0
    %1190 = vmatmul.mubr.bf16.gmra.mxu0 %v1152
    %v1191 = vpop.f32.mrf.mxu0
    %v1192 = vadd.f32 %v47, %v1191
    %v1193 = vpop.f32.mrf.mxu0
    %v1194 = vpop.f32.mrf.mxu0
    %v1195 = vpop.f32.mrf.mxu0
    %1196 = vdwg.mxu0
    %v1197 = vsel %vm268, %v1192, -inf
    %1198 = vmax.xlane.f32.xlu0 %v1197
    %v1199 = vpop.xlane.xlu0 %1198
    %v1200 = vsub.f32 %v1192, %v1199
    %v1201 = vmul.f32 %v1200, 1.442695
    %v1202 = vpow.pop %v1201
    %v1203 = vsel %vm268, %v1202, 0.0
    %1204 = vadd.xlane.f32.xlu0 %v1203
    %v1205 = vpop.xlane.xlu0 %1204
    %v1206 = vrcp.pop %v1205
    %v1207 = vmul.f32 %v1202, %v1206
    %v1208 = vpack.c.bf16 %v1207, %v1207
    %v1210 = vsel %vm268, %v1208, 0
    %v1213 = vsel %vm330, %v1150, 0
    %1215 = vmatprep.subr.bf16.mxu0 0
    %1216 = vmatpush1.bf16.msra.mxu0 0
    %1217 = vmatprep.subr.bf16.mxu0 0
    %1218 = vmatpush1.bf16.msra.mxu0 0
    %1219 = vmatprep.subr.bf16.mxu0 0
    %1220 = vmatpush1.bf16.msra.mxu0 0
    %1221 = vmatprep.subr.bf16.mxu0 0
    %1222 = vmatpush1.bf16.msra.mxu0 0
    %1223 = vmatprep.subr.bf16.mxu0 0
    %1224 = vmatpush1.bf16.msra.mxu0 0
    %1225 = vmatprep.subr.bf16.mxu0 0
    %1226 = vmatpush1.bf16.msra.mxu0 0
    %1227 = vmatprep.subr.bf16.mxu0 0
    %1228 = vmatpush1.bf16.msra.mxu0 0
    %1229 = vmatprep.subr.bf16.mxu0 0
    %1230 = vmatpush1.bf16.msra.mxu0 %v1213
    %1231 = vmatprep.subr.bf16.mxu0 0
    %1232 = vmatpush2.bf16.msra.mxu0 0
    %1233 = vmatprep.subr.bf16.mxu0 0
    %1234 = vmatpush2.bf16.msra.mxu0 0
    %1235 = vmatprep.subr.bf16.mxu0 0
    %1236 = vmatpush2.bf16.msra.mxu0 0
    %1237 = vmatprep.subr.bf16.mxu0 0
    %1238 = vmatpush2.bf16.msra.mxu0 0
    %1239 = vmatprep.subr.bf16.mxu0 0
    %1240 = vmatpush2.bf16.msra.mxu0 0
    %1241 = vmatprep.subr.bf16.mxu0 0
    %1242 = vmatpush2.bf16.msra.mxu0 0
    %1243 = vmatprep.subr.bf16.mxu0 0
    %1244 = vmatpush2.bf16.msra.mxu0 0
    %1245 = vmatprep.subr.bf16.mxu0 0
    %1246 = vmatpush2.bf16.msra.mxu0 0
    %1247 = vmatprep.mubr.bf16.mxu0 0
    %1248 = vmatmul.mubr.bf16.gmra.mxu0 %v1210
    %v1249 = vpop.f32.mrf.mxu0
    %v1250 = vadd.f32 0.0, %v1249
    %v1251 = vpop.f32.mrf.mxu0
    %v1252 = vpop.f32.mrf.mxu0
    %v1253 = vpop.f32.mrf.mxu0
    %1254 = vdwg.mxu0
    %v1256 = vrot.slane %v1032, 4
    %v1258 = vrot.slane %v1091, 4
    %v1260 = vsel %vm268, %v1256, 0
    %v1263 = vsel %vm268, %v1258, 0
    %1265 = vmatprep.subr.bf16.mxu0 0
    %1266 = vmatpush1.bf16.xpose.msra.mxu0 0
    %1267 = vmatprep.subr.bf16.mxu0 0
    %1268 = vmatpush1.bf16.xpose.msra.mxu0 0
    %1269 = vmatprep.subr.bf16.mxu0 0
    %1270 = vmatpush1.bf16.xpose.msra.mxu0 0
    %1271 = vmatprep.subr.bf16.mxu0 0
    %1272 = vmatpush1.bf16.xpose.msra.mxu0 0
    %1273 = vmatprep.subr.bf16.mxu0 0
    %1274 = vmatpush1.bf16.xpose.msra.mxu0 0
    %1275 = vmatprep.subr.bf16.mxu0 0
    %1276 = vmatpush1.bf16.xpose.msra.mxu0 0
    %1277 = vmatprep.subr.bf16.mxu0 0
    %1278 = vmatpush1.bf16.xpose.msra.mxu0 0
    %1279 = vmatprep.subr.bf16.mxu0 0
    %1280 = vmatpush1.bf16.xpose.msra.mxu0 %v1263
    %1281 = vmatprep.subr.bf16.mxu0 0
    %1282 = vmatpush2.bf16.xpose.msra.mxu0 0
    %1283 = vmatprep.subr.bf16.mxu0 0
    %1284 = vmatpush2.bf16.xpose.msra.mxu0 0
    %1285 = vmatprep.subr.bf16.mxu0 0
    %1286 = vmatpush2.bf16.xpose.msra.mxu0 0
    %1287 = vmatprep.subr.bf16.mxu0 0
    %1288 = vmatpush2.bf16.xpose.msra.mxu0 0
    %1289 = vmatprep.subr.bf16.mxu0 0
    %1290 = vmatpush2.bf16.xpose.msra.mxu0 0
    %1291 = vmatprep.subr.bf16.mxu0 0
    %1292 = vmatpush2.bf16.xpose.msra.mxu0 0
    %1293 = vmatprep.subr.bf16.mxu0 0
    %1294 = vmatpush2.bf16.xpose.msra.mxu0 0
    %1295 = vmatprep.subr.bf16.mxu0 0
    %1296 = vmatpush2.bf16.xpose.msra.mxu0 0
    %1297 = vmatprep.mubr.bf16.mxu0 0
    %1298 = vmatmul.mubr.bf16.gmra.mxu0 %v1260
    %v1299 = vpop.f32.mrf.mxu0
    %v1300 = vadd.f32 %v47, %v1299
    %v1301 = vpop.f32.mrf.mxu0
    %v1302 = vpop.f32.mrf.mxu0
    %v1303 = vpop.f32.mrf.mxu0
    %1304 = vdwg.mxu0
    %v1305 = vsel %vm268, %v1300, -inf
    %1306 = vmax.xlane.f32.xlu0 %v1305
    %v1307 = vpop.xlane.xlu0 %1306
    %v1308 = vsub.f32 %v1300, %v1307
    %v1309 = vmul.f32 %v1308, 1.442695
    %v1310 = vpow.pop %v1309
    %v1311 = vsel %vm268, %v1310, 0.0
    %1312 = vadd.xlane.f32.xlu0 %v1311
    %v1313 = vpop.xlane.xlu0 %1312
    %v1314 = vrcp.pop %v1313
    %v1315 = vmul.f32 %v1310, %v1314
    %v1316 = vpack.c.bf16 %v1315, %v1315
    %v1318 = vrot.slane %v1150, 4
    %v1320 = vsel %vm268, %v1316, 0
    %v1323 = vsel %vm330, %v1318, 0
    %1325 = vmatprep.subr.bf16.mxu0 0
    %1326 = vmatpush1.bf16.msra.mxu0 0
    %1327 = vmatprep.subr.bf16.mxu0 0
    %1328 = vmatpush1.bf16.msra.mxu0 0
    %1329 = vmatprep.subr.bf16.mxu0 0
    %1330 = vmatpush1.bf16.msra.mxu0 0
    %1331 = vmatprep.subr.bf16.mxu0 0
    %1332 = vmatpush1.bf16.msra.mxu0 0
    %1333 = vmatprep.subr.bf16.mxu0 0
    %1334 = vmatpush1.bf16.msra.mxu0 0
    %1335 = vmatprep.subr.bf16.mxu0 0
    %1336 = vmatpush1.bf16.msra.mxu0 0
    %1337 = vmatprep.subr.bf16.mxu0 0
    %1338 = vmatpush1.bf16.msra.mxu0 0
    %1339 = vmatprep.subr.bf16.mxu0 0
    %1340 = vmatpush1.bf16.msra.mxu0 %v1323
    %1341 = vmatprep.subr.bf16.mxu0 0
    %1342 = vmatpush2.bf16.msra.mxu0 0
    %1343 = vmatprep.subr.bf16.mxu0 0
    %1344 = vmatpush2.bf16.msra.mxu0 0
    %1345 = vmatprep.subr.bf16.mxu0 0
    %1346 = vmatpush2.bf16.msra.mxu0 0
    %1347 = vmatprep.subr.bf16.mxu0 0
    %1348 = vmatpush2.bf16.msra.mxu0 0
    %1349 = vmatprep.subr.bf16.mxu0 0
    %1350 = vmatpush2.bf16.msra.mxu0 0
    %1351 = vmatprep.subr.bf16.mxu0 0
    %1352 = vmatpush2.bf16.msra.mxu0 0
    %1353 = vmatprep.subr.bf16.mxu0 0
    %1354 = vmatpush2.bf16.msra.mxu0 0
    %1355 = vmatprep.subr.bf16.mxu0 0
    %1356 = vmatpush2.bf16.msra.mxu0 0
    %1357 = vmatprep.mubr.bf16.mxu0 0
    %1358 = vmatmul.mubr.bf16.gmra.mxu0 %v1320
    %v1359 = vpop.f32.mrf.mxu0
    %v1360 = vadd.f32 0.0, %v1359
    %v1361 = vpop.f32.mrf.mxu0
    %v1362 = vpop.f32.mrf.mxu0
    %v1363 = vpop.f32.mrf.mxu0
    %1364 = vdwg.mxu0
    %v1365 = vpack.c.bf16 %v1360, %v1250
    %s1366 = scalar_lea.vmem %s4, 8
    %v1367 = vld [vmem:[%s1366] sm:$0xf]
    %v1369 = vsel %vm268, %v1365, 0
    %v1372 = vsel %vm330, %v1367, 0
    %1374 = vmatprep.subr.bf16.mxu0 0
    %1375 = vmatpush1.bf16.msra.mxu0 0
    %1376 = vmatprep.subr.bf16.mxu0 0
    %1377 = vmatpush1.bf16.msra.mxu0 0
    %1378 = vmatprep.subr.bf16.mxu0 0
    %1379 = vmatpush1.bf16.msra.mxu0 0
    %1380 = vmatprep.subr.bf16.mxu0 0
    %1381 = vmatpush1.bf16.msra.mxu0 0
    %1382 = vmatprep.subr.bf16.mxu0 0
    %1383 = vmatpush1.bf16.msra.mxu0 0
    %1384 = vmatprep.subr.bf16.mxu0 0
    %1385 = vmatpush1.bf16.msra.mxu0 0
    %1386 = vmatprep.subr.bf16.mxu0 0
    %1387 = vmatpush1.bf16.msra.mxu0 0
    %1388 = vmatprep.subr.bf16.mxu0 0
    %1389 = vmatpush1.bf16.msra.mxu0 %v1372
    %1390 = vmatprep.subr.bf16.mxu0 0
    %1391 = vmatpush2.bf16.msra.mxu0 0
    %1392 = vmatprep.subr.bf16.mxu0 0
    %1393 = vmatpush2.bf16.msra.mxu0 0
    %1394 = vmatprep.subr.bf16.mxu0 0
    %1395 = vmatpush2.bf16.msra.mxu0 0
    %1396 = vmatprep.subr.bf16.mxu0 0
    %1397 = vmatpush2.bf16.msra.mxu0 0
    %1398 = vmatprep.subr.bf16.mxu0 0
    %1399 = vmatpush2.bf16.msra.mxu0 0
    %1400 = vmatprep.subr.bf16.mxu0 0
    %1401 = vmatpush2.bf16.msra.mxu0 0
    %1402 = vmatprep.subr.bf16.mxu0 0
    %1403 = vmatpush2.bf16.msra.mxu0 0
    %1404 = vmatprep.subr.bf16.mxu0 0
    %1405 = vmatpush2.bf16.msra.mxu0 0
    %1406 = vmatprep.mubr.bf16.mxu0 0
    %1407 = vmatmul.mubr.bf16.gmra.mxu0 %v1369
    %v1408 = vpop.f32.mrf.mxu0
    %v1409 = vadd.f32 0.0, %v1408
    %v1410 = vpop.f32.mrf.mxu0
    %v1411 = vpop.f32.mrf.mxu0
    %v1412 = vadd.f32 0.0, %v1411
    %v1413 = vpop.f32.mrf.mxu0
    %1414 = vdwg.mxu0
    %v1415 = vadd.f32 %v968, %v1409
    %v1416 = vadd.f32 %v971, %v1412
    %s1417 = scalar_lea.vmem %s1, 48
    %v1418 = vld [vmem:[%s1417] sm:$0xf]
    %v1419 = vld [vmem:[%s1417 + $0x4] sm:$0xf]
    %v1420 = vld [vmem:[%s1417 + $0x8] sm:$0xf]
    %v1421 = vld [vmem:[%s1417 + $0xc] sm:$0xf]
    %v1426 = vunpack.c.l.b16 %v1418
    %v1427 = vunpack.c.l.b16 %v1419
    %v1428 = vunpack.c.l.b16 %v1420
    %v1429 = vunpack.c.l.b16 %v1421
    %v1430 = vpack.c.b16 %v1427, %v1426
    %v1431 = vpack.c.b16 %v1429, %v1428
    %1434 = vmatprep.subr.bf16.mxu0 0
    %1435 = vmatpush1.bf16.msra.mxu0 0
    %1436 = vmatprep.subr.bf16.mxu0 0
    %1437 = vmatpush1.bf16.msra.mxu0 0
    %1438 = vmatprep.subr.bf16.mxu0 0
    %1439 = vmatpush1.bf16.msra.mxu0 0
    %1440 = vmatprep.subr.bf16.mxu0 0
    %1441 = vmatpush1.bf16.msra.mxu0 0
    %1442 = vmatprep.subr.bf16.mxu0 0
    %1443 = vmatpush1.bf16.msra.mxu0 0
    %1444 = vmatprep.subr.bf16.mxu0 0
    %1445 = vmatpush1.bf16.msra.mxu0 0
    %1446 = vmatprep.subr.bf16.mxu0 0
    %1447 = vmatpush1.bf16.msra.mxu0 %v1431
    %1448 = vmatprep.subr.bf16.mxu0 0
    %1449 = vmatpush1.bf16.msra.mxu0 %v1430
    %1450 = vmatprep.subr.bf16.mxu0 0
    %1451 = vmatpush2.bf16.msra.mxu0 0
    %1452 = vmatprep.subr.bf16.mxu0 0
    %1453 = vmatpush2.bf16.msra.mxu0 0
    %1454 = vmatprep.subr.bf16.mxu0 0
    %1455 = vmatpush2.bf16.msra.mxu0 0
    %1456 = vmatprep.subr.bf16.mxu0 0
    %1457 = vmatpush2.bf16.msra.mxu0 0
    %1458 = vmatprep.subr.bf16.mxu0 0
    %1459 = vmatpush2.bf16.msra.mxu0 0
    %1460 = vmatprep.subr.bf16.mxu0 0
    %1461 = vmatpush2.bf16.msra.mxu0 0
    %1462 = vmatprep.subr.bf16.mxu0 0
    %1463 = vmatpush2.bf16.msra.mxu0 0
    %1464 = vmatprep.subr.bf16.mxu0 0
    %1465 = vmatpush2.bf16.msra.mxu0 0
    %1466 = vmatprep.mubr.bf16.mxu0 0
    %1467 = vmatmul.mubr.bf16.gmra.mxu0 %v108
    %v1468 = vpop.f32.mrf.mxu0
    %v1469 = vadd.f32 0.0, %v1468
    %v1470 = vpop.f32.mrf.mxu0
    %v1471 = vpop.f32.mrf.mxu0
    %v1472 = vadd.f32 0.0, %v1471
    %v1473 = vpop.f32.mrf.mxu0
    %1474 = vdwg.mxu0
    %v1475 = vpack.c.bf16 %v1472, %v1469
    %s1476 = scalar_lea.vmem %s2, 48
    %v1477 = vld [vmem:[%s1476] sm:$0xf]
    %v1478 = vld [vmem:[%s1476 + $0x4] sm:$0xf]
    %v1479 = vld [vmem:[%s1476 + $0x8] sm:$0xf]
    %v1480 = vld [vmem:[%s1476 + $0xc] sm:$0xf]
    %v1485 = vunpack.c.l.b16 %v1477
    %v1486 = vunpack.c.l.b16 %v1478
    %v1487 = vunpack.c.l.b16 %v1479
    %v1488 = vunpack.c.l.b16 %v1480
    %v1489 = vpack.c.b16 %v1486, %v1485
    %v1490 = vpack.c.b16 %v1488, %v1487
    %1493 = vmatprep.subr.bf16.mxu0 0
    %1494 = vmatpush1.bf16.msra.mxu0 0
    %1495 = vmatprep.subr.bf16.mxu0 0
    %1496 = vmatpush1.bf16.msra.mxu0 0
    %1497 = vmatprep.subr.bf16.mxu0 0
    %1498 = vmatpush1.bf16.msra.mxu0 0
    %1499 = vmatprep.subr.bf16.mxu0 0
    %1500 = vmatpush1.bf16.msra.mxu0 0
    %1501 = vmatprep.subr.bf16.mxu0 0
    %1502 = vmatpush1.bf16.msra.mxu0 0
    %1503 = vmatprep.subr.bf16.mxu0 0
    %1504 = vmatpush1.bf16.msra.mxu0 0
    %1505 = vmatprep.subr.bf16.mxu0 0
    %1506 = vmatpush1.bf16.msra.mxu0 %v1490
    %1507 = vmatprep.subr.bf16.mxu0 0
    %1508 = vmatpush1.bf16.msra.mxu0 %v1489
    %1509 = vmatprep.subr.bf16.mxu0 0
    %1510 = vmatpush2.bf16.msra.mxu0 0
    %1511 = vmatprep.subr.bf16.mxu0 0
    %1512 = vmatpush2.bf16.msra.mxu0 0
    %1513 = vmatprep.subr.bf16.mxu0 0
    %1514 = vmatpush2.bf16.msra.mxu0 0
    %1515 = vmatprep.subr.bf16.mxu0 0
    %1516 = vmatpush2.bf16.msra.mxu0 0
    %1517 = vmatprep.subr.bf16.mxu0 0
    %1518 = vmatpush2.bf16.msra.mxu0 0
    %1519 = vmatprep.subr.bf16.mxu0 0
    %1520 = vmatpush2.bf16.msra.mxu0 0
    %1521 = vmatprep.subr.bf16.mxu0 0
    %1522 = vmatpush2.bf16.msra.mxu0 0
    %1523 = vmatprep.subr.bf16.mxu0 0
    %1524 = vmatpush2.bf16.msra.mxu0 0
    %1525 = vmatprep.mubr.bf16.mxu0 0
    %1526 = vmatmul.mubr.bf16.gmra.mxu0 %v108
    %v1527 = vpop.f32.mrf.mxu0
    %v1528 = vadd.f32 0.0, %v1527
    %v1529 = vpop.f32.mrf.mxu0
    %v1530 = vpop.f32.mrf.mxu0
    %v1531 = vadd.f32 0.0, %v1530
    %v1532 = vpop.f32.mrf.mxu0
    %1533 = vdwg.mxu0
    %v1534 = vpack.c.bf16 %v1531, %v1528
    %s1535 = scalar_lea.vmem %s3, 48
    %v1536 = vld [vmem:[%s1535] sm:$0xf]
    %v1537 = vld [vmem:[%s1535 + $0x4] sm:$0xf]
    %v1538 = vld [vmem:[%s1535 + $0x8] sm:$0xf]
    %v1539 = vld [vmem:[%s1535 + $0xc] sm:$0xf]
    %v1544 = vunpack.c.l.b16 %v1536
    %v1545 = vunpack.c.l.b16 %v1537
    %v1546 = vunpack.c.l.b16 %v1538
    %v1547 = vunpack.c.l.b16 %v1539
    %v1548 = vpack.c.b16 %v1545, %v1544
    %v1549 = vpack.c.b16 %v1547, %v1546
    %1552 = vmatprep.subr.bf16.mxu0 0
    %1553 = vmatpush1.bf16.msra.mxu0 0
    %1554 = vmatprep.subr.bf16.mxu0 0
    %1555 = vmatpush1.bf16.msra.mxu0 0
    %1556 = vmatprep.subr.bf16.mxu0 0
    %1557 = vmatpush1.bf16.msra.mxu0 0
    %1558 = vmatprep.subr.bf16.mxu0 0
    %1559 = vmatpush1.bf16.msra.mxu0 0
    %1560 = vmatprep.subr.bf16.mxu0 0
    %1561 = vmatpush1.bf16.msra.mxu0 0
    %1562 = vmatprep.subr.bf16.mxu0 0
    %1563 = vmatpush1.bf16.msra.mxu0 0
    %1564 = vmatprep.subr.bf16.mxu0 0
    %1565 = vmatpush1.bf16.msra.mxu0 %v1549
    %1566 = vmatprep.subr.bf16.mxu0 0
    %1567 = vmatpush1.bf16.msra.mxu0 %v1548
    %1568 = vmatprep.subr.bf16.mxu0 0
    %1569 = vmatpush2.bf16.msra.mxu0 0
    %1570 = vmatprep.subr.bf16.mxu0 0
    %1571 = vmatpush2.bf16.msra.mxu0 0
    %1572 = vmatprep.subr.bf16.mxu0 0
    %1573 = vmatpush2.bf16.msra.mxu0 0
    %1574 = vmatprep.subr.bf16.mxu0 0
    %1575 = vmatpush2.bf16.msra.mxu0 0
    %1576 = vmatprep.subr.bf16.mxu0 0
    %1577 = vmatpush2.bf16.msra.mxu0 0
    %1578 = vmatprep.subr.bf16.mxu0 0
    %1579 = vmatpush2.bf16.msra.mxu0 0
    %1580 = vmatprep.subr.bf16.mxu0 0
    %1581 = vmatpush2.bf16.msra.mxu0 0
    %1582 = vmatprep.subr.bf16.mxu0 0
    %1583 = vmatpush2.bf16.msra.mxu0 0
    %1584 = vmatprep.mubr.bf16.mxu0 0
    %1585 = vmatmul.mubr.bf16.gmra.mxu0 %v108
    %v1586 = vpop.f32.mrf.mxu0
    %v1587 = vadd.f32 0.0, %v1586
    %v1588 = vpop.f32.mrf.mxu0
    %v1589 = vpop.f32.mrf.mxu0
    %v1590 = vadd.f32 0.0, %v1589
    %v1591 = vpop.f32.mrf.mxu0
    %1592 = vdwg.mxu0
    %v1593 = vpack.c.bf16 %v1590, %v1587
    %v1595 = vsel %vm268, %v1475, 0
    %v1598 = vsel %vm268, %v1534, 0
    %1600 = vmatprep.subr.bf16.mxu0 0
    %1601 = vmatpush1.bf16.xpose.msra.mxu0 0
    %1602 = vmatprep.subr.bf16.mxu0 0
    %1603 = vmatpush1.bf16.xpose.msra.mxu0 0
    %1604 = vmatprep.subr.bf16.mxu0 0
    %1605 = vmatpush1.bf16.xpose.msra.mxu0 0
    %1606 = vmatprep.subr.bf16.mxu0 0
    %1607 = vmatpush1.bf16.xpose.msra.mxu0 0
    %1608 = vmatprep.subr.bf16.mxu0 0
    %1609 = vmatpush1.bf16.xpose.msra.mxu0 0
    %1610 = vmatprep.subr.bf16.mxu0 0
    %1611 = vmatpush1.bf16.xpose.msra.mxu0 0
    %1612 = vmatprep.subr.bf16.mxu0 0
    %1613 = vmatpush1.bf16.xpose.msra.mxu0 0
    %1614 = vmatprep.subr.bf16.mxu0 0
    %1615 = vmatpush1.bf16.xpose.msra.mxu0 %v1598
    %1616 = vmatprep.subr.bf16.mxu0 0
    %1617 = vmatpush2.bf16.xpose.msra.mxu0 0
    %1618 = vmatprep.subr.bf16.mxu0 0
    %1619 = vmatpush2.bf16.xpose.msra.mxu0 0
    %1620 = vmatprep.subr.bf16.mxu0 0
    %1621 = vmatpush2.bf16.xpose.msra.mxu0 0
    %1622 = vmatprep.subr.bf16.mxu0 0
    %1623 = vmatpush2.bf16.xpose.msra.mxu0 0
    %1624 = vmatprep.subr.bf16.mxu0 0
    %1625 = vmatpush2.bf16.xpose.msra.mxu0 0
    %1626 = vmatprep.subr.bf16.mxu0 0
    %1627 = vmatpush2.bf16.xpose.msra.mxu0 0
    %1628 = vmatprep.subr.bf16.mxu0 0
    %1629 = vmatpush2.bf16.xpose.msra.mxu0 0
    %1630 = vmatprep.subr.bf16.mxu0 0
    %1631 = vmatpush2.bf16.xpose.msra.mxu0 0
    %1632 = vmatprep.mubr.bf16.mxu0 0
    %1633 = vmatmul.mubr.bf16.gmra.mxu0 %v1595
    %v1634 = vpop.f32.mrf.mxu0
    %v1635 = vadd.f32 %v47, %v1634
    %v1636 = vpop.f32.mrf.mxu0
    %v1637 = vpop.f32.mrf.mxu0
    %v1638 = vpop.f32.mrf.mxu0
    %1639 = vdwg.mxu0
    %v1640 = vsel %vm268, %v1635, -inf
    %1641 = vmax.xlane.f32.xlu0 %v1640
    %v1642 = vpop.xlane.xlu0 %1641
    %v1643 = vsub.f32 %v1635, %v1642
    %v1644 = vmul.f32 %v1643, 1.442695
    %v1645 = vpow.pop %v1644
    %v1646 = vsel %vm268, %v1645, 0.0
    %1647 = vadd.xlane.f32.xlu0 %v1646
    %v1648 = vpop.xlane.xlu0 %1647
    %v1649 = vrcp.pop %v1648
    %v1650 = vmul.f32 %v1645, %v1649
    %v1651 = vpack.c.bf16 %v1650, %v1650
    %v1653 = vsel %vm268, %v1651, 0
    %v1656 = vsel %vm330, %v1593, 0
    %1658 = vmatprep.subr.bf16.mxu0 0
    %1659 = vmatpush1.bf16.msra.mxu0 0
    %1660 = vmatprep.subr.bf16.mxu0 0
    %1661 = vmatpush1.bf16.msra.mxu0 0
    %1662 = vmatprep.subr.bf16.mxu0 0
    %1663 = vmatpush1.bf16.msra.mxu0 0
    %1664 = vmatprep.subr.bf16.mxu0 0
    %1665 = vmatpush1.bf16.msra.mxu0 0
    %1666 = vmatprep.subr.bf16.mxu0 0
    %1667 = vmatpush1.bf16.msra.mxu0 0
    %1668 = vmatprep.subr.bf16.mxu0 0
    %1669 = vmatpush1.bf16.msra.mxu0 0
    %1670 = vmatprep.subr.bf16.mxu0 0
    %1671 = vmatpush1.bf16.msra.mxu0 0
    %1672 = vmatprep.subr.bf16.mxu0 0
    %1673 = vmatpush1.bf16.msra.mxu0 %v1656
    %1674 = vmatprep.subr.bf16.mxu0 0
    %1675 = vmatpush2.bf16.msra.mxu0 0
    %1676 = vmatprep.subr.bf16.mxu0 0
    %1677 = vmatpush2.bf16.msra.mxu0 0
    %1678 = vmatprep.subr.bf16.mxu0 0
    %1679 = vmatpush2.bf16.msra.mxu0 0
    %1680 = vmatprep.subr.bf16.mxu0 0
    %1681 = vmatpush2.bf16.msra.mxu0 0
    %1682 = vmatprep.subr.bf16.mxu0 0
    %1683 = vmatpush2.bf16.msra.mxu0 0
    %1684 = vmatprep.subr.bf16.mxu0 0
    %1685 = vmatpush2.bf16.msra.mxu0 0
    %1686 = vmatprep.subr.bf16.mxu0 0
    %1687 = vmatpush2.bf16.msra.mxu0 0
    %1688 = vmatprep.subr.bf16.mxu0 0
    %1689 = vmatpush2.bf16.msra.mxu0 0
    %1690 = vmatprep.mubr.bf16.mxu0 0
    %1691 = vmatmul.mubr.bf16.gmra.mxu0 %v1653
    %v1692 = vpop.f32.mrf.mxu0
    %v1693 = vadd.f32 0.0, %v1692
    %v1694 = vpop.f32.mrf.mxu0
    %v1695 = vpop.f32.mrf.mxu0
    %v1696 = vpop.f32.mrf.mxu0
    %1697 = vdwg.mxu0
    %v1699 = vrot.slane %v1475, 4
    %v1701 = vrot.slane %v1534, 4
    %v1703 = vsel %vm268, %v1699, 0
    %v1706 = vsel %vm268, %v1701, 0
    %1708 = vmatprep.subr.bf16.mxu0 0
    %1709 = vmatpush1.bf16.xpose.msra.mxu0 0
    %1710 = vmatprep.subr.bf16.mxu0 0
    %1711 = vmatpush1.bf16.xpose.msra.mxu0 0
    %1712 = vmatprep.subr.bf16.mxu0 0
    %1713 = vmatpush1.bf16.xpose.msra.mxu0 0
    %1714 = vmatprep.subr.bf16.mxu0 0
    %1715 = vmatpush1.bf16.xpose.msra.mxu0 0
    %1716 = vmatprep.subr.bf16.mxu0 0
    %1717 = vmatpush1.bf16.xpose.msra.mxu0 0
    %1718 = vmatprep.subr.bf16.mxu0 0
    %1719 = vmatpush1.bf16.xpose.msra.mxu0 0
    %1720 = vmatprep.subr.bf16.mxu0 0
    %1721 = vmatpush1.bf16.xpose.msra.mxu0 0
    %1722 = vmatprep.subr.bf16.mxu0 0
    %1723 = vmatpush1.bf16.xpose.msra.mxu0 %v1706
    %1724 = vmatprep.subr.bf16.mxu0 0
    %1725 = vmatpush2.bf16.xpose.msra.mxu0 0
    %1726 = vmatprep.subr.bf16.mxu0 0
    %1727 = vmatpush2.bf16.xpose.msra.mxu0 0
    %1728 = vmatprep.subr.bf16.mxu0 0
    %1729 = vmatpush2.bf16.xpose.msra.mxu0 0
    %1730 = vmatprep.subr.bf16.mxu0 0
    %1731 = vmatpush2.bf16.xpose.msra.mxu0 0
    %1732 = vmatprep.subr.bf16.mxu0 0
    %1733 = vmatpush2.bf16.xpose.msra.mxu0 0
    %1734 = vmatprep.subr.bf16.mxu0 0
    %1735 = vmatpush2.bf16.xpose.msra.mxu0 0
    %1736 = vmatprep.subr.bf16.mxu0 0
    %1737 = vmatpush2.bf16.xpose.msra.mxu0 0
    %1738 = vmatprep.subr.bf16.mxu0 0
    %1739 = vmatpush2.bf16.xpose.msra.mxu0 0
    %1740 = vmatprep.mubr.bf16.mxu0 0
    %1741 = vmatmul.mubr.bf16.gmra.mxu0 %v1703
    %v1742 = vpop.f32.mrf.mxu0
    %v1743 = vadd.f32 %v47, %v1742
    %v1744 = vpop.f32.mrf.mxu0
    %v1745 = vpop.f32.mrf.mxu0
    %v1746 = vpop.f32.mrf.mxu0
    %1747 = vdwg.mxu0
    %v1748 = vsel %vm268, %v1743, -inf
    %1749 = vmax.xlane.f32.xlu0 %v1748
    %v1750 = vpop.xlane.xlu0 %1749
    %v1751 = vsub.f32 %v1743, %v1750
    %v1752 = vmul.f32 %v1751, 1.442695
    %v1753 = vpow.pop %v1752
    %v1754 = vsel %vm268, %v1753, 0.0
    %1755 = vadd.xlane.f32.xlu0 %v1754
    %v1756 = vpop.xlane.xlu0 %1755
    %v1757 = vrcp.pop %v1756
    %v1758 = vmul.f32 %v1753, %v1757
    %v1759 = vpack.c.bf16 %v1758, %v1758
    %v1761 = vrot.slane %v1593, 4
    %v1763 = vsel %vm268, %v1759, 0
    %v1766 = vsel %vm330, %v1761, 0
    %1768 = vmatprep.subr.bf16.mxu0 0
    %1769 = vmatpush1.bf16.msra.mxu0 0
    %1770 = vmatprep.subr.bf16.mxu0 0
    %1771 = vmatpush1.bf16.msra.mxu0 0
    %1772 = vmatprep.subr.bf16.mxu0 0
    %1773 = vmatpush1.bf16.msra.mxu0 0
    %1774 = vmatprep.subr.bf16.mxu0 0
    %1775 = vmatpush1.bf16.msra.mxu0 0
    %1776 = vmatprep.subr.bf16.mxu0 0
    %1777 = vmatpush1.bf16.msra.mxu0 0
    %1778 = vmatprep.subr.bf16.mxu0 0
    %1779 = vmatpush1.bf16.msra.mxu0 0
    %1780 = vmatprep.subr.bf16.mxu0 0
    %1781 = vmatpush1.bf16.msra.mxu0 0
    %1782 = vmatprep.subr.bf16.mxu0 0
    %1783 = vmatpush1.bf16.msra.mxu0 %v1766
    %1784 = vmatprep.subr.bf16.mxu0 0
    %1785 = vmatpush2.bf16.msra.mxu0 0
    %1786 = vmatprep.subr.bf16.mxu0 0
    %1787 = vmatpush2.bf16.msra.mxu0 0
    %1788 = vmatprep.subr.bf16.mxu0 0
    %1789 = vmatpush2.bf16.msra.mxu0 0
    %1790 = vmatprep.subr.bf16.mxu0 0
    %1791 = vmatpush2.bf16.msra.mxu0 0
    %1792 = vmatprep.subr.bf16.mxu0 0
    %1793 = vmatpush2.bf16.msra.mxu0 0
    %1794 = vmatprep.subr.bf16.mxu0 0
    %1795 = vmatpush2.bf16.msra.mxu0 0
    %1796 = vmatprep.subr.bf16.mxu0 0
    %1797 = vmatpush2.bf16.msra.mxu0 0
    %1798 = vmatprep.subr.bf16.mxu0 0
    %1799 = vmatpush2.bf16.msra.mxu0 0
    %1800 = vmatprep.mubr.bf16.mxu0 0
    %1801 = vmatmul.mubr.bf16.gmra.mxu0 %v1763
    %v1802 = vpop.f32.mrf.mxu0
    %v1803 = vadd.f32 0.0, %v1802
    %v1804 = vpop.f32.mrf.mxu0
    %v1805 = vpop.f32.mrf.mxu0
    %v1806 = vpop.f32.mrf.mxu0
    %1807 = vdwg.mxu0
    %v1808 = vpack.c.bf16 %v1803, %v1693
    %s1809 = scalar_lea.vmem %s4, 12
    %v1810 = vld [vmem:[%s1809] sm:$0xf]
    %v1812 = vsel %vm268, %v1808, 0
    %v1815 = vsel %vm330, %v1810, 0
    %1817 = vmatprep.subr.bf16.mxu0 0
    %1818 = vmatpush1.bf16.msra.mxu0 0
    %1819 = vmatprep.subr.bf16.mxu0 0
    %1820 = vmatpush1.bf16.msra.mxu0 0
    %1821 = vmatprep.subr.bf16.mxu0 0
    %1822 = vmatpush1.bf16.msra.mxu0 0
    %1823 = vmatprep.subr.bf16.mxu0 0
    %1824 = vmatpush1.bf16.msra.mxu0 0
    %1825 = vmatprep.subr.bf16.mxu0 0
    %1826 = vmatpush1.bf16.msra.mxu0 0
    %1827 = vmatprep.subr.bf16.mxu0 0
    %1828 = vmatpush1.bf16.msra.mxu0 0
    %1829 = vmatprep.subr.bf16.mxu0 0
    %1830 = vmatpush1.bf16.msra.mxu0 0
    %1831 = vmatprep.subr.bf16.mxu0 0
    %1832 = vmatpush1.bf16.msra.mxu0 %v1815
    %1833 = vmatprep.subr.bf16.mxu0 0
    %1834 = vmatpush2.bf16.msra.mxu0 0
    %1835 = vmatprep.subr.bf16.mxu0 0
    %1836 = vmatpush2.bf16.msra.mxu0 0
    %1837 = vmatprep.subr.bf16.mxu0 0
    %1838 = vmatpush2.bf16.msra.mxu0 0
    %1839 = vmatprep.subr.bf16.mxu0 0
    %1840 = vmatpush2.bf16.msra.mxu0 0
    %1841 = vmatprep.subr.bf16.mxu0 0
    %1842 = vmatpush2.bf16.msra.mxu0 0
    %1843 = vmatprep.subr.bf16.mxu0 0
    %1844 = vmatpush2.bf16.msra.mxu0 0
    %1845 = vmatprep.subr.bf16.mxu0 0
    %1846 = vmatpush2.bf16.msra.mxu0 0
    %1847 = vmatprep.subr.bf16.mxu0 0
    %1848 = vmatpush2.bf16.msra.mxu0 0
    %1849 = vmatprep.mubr.bf16.mxu0 0
    %1850 = vmatmul.mubr.bf16.gmra.mxu0 %v1812
    %v1851 = vpop.f32.mrf.mxu0
    %v1852 = vadd.f32 0.0, %v1851
    %v1853 = vpop.f32.mrf.mxu0
    %v1854 = vpop.f32.mrf.mxu0
    %v1855 = vadd.f32 0.0, %v1854
    %v1856 = vpop.f32.mrf.mxu0
    %1857 = vdwg.mxu0
    %v1858 = vadd.f32 %v1415, %v1852
    %v1859 = vadd.f32 %v1416, %v1855
    %v1860 = vlaneseq
    %v1861 = vshrl.u32 %v1860, 7
    %v1862 = vsub.s32 4, %v1861
    %v1863 = vrot.slane %v48, %v1862
    %v1864 = vadd.f32 %v1858, %v1863
    %v1865 = vadd.f32 %v1859, %v1863
    %v1866 = vadd.f32 %v1864, %v40
    %v1867 = vadd.f32 %v1865, %v41
    %v1868 = vsel %vm50, %v1866, 0.0
    %1869 = vadd.xlane.f32.xlu0 %v1868
    %v1870 = vpop.xlane.xlu0 %1869
    %v1871 = vsel %vm50, %v1867, 0.0
    %1872 = vadd.xlane.f32.xlu0 %v1871
    %v1873 = vpop.xlane.xlu0 %1872
    %v1874 = vmul.f32 %v1870, %v57
    %v1875 = vmul.f32 %v1873, %v57
    %v1876 = vsub.f32 %v1866, %v1874
    %v1877 = vsub.f32 %v1867, %v1875
    %v1878 = vmul.f32 %v1876, %v1876
    %v1879 = vmul.f32 %v1877, %v1877
    %v1880 = vsel %vm50, %v1878, 0.0
    %1881 = vadd.xlane.f32.xlu0 %v1880
    %v1882 = vpop.xlane.xlu0 %1881
    %v1883 = vsel %vm50, %v1879, 0.0
    %1884 = vadd.xlane.f32.xlu0 %v1883
    %v1885 = vpop.xlane.xlu0 %1884
    %v1886 = vmul.f32 %v1882, %v57
    %v1887 = vmul.f32 %v1885, %v57
    %v1888 = vadd.f32 %v1886, 1e-05
    %v1889 = vadd.f32 %v1887, 1e-05
    %v1890 = vrsqrt.pop %v1888
    %v1891 = vrsqrt.pop %v1889
    %v1892 = vmul.f32 %v1876, %v1890
    %v1893 = vmul.f32 %v1877, %v1891
    %v1894 = vlaneseq
    %v1895 = vshrl.u32 %v1894, 7
    %v1896 = vsub.s32 2, %v1895
    %v1897 = vrot.slane %v48, %v1896
    %v1898 = vmul.f32 %v1897, %v1892
    %v1899 = vmul.f32 %v1897, %v1893
    %v1900 = vlaneseq
    %v1901 = vshrl.u32 %v1900, 7
    %v1902 = vsub.s32 3, %v1901
    %v1903 = vrot.slane %v48, %v1902
    %v1904 = vadd.f32 %v1898, %v1903
    %v1905 = vadd.f32 %v1899, %v1903
    %v1906 = vpack.c.bf16 %v1905, %v1904
    %v1907 = vld [vmem:[%s5] sm:$0xf]
    %v1908 = vld [vmem:[%s5 + $0x4] sm:$0xf]
    %v1909 = vld [vmem:[%s5 + $0x8] sm:$0xf]
    %v1910 = vld [vmem:[%s5 + $0xc] sm:$0xf]
    %v1912 = vlaneseq
    %v1913 = vshrl.u32 %v1912, 7
    %v1914 = vsub.s32 0, %v1913
    %v1915 = vrot.slane %v49, %v1914
    %v1921 = vunpack.c.l.b16 %v1907
    %v1922 = vunpack.c.l.b16 %v1908
    %v1923 = vunpack.c.l.b16 %v1909
    %v1924 = vunpack.c.l.b16 %v1910
    %v1925 = vpack.c.b16 %v1922, %v1921
    %v1926 = vpack.c.b16 %v1924, %v1923
    %v1930 = vsel %vm50, %v1906, 0
    %1932 = vmatprep.subr.bf16.mxu0 0
    %1933 = vmatpush1.bf16.msra.mxu0 0
    %1934 = vmatprep.subr.bf16.mxu0 0
    %1935 = vmatpush1.bf16.msra.mxu0 0
    %1936 = vmatprep.subr.bf16.mxu0 0
    %1937 = vmatpush1.bf16.msra.mxu0 0
    %1938 = vmatprep.subr.bf16.mxu0 0
    %1939 = vmatpush1.bf16.msra.mxu0 0
    %1940 = vmatprep.subr.bf16.mxu0 0
    %1941 = vmatpush1.bf16.msra.mxu0 0
    %1942 = vmatprep.subr.bf16.mxu0 0
    %1943 = vmatpush1.bf16.msra.mxu0 0
    %1944 = vmatprep.subr.bf16.mxu0 0
    %1945 = vmatpush1.bf16.msra.mxu0 %v1926
    %1946 = vmatprep.subr.bf16.mxu0 0
    %1947 = vmatpush1.bf16.msra.mxu0 %v1925
    %1948 = vmatprep.subr.bf16.mxu0 0
    %1949 = vmatpush2.bf16.msra.mxu0 0
    %1950 = vmatprep.subr.bf16.mxu0 0
    %1951 = vmatpush2.bf16.msra.mxu0 0
    %1952 = vmatprep.subr.bf16.mxu0 0
    %1953 = vmatpush2.bf16.msra.mxu0 0
    %1954 = vmatprep.subr.bf16.mxu0 0
    %1955 = vmatpush2.bf16.msra.mxu0 0
    %1956 = vmatprep.subr.bf16.mxu0 0
    %1957 = vmatpush2.bf16.msra.mxu0 0
    %1958 = vmatprep.subr.bf16.mxu0 0
    %1959 = vmatpush2.bf16.msra.mxu0 0
    %1960 = vmatprep.subr.bf16.mxu0 0
    %1961 = vmatpush2.bf16.msra.mxu0 0
    %1962 = vmatprep.subr.bf16.mxu0 0
    %1963 = vmatpush2.bf16.msra.mxu0 0
    %1964 = vmatprep.mubr.bf16.mxu0 0
    %1965 = vmatmul.mubr.bf16.gmra.mxu0 %v1930
    %v1966 = vpop.f32.mrf.mxu0
    %v1967 = vadd.f32 %v1915, %v1966
    %v1968 = vpop.f32.mrf.mxu0
    %v1969 = vpop.f32.mrf.mxu0
    %v1970 = vadd.f32 %v1915, %v1969
    %v1971 = vpop.f32.mrf.mxu0
    %1972 = vdwg.mxu0
    %v1973 = vmul.f32 %v1967, 0.5
    %v1974 = vmul.f32 %v1970, 0.5
    %v1975 = vmul.f32 %v1967, 0.044715
    %v1976 = vmul.f32 %v1970, 0.044715
    %v1977 = vmul.f32 %v1975, %v1967
    %v1978 = vmul.f32 %v1976, %v1970
    %v1979 = vmul.f32 %v1977, %v1967
    %v1980 = vmul.f32 %v1978, %v1970
    %v1981 = vadd.f32 %v1967, %v1979
    %v1982 = vadd.f32 %v1970, %v1980
    %v1983 = vmul.f32 %v1981, 0.7978846
    %v1984 = vmul.f32 %v1982, 0.7978846
    %v1985 = vtanh.pop %v1983
    %v1986 = vtanh.pop %v1984
    %v1987 = vadd.f32 %v1985, 1.0
    %v1988 = vadd.f32 %v1986, 1.0
    %v1989 = vmul.f32 %v1973, %v1987
    %v1990 = vmul.f32 %v1974, %v1988
    %v1991 = vpack.c.bf16 %v1990, %v1989
    %v1992 = vld [vmem:[%s6] sm:$0xf]
    %v1993 = vld [vmem:[%s6 + $0x4] sm:$0xf]
    %v1994 = vld [vmem:[%s6 + $0x8] sm:$0xf]
    %v1995 = vld [vmem:[%s6 + $0xc] sm:$0xf]
    %v1996 = vld [vmem:[%s6 + $0x10] sm:$0xf]
    %v1997 = vld [vmem:[%s6 + $0x14] sm:$0xf]
    %v1998 = vld [vmem:[%s6 + $0x18] sm:$0xf]
    %v1999 = vld [vmem:[%s6 + $0x1c] sm:$0xf]
    %v2000 = vld [vmem:[%s6 + $0x20] sm:$0xf]
    %v2001 = vld [vmem:[%s6 + $0x24] sm:$0xf]
    %v2002 = vld [vmem:[%s6 + $0x28] sm:$0xf]
    %v2003 = vld [vmem:[%s6 + $0x2c] sm:$0xf]
    %v2004 = vld [vmem:[%s6 + $0x30] sm:$0xf]
    %v2005 = vld [vmem:[%s6 + $0x34] sm:$0xf]
    %v2006 = vld [vmem:[%s6 + $0x38] sm:$0xf]
    %v2007 = vld [vmem:[%s6 + $0x3c] sm:$0xf]
    %v2008 = vlaneseq
    %v2009 = vshrl.u32 %v2008, 7
    %v2010 = vsub.s32 5, %v2009
    %v2011 = vrot.slane %v48, %v2010
    %v2028 = vunpack.c.l.b16 %v1992
    %v2029 = vunpack.c.l.b16 %v1993
    %v2030 = vunpack.c.l.b16 %v1994
    %v2031 = vunpack.c.l.b16 %v1995
    %v2032 = vunpack.c.l.b16 %v1996
    %v2033 = vunpack.c.l.b16 %v1997
    %v2034 = vunpack.c.l.b16 %v1998
    %v2035 = vunpack.c.l.b16 %v1999
    %v2036 = vunpack.c.l.b16 %v2000
    %v2037 = vunpack.c.l.b16 %v2001
    %v2038 = vunpack.c.l.b16 %v2002
    %v2039 = vunpack.c.l.b16 %v2003
    %v2040 = vunpack.c.l.b16 %v2004
    %v2041 = vunpack.c.l.b16 %v2005
    %v2042 = vunpack.c.l.b16 %v2006
    %v2043 = vunpack.c.l.b16 %v2007
    %v2044 = vpack.c.b16 %v2029, %v2028
    %v2045 = vpack.c.b16 %v2031, %v2030
    %v2046 = vpack.c.b16 %v2033, %v2032
    %v2047 = vpack.c.b16 %v2035, %v2034
    %v2048 = vpack.c.b16 %v2037, %v2036
    %v2049 = vpack.c.b16 %v2039, %v2038
    %v2050 = vpack.c.b16 %v2041, %v2040
    %v2051 = vpack.c.b16 %v2043, %v2042
    %2060 = vmatprep.subr.bf16.mxu0 0
    %2061 = vmatpush1.bf16.msra.mxu0 %v2051
    %2062 = vmatprep.subr.bf16.mxu0 0
    %2063 = vmatpush1.bf16.msra.mxu0 %v2050
    %2064 = vmatprep.subr.bf16.mxu0 0
    %2065 = vmatpush1.bf16.msra.mxu0 %v2049
    %2066 = vmatprep.subr.bf16.mxu0 0
    %2067 = vmatpush1.bf16.msra.mxu0 %v2048
    %2068 = vmatprep.subr.bf16.mxu0 0
    %2069 = vmatpush1.bf16.msra.mxu0 %v2047
    %2070 = vmatprep.subr.bf16.mxu0 0
    %2071 = vmatpush1.bf16.msra.mxu0 %v2046
    %2072 = vmatprep.subr.bf16.mxu0 0
    %2073 = vmatpush1.bf16.msra.mxu0 %v2045
    %2074 = vmatprep.subr.bf16.mxu0 0
    %2075 = vmatpush1.bf16.msra.mxu0 %v2044
    %2076 = vmatprep.subr.bf16.mxu0 0
    %2077 = vmatpush2.bf16.msra.mxu0 0
    %2078 = vmatprep.subr.bf16.mxu0 0
    %2079 = vmatpush2.bf16.msra.mxu0 0
    %2080 = vmatprep.subr.bf16.mxu0 0
    %2081 = vmatpush2.bf16.msra.mxu0 0
    %2082 = vmatprep.subr.bf16.mxu0 0
    %2083 = vmatpush2.bf16.msra.mxu0 0
    %2084 = vmatprep.subr.bf16.mxu0 0
    %2085 = vmatpush2.bf16.msra.mxu0 0
    %2086 = vmatprep.subr.bf16.mxu0 0
    %2087 = vmatpush2.bf16.msra.mxu0 0
    %2088 = vmatprep.subr.bf16.mxu0 0
    %2089 = vmatpush2.bf16.msra.mxu0 0
    %2090 = vmatprep.subr.bf16.mxu0 0
    %2091 = vmatpush2.bf16.msra.mxu0 0
    %2092 = vmatprep.mubr.bf16.mxu0 0
    %2093 = vmatmul.mubr.bf16.gmra.mxu0 %v1991
    %v2094 = vpop.f32.mrf.mxu0
    %v2095 = vadd.f32 %v2011, %v2094
    %v2096 = vpop.f32.mrf.mxu0
    %v2097 = vpop.f32.mrf.mxu0
    %v2098 = vadd.f32 %v2011, %v2097
    %v2099 = vpop.f32.mrf.mxu0
    %2100 = vdwg.mxu0
    %v2101 = vadd.f32 %v2095, %v1866
    %v2102 = vadd.f32 %v2098, %v1867
    %s2103 = scalar_lea.vmem %s8, 8
    %v2104 = vld [vmem:[%s2103] sm:$0x3f]
    %s2105 = scalar_lea.vmem %s7, 1
    %v2106 = vld [vmem:[%s2105] sm:$0x1]
    %v2107 = vsel %vm50, %v2101, 0.0
    %2108 = vadd.xlane.f32.xlu0 %v2107
    %v2109 = vpop.xlane.xlu0 %2108
    %v2110 = vsel %vm50, %v2102, 0.0
    %2111 = vadd.xlane.f32.xlu0 %v2110
    %v2112 = vpop.xlane.xlu0 %2111
    %v2113 = vmul.f32 %v2109, %v57
    %v2114 = vmul.f32 %v2112, %v57
    %v2115 = vsub.f32 %v2101, %v2113
    %v2116 = vsub.f32 %v2102, %v2114
    %v2117 = vmul.f32 %v2115, %v2115
    %v2118 = vmul.f32 %v2116, %v2116
    %v2119 = vsel %vm50, %v2117, 0.0
    %2120 = vadd.xlane.f32.xlu0 %v2119
    %v2121 = vpop.xlane.xlu0 %2120
    %v2122 = vsel %vm50, %v2118, 0.0
    %2123 = vadd.xlane.f32.xlu0 %v2122
    %v2124 = vpop.xlane.xlu0 %2123
    %v2125 = vmul.f32 %v2121, %v57
    %v2126 = vmul.f32 %v2124, %v57
    %v2127 = vadd.f32 %v2125, 1e-05
    %v2128 = vadd.f32 %v2126, 1e-05
    %v2129 = vrsqrt.pop %v2127
    %v2130 = vrsqrt.pop %v2128
    %v2131 = vmul.f32 %v2115, %v2129
    %v2132 = vmul.f32 %v2116, %v2130
    %v2133 = vlaneseq
    %v2134 = vshrl.u32 %v2133, 7
    %v2135 = vsub.s32 0, %v2134
    %v2136 = vrot.slane %v2104, %v2135
    %v2137 = vmul.f32 %v2136, %v2131
    %v2138 = vmul.f32 %v2136, %v2132
    %v2139 = vlaneseq
    %v2140 = vshrl.u32 %v2139, 7
    %v2141 = vsub.s32 1, %v2140
    %v2142 = vrot.slane %v2104, %v2141
    %v2143 = vadd.f32 %v2137, %v2142
    %v2144 = vadd.f32 %v2138, %v2142
    %v2145 = vpack.c.bf16 %v2144, %v2143
    %s2146 = scalar_lea.vmem %s1, 64
    %v2147 = vld [vmem:[%s2146] sm:$0xf]
    %v2148 = vld [vmem:[%s2146 + $0x4] sm:$0xf]
    %v2149 = vld [vmem:[%s2146 + $0x8] sm:$0xf]
    %v2150 = vld [vmem:[%s2146 + $0xc] sm:$0xf]
    %v2155 = vunpack.c.l.b16 %v2147
    %v2156 = vunpack.c.l.b16 %v2148
    %v2157 = vunpack.c.l.b16 %v2149
    %v2158 = vunpack.c.l.b16 %v2150
    %v2159 = vpack.c.b16 %v2156, %v2155
    %v2160 = vpack.c.b16 %v2158, %v2157
    %v2164 = vsel %vm50, %v2145, 0
    %2166 = vmatprep.subr.bf16.mxu0 0
    %2167 = vmatpush1.bf16.msra.mxu0 0
    %2168 = vmatprep.subr.bf16.mxu0 0
    %2169 = vmatpush1.bf16.msra.mxu0 0
    %2170 = vmatprep.subr.bf16.mxu0 0
    %2171 = vmatpush1.bf16.msra.mxu0 0
    %2172 = vmatprep.subr.bf16.mxu0 0
    %2173 = vmatpush1.bf16.msra.mxu0 0
    %2174 = vmatprep.subr.bf16.mxu0 0
    %2175 = vmatpush1.bf16.msra.mxu0 0
    %2176 = vmatprep.subr.bf16.mxu0 0
    %2177 = vmatpush1.bf16.msra.mxu0 0
    %2178 = vmatprep.subr.bf16.mxu0 0
    %2179 = vmatpush1.bf16.msra.mxu0 %v2160
    %2180 = vmatprep.subr.bf16.mxu0 0
    %2181 = vmatpush1.bf16.msra.mxu0 %v2159
    %2182 = vmatprep.subr.bf16.mxu0 0
    %2183 = vmatpush2.bf16.msra.mxu0 0
    %2184 = vmatprep.subr.bf16.mxu0 0
    %2185 = vmatpush2.bf16.msra.mxu0 0
    %2186 = vmatprep.subr.bf16.mxu0 0
    %2187 = vmatpush2.bf16.msra.mxu0 0
    %2188 = vmatprep.subr.bf16.mxu0 0
    %2189 = vmatpush2.bf16.msra.mxu0 0
    %2190 = vmatprep.subr.bf16.mxu0 0
    %2191 = vmatpush2.bf16.msra.mxu0 0
    %2192 = vmatprep.subr.bf16.mxu0 0
    %2193 = vmatpush2.bf16.msra.mxu0 0
    %2194 = vmatprep.subr.bf16.mxu0 0
    %2195 = vmatpush2.bf16.msra.mxu0 0
    %2196 = vmatprep.subr.bf16.mxu0 0
    %2197 = vmatpush2.bf16.msra.mxu0 0
    %2198 = vmatprep.mubr.bf16.mxu0 0
    %2199 = vmatmul.mubr.bf16.gmra.mxu0 %v2164
    %v2200 = vpop.f32.mrf.mxu0
    %v2201 = vadd.f32 0.0, %v2200
    %v2202 = vpop.f32.mrf.mxu0
    %v2203 = vpop.f32.mrf.mxu0
    %v2204 = vadd.f32 0.0, %v2203
    %v2205 = vpop.f32.mrf.mxu0
    %2206 = vdwg.mxu0
    %v2207 = vpack.c.bf16 %v2204, %v2201
    %s2208 = scalar_lea.vmem %s2, 64
    %v2209 = vld [vmem:[%s2208] sm:$0xf]
    %v2210 = vld [vmem:[%s2208 + $0x4] sm:$0xf]
    %v2211 = vld [vmem:[%s2208 + $0x8] sm:$0xf]
    %v2212 = vld [vmem:[%s2208 + $0xc] sm:$0xf]
    %v2217 = vunpack.c.l.b16 %v2209
    %v2218 = vunpack.c.l.b16 %v2210
    %v2219 = vunpack.c.l.b16 %v2211
    %v2220 = vunpack.c.l.b16 %v2212
    %v2221 = vpack.c.b16 %v2218, %v2217
    %v2222 = vpack.c.b16 %v2220, %v2219
    %2225 = vmatprep.subr.bf16.mxu0 0
    %2226 = vmatpush1.bf16.msra.mxu0 0
    %2227 = vmatprep.subr.bf16.mxu0 0
    %2228 = vmatpush1.bf16.msra.mxu0 0
    %2229 = vmatprep.subr.bf16.mxu0 0
    %2230 = vmatpush1.bf16.msra.mxu0 0
    %2231 = vmatprep.subr.bf16.mxu0 0
    %2232 = vmatpush1.bf16.msra.mxu0 0
    %2233 = vmatprep.subr.bf16.mxu0 0
    %2234 = vmatpush1.bf16.msra.mxu0 0
    %2235 = vmatprep.subr.bf16.mxu0 0
    %2236 = vmatpush1.bf16.msra.mxu0 0
    %2237 = vmatprep.subr.bf16.mxu0 0
    %2238 = vmatpush1.bf16.msra.mxu0 %v2222
    %2239 = vmatprep.subr.bf16.mxu0 0
    %2240 = vmatpush1.bf16.msra.mxu0 %v2221
    %2241 = vmatprep.subr.bf16.mxu0 0
    %2242 = vmatpush2.bf16.msra.mxu0 0
    %2243 = vmatprep.subr.bf16.mxu0 0
    %2244 = vmatpush2.bf16.msra.mxu0 0
    %2245 = vmatprep.subr.bf16.mxu0 0
    %2246 = vmatpush2.bf16.msra.mxu0 0
    %2247 = vmatprep.subr.bf16.mxu0 0
    %2248 = vmatpush2.bf16.msra.mxu0 0
    %2249 = vmatprep.subr.bf16.mxu0 0
    %2250 = vmatpush2.bf16.msra.mxu0 0
    %2251 = vmatprep.subr.bf16.mxu0 0
    %2252 = vmatpush2.bf16.msra.mxu0 0
    %2253 = vmatprep.subr.bf16.mxu0 0
    %2254 = vmatpush2.bf16.msra.mxu0 0
    %2255 = vmatprep.subr.bf16.mxu0 0
    %2256 = vmatpush2.bf16.msra.mxu0 0
    %2257 = vmatprep.mubr.bf16.mxu0 0
    %2258 = vmatmul.mubr.bf16.gmra.mxu0 %v2164
    %v2259 = vpop.f32.mrf.mxu0
    %v2260 = vadd.f32 0.0, %v2259
    %v2261 = vpop.f32.mrf.mxu0
    %v2262 = vpop.f32.mrf.mxu0
    %v2263 = vadd.f32 0.0, %v2262
    %v2264 = vpop.f32.mrf.mxu0
    %2265 = vdwg.mxu0
    %v2266 = vpack.c.bf16 %v2263, %v2260
    %s2267 = scalar_lea.vmem %s3, 64
    %v2268 = vld [vmem:[%s2267] sm:$0xf]
    %v2269 = vld [vmem:[%s2267 + $0x4] sm:$0xf]
    %v2270 = vld [vmem:[%s2267 + $0x8] sm:$0xf]
    %v2271 = vld [vmem:[%s2267 + $0xc] sm:$0xf]
    %v2276 = vunpack.c.l.b16 %v2268
    %v2277 = vunpack.c.l.b16 %v2269
    %v2278 = vunpack.c.l.b16 %v2270
    %v2279 = vunpack.c.l.b16 %v2271
    %v2280 = vpack.c.b16 %v2277, %v2276
    %v2281 = vpack.c.b16 %v2279, %v2278
    %2284 = vmatprep.subr.bf16.mxu0 0
    %2285 = vmatpush1.bf16.msra.mxu0 0
    %2286 = vmatprep.subr.bf16.mxu0 0
    %2287 = vmatpush1.bf16.msra.mxu0 0
    %2288 = vmatprep.subr.bf16.mxu0 0
    %2289 = vmatpush1.bf16.msra.mxu0 0
    %2290 = vmatprep.subr.bf16.mxu0 0
    %2291 = vmatpush1.bf16.msra.mxu0 0
    %2292 = vmatprep.subr.bf16.mxu0 0
    %2293 = vmatpush1.bf16.msra.mxu0 0
    %2294 = vmatprep.subr.bf16.mxu0 0
    %2295 = vmatpush1.bf16.msra.mxu0 0
    %2296 = vmatprep.subr.bf16.mxu0 0
    %2297 = vmatpush1.bf16.msra.mxu0 %v2281
    %2298 = vmatprep.subr.bf16.mxu0 0
    %2299 = vmatpush1.bf16.msra.mxu0 %v2280
    %2300 = vmatprep.subr.bf16.mxu0 0
    %2301 = vmatpush2.bf16.msra.mxu0 0
    %2302 = vmatprep.subr.bf16.mxu0 0
    %2303 = vmatpush2.bf16.msra.mxu0 0
    %2304 = vmatprep.subr.bf16.mxu0 0
    %2305 = vmatpush2.bf16.msra.mxu0 0
    %2306 = vmatprep.subr.bf16.mxu0 0
    %2307 = vmatpush2.bf16.msra.mxu0 0
    %2308 = vmatprep.subr.bf16.mxu0 0
    %2309 = vmatpush2.bf16.msra.mxu0 0
    %2310 = vmatprep.subr.bf16.mxu0 0
    %2311 = vmatpush2.bf16.msra.mxu0 0
    %2312 = vmatprep.subr.bf16.mxu0 0
    %2313 = vmatpush2.bf16.msra.mxu0 0
    %2314 = vmatprep.subr.bf16.mxu0 0
    %2315 = vmatpush2.bf16.msra.mxu0 0
    %2316 = vmatprep.mubr.bf16.mxu0 0
    %2317 = vmatmul.mubr.bf16.gmra.mxu0 %v2164
    %v2318 = vpop.f32.mrf.mxu0
    %v2319 = vadd.f32 0.0, %v2318
    %v2320 = vpop.f32.mrf.mxu0
    %v2321 = vpop.f32.mrf.mxu0
    %v2322 = vadd.f32 0.0, %v2321
    %v2323 = vpop.f32.mrf.mxu0
    %2324 = vdwg.mxu0
    %v2325 = vpack.c.bf16 %v2322, %v2319
    %v2327 = vsel %vm268, %v2207, 0
    %v2330 = vsel %vm268, %v2266, 0
    %2332 = vmatprep.subr.bf16.mxu0 0
    %2333 = vmatpush1.bf16.xpose.msra.mxu0 0
    %2334 = vmatprep.subr.bf16.mxu0 0
    %2335 = vmatpush1.bf16.xpose.msra.mxu0 0
    %2336 = vmatprep.subr.bf16.mxu0 0
    %2337 = vmatpush1.bf16.xpose.msra.mxu0 0
    %2338 = vmatprep.subr.bf16.mxu0 0
    %2339 = vmatpush1.bf16.xpose.msra.mxu0 0
    %2340 = vmatprep.subr.bf16.mxu0 0
    %2341 = vmatpush1.bf16.xpose.msra.mxu0 0
    %2342 = vmatprep.subr.bf16.mxu0 0
    %2343 = vmatpush1.bf16.xpose.msra.mxu0 0
    %2344 = vmatprep.subr.bf16.mxu0 0
    %2345 = vmatpush1.bf16.xpose.msra.mxu0 0
    %2346 = vmatprep.subr.bf16.mxu0 0
    %2347 = vmatpush1.bf16.xpose.msra.mxu0 %v2330
    %2348 = vmatprep.subr.bf16.mxu0 0
    %2349 = vmatpush2.bf16.xpose.msra.mxu0 0
    %2350 = vmatprep.subr.bf16.mxu0 0
    %2351 = vmatpush2.bf16.xpose.msra.mxu0 0
    %2352 = vmatprep.subr.bf16.mxu0 0
    %2353 = vmatpush2.bf16.xpose.msra.mxu0 0
    %2354 = vmatprep.subr.bf16.mxu0 0
    %2355 = vmatpush2.bf16.xpose.msra.mxu0 0
    %2356 = vmatprep.subr.bf16.mxu0 0
    %2357 = vmatpush2.bf16.xpose.msra.mxu0 0
    %2358 = vmatprep.subr.bf16.mxu0 0
    %2359 = vmatpush2.bf16.xpose.msra.mxu0 0
    %2360 = vmatprep.subr.bf16.mxu0 0
    %2361 = vmatpush2.bf16.xpose.msra.mxu0 0
    %2362 = vmatprep.subr.bf16.mxu0 0
    %2363 = vmatpush2.bf16.xpose.msra.mxu0 0
    %2364 = vmatprep.mubr.bf16.mxu0 0
    %2365 = vmatmul.mubr.bf16.gmra.mxu0 %v2327
    %v2366 = vpop.f32.mrf.mxu0
    %v2367 = vadd.f32 %v47, %v2366
    %v2368 = vpop.f32.mrf.mxu0
    %v2369 = vpop.f32.mrf.mxu0
    %v2370 = vpop.f32.mrf.mxu0
    %2371 = vdwg.mxu0
    %v2372 = vsel %vm268, %v2367, -inf
    %2373 = vmax.xlane.f32.xlu0 %v2372
    %v2374 = vpop.xlane.xlu0 %2373
    %v2375 = vsub.f32 %v2367, %v2374
    %v2376 = vmul.f32 %v2375, 1.442695
    %v2377 = vpow.pop %v2376
    %v2378 = vsel %vm268, %v2377, 0.0
    %2379 = vadd.xlane.f32.xlu0 %v2378
    %v2380 = vpop.xlane.xlu0 %2379
    %v2381 = vrcp.pop %v2380
    %v2382 = vmul.f32 %v2377, %v2381
    %v2383 = vpack.c.bf16 %v2382, %v2382
    %v2385 = vsel %vm268, %v2383, 0
    %v2388 = vsel %vm330, %v2325, 0
    %2390 = vmatprep.subr.bf16.mxu0 0
    %2391 = vmatpush1.bf16.msra.mxu0 0
    %2392 = vmatprep.subr.bf16.mxu0 0
    %2393 = vmatpush1.bf16.msra.mxu0 0
    %2394 = vmatprep.subr.bf16.mxu0 0
    %2395 = vmatpush1.bf16.msra.mxu0 0
    %2396 = vmatprep.subr.bf16.mxu0 0
    %2397 = vmatpush1.bf16.msra.mxu0 0
    %2398 = vmatprep.subr.bf16.mxu0 0
    %2399 = vmatpush1.bf16.msra.mxu0 0
    %2400 = vmatprep.subr.bf16.mxu0 0
    %2401 = vmatpush1.bf16.msra.mxu0 0
    %2402 = vmatprep.subr.bf16.mxu0 0
    %2403 = vmatpush1.bf16.msra.mxu0 0
    %2404 = vmatprep.subr.bf16.mxu0 0
    %2405 = vmatpush1.bf16.msra.mxu0 %v2388
    %2406 = vmatprep.subr.bf16.mxu0 0
    %2407 = vmatpush2.bf16.msra.mxu0 0
    %2408 = vmatprep.subr.bf16.mxu0 0
    %2409 = vmatpush2.bf16.msra.mxu0 0
    %2410 = vmatprep.subr.bf16.mxu0 0
    %2411 = vmatpush2.bf16.msra.mxu0 0
    %2412 = vmatprep.subr.bf16.mxu0 0
    %2413 = vmatpush2.bf16.msra.mxu0 0
    %2414 = vmatprep.subr.bf16.mxu0 0
    %2415 = vmatpush2.bf16.msra.mxu0 0
    %2416 = vmatprep.subr.bf16.mxu0 0
    %2417 = vmatpush2.bf16.msra.mxu0 0
    %2418 = vmatprep.subr.bf16.mxu0 0
    %2419 = vmatpush2.bf16.msra.mxu0 0
    %2420 = vmatprep.subr.bf16.mxu0 0
    %2421 = vmatpush2.bf16.msra.mxu0 0
    %2422 = vmatprep.mubr.bf16.mxu0 0
    %2423 = vmatmul.mubr.bf16.gmra.mxu0 %v2385
    %v2424 = vpop.f32.mrf.mxu0
    %v2425 = vadd.f32 0.0, %v2424
    %v2426 = vpop.f32.mrf.mxu0
    %v2427 = vpop.f32.mrf.mxu0
    %v2428 = vpop.f32.mrf.mxu0
    %2429 = vdwg.mxu0
    %v2431 = vrot.slane %v2207, 4
    %v2433 = vrot.slane %v2266, 4
    %v2435 = vsel %vm268, %v2431, 0
    %v2438 = vsel %vm268, %v2433, 0
    %2440 = vmatprep.subr.bf16.mxu0 0
    %2441 = vmatpush1.bf16.xpose.msra.mxu0 0
    %2442 = vmatprep.subr.bf16.mxu0 0
    %2443 = vmatpush1.bf16.xpose.msra.mxu0 0
    %2444 = vmatprep.subr.bf16.mxu0 0
    %2445 = vmatpush1.bf16.xpose.msra.mxu0 0
    %2446 = vmatprep.subr.bf16.mxu0 0
    %2447 = vmatpush1.bf16.xpose.msra.mxu0 0
    %2448 = vmatprep.subr.bf16.mxu0 0
    %2449 = vmatpush1.bf16.xpose.msra.mxu0 0
    %2450 = vmatprep.subr.bf16.mxu0 0
    %2451 = vmatpush1.bf16.xpose.msra.mxu0 0
    %2452 = vmatprep.subr.bf16.mxu0 0
    %2453 = vmatpush1.bf16.xpose.msra.mxu0 0
    %2454 = vmatprep.subr.bf16.mxu0 0
    %2455 = vmatpush1.bf16.xpose.msra.mxu0 %v2438
    %2456 = vmatprep.subr.bf16.mxu0 0
    %2457 = vmatpush2.bf16.xpose.msra.mxu0 0
    %2458 = vmatprep.subr.bf16.mxu0 0
    %2459 = vmatpush2.bf16.xpose.msra.mxu0 0
    %2460 = vmatprep.subr.bf16.mxu0 0
    %2461 = vmatpush2.bf16.xpose.msra.mxu0 0
    %2462 = vmatprep.subr.bf16.mxu0 0
    %2463 = vmatpush2.bf16.xpose.msra.mxu0 0
    %2464 = vmatprep.subr.bf16.mxu0 0
    %2465 = vmatpush2.bf16.xpose.msra.mxu0 0
    %2466 = vmatprep.subr.bf16.mxu0 0
    %2467 = vmatpush2.bf16.xpose.msra.mxu0 0
    %2468 = vmatprep.subr.bf16.mxu0 0
    %2469 = vmatpush2.bf16.xpose.msra.mxu0 0
    %2470 = vmatprep.subr.bf16.mxu0 0
    %2471 = vmatpush2.bf16.xpose.msra.mxu0 0
    %2472 = vmatprep.mubr.bf16.mxu0 0
    %2473 = vmatmul.mubr.bf16.gmra.mxu0 %v2435
    %v2474 = vpop.f32.mrf.mxu0
    %v2475 = vadd.f32 %v47, %v2474
    %v2476 = vpop.f32.mrf.mxu0
    %v2477 = vpop.f32.mrf.mxu0
    %v2478 = vpop.f32.mrf.mxu0
    %2479 = vdwg.mxu0
    %v2480 = vsel %vm268, %v2475, -inf
    %2481 = vmax.xlane.f32.xlu0 %v2480
    %v2482 = vpop.xlane.xlu0 %2481
    %v2483 = vsub.f32 %v2475, %v2482
    %v2484 = vmul.f32 %v2483, 1.442695
    %v2485 = vpow.pop %v2484
    %v2486 = vsel %vm268, %v2485, 0.0
    %2487 = vadd.xlane.f32.xlu0 %v2486
    %v2488 = vpop.xlane.xlu0 %2487
    %v2489 = vrcp.pop %v2488
    %v2490 = vmul.f32 %v2485, %v2489
    %v2491 = vpack.c.bf16 %v2490, %v2490
    %v2493 = vrot.slane %v2325, 4
    %v2495 = vsel %vm268, %v2491, 0
    %v2498 = vsel %vm330, %v2493, 0
    %2500 = vmatprep.subr.bf16.mxu0 0
    %2501 = vmatpush1.bf16.msra.mxu0 0
    %2502 = vmatprep.subr.bf16.mxu0 0
    %2503 = vmatpush1.bf16.msra.mxu0 0
    %2504 = vmatprep.subr.bf16.mxu0 0
    %2505 = vmatpush1.bf16.msra.mxu0 0
    %2506 = vmatprep.subr.bf16.mxu0 0
    %2507 = vmatpush1.bf16.msra.mxu0 0
    %2508 = vmatprep.subr.bf16.mxu0 0
    %2509 = vmatpush1.bf16.msra.mxu0 0
    %2510 = vmatprep.subr.bf16.mxu0 0
    %2511 = vmatpush1.bf16.msra.mxu0 0
    %2512 = vmatprep.subr.bf16.mxu0 0
    %2513 = vmatpush1.bf16.msra.mxu0 0
    %2514 = vmatprep.subr.bf16.mxu0 0
    %2515 = vmatpush1.bf16.msra.mxu0 %v2498
    %2516 = vmatprep.subr.bf16.mxu0 0
    %2517 = vmatpush2.bf16.msra.mxu0 0
    %2518 = vmatprep.subr.bf16.mxu0 0
    %2519 = vmatpush2.bf16.msra.mxu0 0
    %2520 = vmatprep.subr.bf16.mxu0 0
    %2521 = vmatpush2.bf16.msra.mxu0 0
    %2522 = vmatprep.subr.bf16.mxu0 0
    %2523 = vmatpush2.bf16.msra.mxu0 0
    %2524 = vmatprep.subr.bf16.mxu0 0
    %2525 = vmatpush2.bf16.msra.mxu0 0
    %2526 = vmatprep.subr.bf16.mxu0 0
    %2527 = vmatpush2.bf16.msra.mxu0 0
    %2528 = vmatprep.subr.bf16.mxu0 0
    %2529 = vmatpush2.bf16.msra.mxu0 0
    %2530 = vmatprep.subr.bf16.mxu0 0
    %2531 = vmatpush2.bf16.msra.mxu0 0
    %2532 = vmatprep.mubr.bf16.mxu0 0
    %2533 = vmatmul.mubr.bf16.gmra.mxu0 %v2495
    %v2534 = vpop.f32.mrf.mxu0
    %v2535 = vadd.f32 0.0, %v2534
    %v2536 = vpop.f32.mrf.mxu0
    %v2537 = vpop.f32.mrf.mxu0
    %v2538 = vpop.f32.mrf.mxu0
    %2539 = vdwg.mxu0
    %v2540 = vpack.c.bf16 %v2535, %v2425
    %s2541 = scalar_lea.vmem %s4, 16
    %v2542 = vld [vmem:[%s2541] sm:$0xf]
    %s2543 = scalar_lea.vmem %s1, 80
    %v2544 = vld [vmem:[%s2543] sm:$0xf]
    %v2545 = vld [vmem:[%s2543 + $0x4] sm:$0xf]
    %v2546 = vld [vmem:[%s2543 + $0x8] sm:$0xf]
    %v2547 = vld [vmem:[%s2543 + $0xc] sm:$0xf]
    %v2552 = vunpack.c.l.b16 %v2544
    %v2553 = vunpack.c.l.b16 %v2545
    %v2554 = vunpack.c.l.b16 %v2546
    %v2555 = vunpack.c.l.b16 %v2547
    %v2556 = vpack.c.b16 %v2553, %v2552
    %v2557 = vpack.c.b16 %v2555, %v2554
    %2560 = vmatprep.subr.bf16.mxu0 0
    %2561 = vmatpush1.bf16.msra.mxu0 0
    %2562 = vmatprep.subr.bf16.mxu0 0
    %2563 = vmatpush1.bf16.msra.mxu0 0
    %2564 = vmatprep.subr.bf16.mxu0 0
    %2565 = vmatpush1.bf16.msra.mxu0 0
    %2566 = vmatprep.subr.bf16.mxu0 0
    %2567 = vmatpush1.bf16.msra.mxu0 0
    %2568 = vmatprep.subr.bf16.mxu0 0
    %2569 = vmatpush1.bf16.msra.mxu0 0
    %2570 = vmatprep.subr.bf16.mxu0 0
    %2571 = vmatpush1.bf16.msra.mxu0 0
    %2572 = vmatprep.subr.bf16.mxu0 0
    %2573 = vmatpush1.bf16.msra.mxu0 %v2557
    %2574 = vmatprep.subr.bf16.mxu0 0
    %2575 = vmatpush1.bf16.msra.mxu0 %v2556
    %2576 = vmatprep.subr.bf16.mxu0 0
    %2577 = vmatpush2.bf16.msra.mxu0 0
    %2578 = vmatprep.subr.bf16.mxu0 0
    %2579 = vmatpush2.bf16.msra.mxu0 0
    %2580 = vmatprep.subr.bf16.mxu0 0
    %2581 = vmatpush2.bf16.msra.mxu0 0
    %2582 = vmatprep.subr.bf16.mxu0 0
    %2583 = vmatpush2.bf16.msra.mxu0 0
    %2584 = vmatprep.subr.bf16.mxu0 0
    %2585 = vmatpush2.bf16.msra.mxu0 0
    %2586 = vmatprep.subr.bf16.mxu0 0
    %2587 = vmatpush2.bf16.msra.mxu0 0
    %2588 = vmatprep.subr.bf16.mxu0 0
    %2589 = vmatpush2.bf16.msra.mxu0 0
    %2590 = vmatprep.subr.bf16.mxu0 0
    %2591 = vmatpush2.bf16.msra.mxu0 0
    %2592 = vmatprep.mubr.bf16.mxu0 0
    %2593 = vmatmul.mubr.bf16.gmra.mxu0 %v2164
    %v2594 = vpop.f32.mrf.mxu0
    %v2595 = vadd.f32 0.0, %v2594
    %v2596 = vpop.f32.mrf.mxu0
    %v2597 = vpop.f32.mrf.mxu0
    %v2598 = vadd.f32 0.0, %v2597
    %v2599 = vpop.f32.mrf.mxu0
    %2600 = vdwg.mxu0
    %v2601 = vpack.c.bf16 %v2598, %v2595
    %s2602 = scalar_lea.vmem %s2, 80
    %v2603 = vld [vmem:[%s2602] sm:$0xf]
    %v2604 = vld [vmem:[%s2602 + $0x4] sm:$0xf]
    %v2605 = vld [vmem:[%s2602 + $0x8] sm:$0xf]
    %v2606 = vld [vmem:[%s2602 + $0xc] sm:$0xf]
    %v2611 = vunpack.c.l.b16 %v2603
    %v2612 = vunpack.c.l.b16 %v2604
    %v2613 = vunpack.c.l.b16 %v2605
    %v2614 = vunpack.c.l.b16 %v2606
    %v2615 = vpack.c.b16 %v2612, %v2611
    %v2616 = vpack.c.b16 %v2614, %v2613
    %2619 = vmatprep.subr.bf16.mxu0 0
    %2620 = vmatpush1.bf16.msra.mxu0 0
    %2621 = vmatprep.subr.bf16.mxu0 0
    %2622 = vmatpush1.bf16.msra.mxu0 0
    %2623 = vmatprep.subr.bf16.mxu0 0
    %2624 = vmatpush1.bf16.msra.mxu0 0
    %2625 = vmatprep.subr.bf16.mxu0 0
    %2626 = vmatpush1.bf16.msra.mxu0 0
    %2627 = vmatprep.subr.bf16.mxu0 0
    %2628 = vmatpush1.bf16.msra.mxu0 0
    %2629 = vmatprep.subr.bf16.mxu0 0
    %2630 = vmatpush1.bf16.msra.mxu0 0
    %2631 = vmatprep.subr.bf16.mxu0 0
    %2632 = vmatpush1.bf16.msra.mxu0 %v2616
    %2633 = vmatprep.subr.bf16.mxu0 0
    %2634 = vmatpush1.bf16.msra.mxu0 %v2615
    %2635 = vmatprep.subr.bf16.mxu0 0
    %2636 = vmatpush2.bf16.msra.mxu0 0
    %2637 = vmatprep.subr.bf16.mxu0 0
    %2638 = vmatpush2.bf16.msra.mxu0 0
    %2639 = vmatprep.subr.bf16.mxu0 0
    %2640 = vmatpush2.bf16.msra.mxu0 0
    %2641 = vmatprep.subr.bf16.mxu0 0
    %2642 = vmatpush2.bf16.msra.mxu0 0
    %2643 = vmatprep.subr.bf16.mxu0 0
    %2644 = vmatpush2.bf16.msra.mxu0 0
    %2645 = vmatprep.subr.bf16.mxu0 0
    %2646 = vmatpush2.bf16.msra.mxu0 0
    %2647 = vmatprep.subr.bf16.mxu0 0
    %2648 = vmatpush2.bf16.msra.mxu0 0
    %2649 = vmatprep.subr.bf16.mxu0 0
    %2650 = vmatpush2.bf16.msra.mxu0 0
    %2651 = vmatprep.mubr.bf16.mxu0 0
    %2652 = vmatmul.mubr.bf16.gmra.mxu0 %v2164
    %v2653 = vpop.f32.mrf.mxu0
    %v2654 = vadd.f32 0.0, %v2653
    %v2655 = vpop.f32.mrf.mxu0
    %v2656 = vpop.f32.mrf.mxu0
    %v2657 = vadd.f32 0.0, %v2656
    %v2658 = vpop.f32.mrf.mxu0
    %2659 = vdwg.mxu0
    %v2660 = vpack.c.bf16 %v2657, %v2654
    %s2661 = scalar_lea.vmem %s3, 80
    %v2662 = vld [vmem:[%s2661] sm:$0xf]
    %v2663 = vld [vmem:[%s2661 + $0x4] sm:$0xf]
    %v2664 = vld [vmem:[%s2661 + $0x8] sm:$0xf]
    %v2665 = vld [vmem:[%s2661 + $0xc] sm:$0xf]
    %v2670 = vunpack.c.l.b16 %v2662
    %v2671 = vunpack.c.l.b16 %v2663
    %v2672 = vunpack.c.l.b16 %v2664
    %v2673 = vunpack.c.l.b16 %v2665
    %v2674 = vpack.c.b16 %v2671, %v2670
    %v2675 = vpack.c.b16 %v2673, %v2672
    %2678 = vmatprep.subr.bf16.mxu0 0
    %2679 = vmatpush1.bf16.msra.mxu0 0
    %2680 = vmatprep.subr.bf16.mxu0 0
    %2681 = vmatpush1.bf16.msra.mxu0 0
    %2682 = vmatprep.subr.bf16.mxu0 0
    %2683 = vmatpush1.bf16.msra.mxu0 0
    %2684 = vmatprep.subr.bf16.mxu0 0
    %2685 = vmatpush1.bf16.msra.mxu0 0
    %2686 = vmatprep.subr.bf16.mxu0 0
    %2687 = vmatpush1.bf16.msra.mxu0 0
    %2688 = vmatprep.subr.bf16.mxu0 0
    %2689 = vmatpush1.bf16.msra.mxu0 0
    %2690 = vmatprep.subr.bf16.mxu0 0
    %2691 = vmatpush1.bf16.msra.mxu0 %v2675
    %2692 = vmatprep.subr.bf16.mxu0 0
    %2693 = vmatpush1.bf16.msra.mxu0 %v2674
    %2694 = vmatprep.subr.bf16.mxu0 0
    %2695 = vmatpush2.bf16.msra.mxu0 0
    %2696 = vmatprep.subr.bf16.mxu0 0
    %2697 = vmatpush2.bf16.msra.mxu0 0
    %2698 = vmatprep.subr.bf16.mxu0 0
    %2699 = vmatpush2.bf16.msra.mxu0 0
    %2700 = vmatprep.subr.bf16.mxu0 0
    %2701 = vmatpush2.bf16.msra.mxu0 0
    %2702 = vmatprep.subr.bf16.mxu0 0
    %2703 = vmatpush2.bf16.msra.mxu0 0
    %2704 = vmatprep.subr.bf16.mxu0 0
    %2705 = vmatpush2.bf16.msra.mxu0 0
    %2706 = vmatprep.subr.bf16.mxu0 0
    %2707 = vmatpush2.bf16.msra.mxu0 0
    %2708 = vmatprep.subr.bf16.mxu0 0
    %2709 = vmatpush2.bf16.msra.mxu0 0
    %2710 = vmatprep.mubr.bf16.mxu0 0
    %2711 = vmatmul.mubr.bf16.gmra.mxu0 %v2164
    %v2712 = vpop.f32.mrf.mxu0
    %v2713 = vadd.f32 0.0, %v2712
    %v2714 = vpop.f32.mrf.mxu0
    %v2715 = vpop.f32.mrf.mxu0
    %v2716 = vadd.f32 0.0, %v2715
    %v2717 = vpop.f32.mrf.mxu0
    %2718 = vdwg.mxu0
    %v2719 = vpack.c.bf16 %v2716, %v2713
    %v2721 = vsel %vm268, %v2601, 0
    %v2724 = vsel %vm268, %v2660, 0
    %2726 = vmatprep.subr.bf16.mxu0 0
    %2727 = vmatpush1.bf16.xpose.msra.mxu0 0
    %2728 = vmatprep.subr.bf16.mxu0 0
    %2729 = vmatpush1.bf16.xpose.msra.mxu0 0
    %2730 = vmatprep.subr.bf16.mxu0 0
    %2731 = vmatpush1.bf16.xpose.msra.mxu0 0
    %2732 = vmatprep.subr.bf16.mxu0 0
    %2733 = vmatpush1.bf16.xpose.msra.mxu0 0
    %2734 = vmatprep.subr.bf16.mxu0 0
    %2735 = vmatpush1.bf16.xpose.msra.mxu0 0
    %2736 = vmatprep.subr.bf16.mxu0 0
    %2737 = vmatpush1.bf16.xpose.msra.mxu0 0
    %2738 = vmatprep.subr.bf16.mxu0 0
    %2739 = vmatpush1.bf16.xpose.msra.mxu0 0
    %2740 = vmatprep.subr.bf16.mxu0 0
    %2741 = vmatpush1.bf16.xpose.msra.mxu0 %v2724
    %2742 = vmatprep.subr.bf16.mxu0 0
    %2743 = vmatpush2.bf16.xpose.msra.mxu0 0
    %2744 = vmatprep.subr.bf16.mxu0 0
    %2745 = vmatpush2.bf16.xpose.msra.mxu0 0
    %2746 = vmatprep.subr.bf16.mxu0 0
    %2747 = vmatpush2.bf16.xpose.msra.mxu0 0
    %2748 = vmatprep.subr.bf16.mxu0 0
    %2749 = vmatpush2.bf16.xpose.msra.mxu0 0
    %2750 = vmatprep.subr.bf16.mxu0 0
    %2751 = vmatpush2.bf16.xpose.msra.mxu0 0
    %2752 = vmatprep.subr.bf16.mxu0 0
    %2753 = vmatpush2.bf16.xpose.msra.mxu0 0
    %2754 = vmatprep.subr.bf16.mxu0 0
    %2755 = vmatpush2.bf16.xpose.msra.mxu0 0
    %2756 = vmatprep.subr.bf16.mxu0 0
    %2757 = vmatpush2.bf16.xpose.msra.mxu0 0
    %2758 = vmatprep.mubr.bf16.mxu0 0
    %2759 = vmatmul.mubr.bf16.gmra.mxu0 %v2721
    %v2760 = vpop.f32.mrf.mxu0
    %v2761 = vadd.f32 %v47, %v2760
    %v2762 = vpop.f32.mrf.mxu0
    %v2763 = vpop.f32.mrf.mxu0
    %v2764 = vpop.f32.mrf.mxu0
    %2765 = vdwg.mxu0
    %v2766 = vsel %vm268, %v2761, -inf
    %2767 = vmax.xlane.f32.xlu0 %v2766
    %v2768 = vpop.xlane.xlu0 %2767
    %v2769 = vsub.f32 %v2761, %v2768
    %v2770 = vmul.f32 %v2769, 1.442695
    %v2771 = vpow.pop %v2770
    %v2772 = vsel %vm268, %v2771, 0.0
    %2773 = vadd.xlane.f32.xlu0 %v2772
    %v2774 = vpop.xlane.xlu0 %2773
    %v2775 = vrcp.pop %v2774
    %v2776 = vmul.f32 %v2771, %v2775
    %v2777 = vpack.c.bf16 %v2776, %v2776
    %v2779 = vsel %vm268, %v2777, 0
    %v2782 = vsel %vm330, %v2719, 0
    %2784 = vmatprep.subr.bf16.mxu0 0
    %2785 = vmatpush1.bf16.msra.mxu0 0
    %2786 = vmatprep.subr.bf16.mxu0 0
    %2787 = vmatpush1.bf16.msra.mxu0 0
    %2788 = vmatprep.subr.bf16.mxu0 0
    %2789 = vmatpush1.bf16.msra.mxu0 0
    %2790 = vmatprep.subr.bf16.mxu0 0
    %2791 = vmatpush1.bf16.msra.mxu0 0
    %2792 = vmatprep.subr.bf16.mxu0 0
    %2793 = vmatpush1.bf16.msra.mxu0 0
    %2794 = vmatprep.subr.bf16.mxu0 0
    %2795 = vmatpush1.bf16.msra.mxu0 0
    %2796 = vmatprep.subr.bf16.mxu0 0
    %2797 = vmatpush1.bf16.msra.mxu0 0
    %2798 = vmatprep.subr.bf16.mxu0 0
    %2799 = vmatpush1.bf16.msra.mxu0 %v2782
    %2800 = vmatprep.subr.bf16.mxu0 0
    %2801 = vmatpush2.bf16.msra.mxu0 0
    %2802 = vmatprep.subr.bf16.mxu0 0
    %2803 = vmatpush2.bf16.msra.mxu0 0
    %2804 = vmatprep.subr.bf16.mxu0 0
    %2805 = vmatpush2.bf16.msra.mxu0 0
    %2806 = vmatprep.subr.bf16.mxu0 0
    %2807 = vmatpush2.bf16.msra.mxu0 0
    %2808 = vmatprep.subr.bf16.mxu0 0
    %2809 = vmatpush2.bf16.msra.mxu0 0
    %2810 = vmatprep.subr.bf16.mxu0 0
    %2811 = vmatpush2.bf16.msra.mxu0 0
    %2812 = vmatprep.subr.bf16.mxu0 0
    %2813 = vmatpush2.bf16.msra.mxu0 0
    %2814 = vmatprep.subr.bf16.mxu0 0
    %2815 = vmatpush2.bf16.msra.mxu0 0
    %2816 = vmatprep.mubr.bf16.mxu0 0
    %2817 = vmatmul.mubr.bf16.gmra.mxu0 %v2779
    %v2818 = vpop.f32.mrf.mxu0
    %v2819 = vadd.f32 0.0, %v2818
    %v2820 = vpop.f32.mrf.mxu0
    %v2821 = vpop.f32.mrf.mxu0
    %v2822 = vpop.f32.mrf.mxu0
    %2823 = vdwg.mxu0
    %v2825 = vrot.slane %v2601, 4
    %v2827 = vrot.slane %v2660, 4
    %v2829 = vsel %vm268, %v2825, 0
    %v2832 = vsel %vm268, %v2827, 0
    %2834 = vmatprep.subr.bf16.mxu0 0
    %2835 = vmatpush1.bf16.xpose.msra.mxu0 0
    %2836 = vmatprep.subr.bf16.mxu0 0
    %2837 = vmatpush1.bf16.xpose.msra.mxu0 0
    %2838 = vmatprep.subr.bf16.mxu0 0
    %2839 = vmatpush1.bf16.xpose.msra.mxu0 0
    %2840 = vmatprep.subr.bf16.mxu0 0
    %2841 = vmatpush1.bf16.xpose.msra.mxu0 0
    %2842 = vmatprep.subr.bf16.mxu0 0
    %2843 = vmatpush1.bf16.xpose.msra.mxu0 0
    %2844 = vmatprep.subr.bf16.mxu0 0
    %2845 = vmatpush1.bf16.xpose.msra.mxu0 0
    %2846 = vmatprep.subr.bf16.mxu0 0
    %2847 = vmatpush1.bf16.xpose.msra.mxu0 0
    %2848 = vmatprep.subr.bf16.mxu0 0
    %2849 = vmatpush1.bf16.xpose.msra.mxu0 %v2832
    %2850 = vmatprep.subr.bf16.mxu0 0
    %2851 = vmatpush2.bf16.xpose.msra.mxu0 0
    %2852 = vmatprep.subr.bf16.mxu0 0
    %2853 = vmatpush2.bf16.xpose.msra.mxu0 0
    %2854 = vmatprep.subr.bf16.mxu0 0
    %2855 = vmatpush2.bf16.xpose.msra.mxu0 0
    %2856 = vmatprep.subr.bf16.mxu0 0
    %2857 = vmatpush2.bf16.xpose.msra.mxu0 0
    %2858 = vmatprep.subr.bf16.mxu0 0
    %2859 = vmatpush2.bf16.xpose.msra.mxu0 0
    %2860 = vmatprep.subr.bf16.mxu0 0
    %2861 = vmatpush2.bf16.xpose.msra.mxu0 0
    %2862 = vmatprep.subr.bf16.mxu0 0
    %2863 = vmatpush2.bf16.xpose.msra.mxu0 0
    %2864 = vmatprep.subr.bf16.mxu0 0
    %2865 = vmatpush2.bf16.xpose.msra.mxu0 0
    %2866 = vmatprep.mubr.bf16.mxu0 0
    %2867 = vmatmul.mubr.bf16.gmra.mxu0 %v2829
    %v2868 = vpop.f32.mrf.mxu0
    %v2869 = vadd.f32 %v47, %v2868
    %v2870 = vpop.f32.mrf.mxu0
    %v2871 = vpop.f32.mrf.mxu0
    %v2872 = vpop.f32.mrf.mxu0
    %2873 = vdwg.mxu0
    %v2874 = vsel %vm268, %v2869, -inf
    %2875 = vmax.xlane.f32.xlu0 %v2874
    %v2876 = vpop.xlane.xlu0 %2875
    %v2877 = vsub.f32 %v2869, %v2876
    %v2878 = vmul.f32 %v2877, 1.442695
    %v2879 = vpow.pop %v2878
    %v2880 = vsel %vm268, %v2879, 0.0
    %2881 = vadd.xlane.f32.xlu0 %v2880
    %v2882 = vpop.xlane.xlu0 %2881
    %v2883 = vrcp.pop %v2882
    %v2884 = vmul.f32 %v2879, %v2883
    %v2885 = vpack.c.bf16 %v2884, %v2884
    %v2887 = vrot.slane %v2719, 4
    %v2889 = vsel %vm268, %v2885, 0
    %v2892 = vsel %vm330, %v2887, 0
    %2894 = vmatprep.subr.bf16.mxu0 0
    %2895 = vmatpush1.bf16.msra.mxu0 0
    %2896 = vmatprep.subr.bf16.mxu0 0
    %2897 = vmatpush1.bf16.msra.mxu0 0
    %2898 = vmatprep.subr.bf16.mxu0 0
    %2899 = vmatpush1.bf16.msra.mxu0 0
    %2900 = vmatprep.subr.bf16.mxu0 0
    %2901 = vmatpush1.bf16.msra.mxu0 0
    %2902 = vmatprep.subr.bf16.mxu0 0
    %2903 = vmatpush1.bf16.msra.mxu0 0
    %2904 = vmatprep.subr.bf16.mxu0 0
    %2905 = vmatpush1.bf16.msra.mxu0 0
    %2906 = vmatprep.subr.bf16.mxu0 0
    %2907 = vmatpush1.bf16.msra.mxu0 0
    %2908 = vmatprep.subr.bf16.mxu0 0
    %2909 = vmatpush1.bf16.msra.mxu0 %v2892
    %2910 = vmatprep.subr.bf16.mxu0 0
    %2911 = vmatpush2.bf16.msra.mxu0 0
    %2912 = vmatprep.subr.bf16.mxu0 0
    %2913 = vmatpush2.bf16.msra.mxu0 0
    %2914 = vmatprep.subr.bf16.mxu0 0
    %2915 = vmatpush2.bf16.msra.mxu0 0
    %2916 = vmatprep.subr.bf16.mxu0 0
    %2917 = vmatpush2.bf16.msra.mxu0 0
    %2918 = vmatprep.subr.bf16.mxu0 0
    %2919 = vmatpush2.bf16.msra.mxu0 0
    %2920 = vmatprep.subr.bf16.mxu0 0
    %2921 = vmatpush2.bf16.msra.mxu0 0
    %2922 = vmatprep.subr.bf16.mxu0 0
    %2923 = vmatpush2.bf16.msra.mxu0 0
    %2924 = vmatprep.subr.bf16.mxu0 0
    %2925 = vmatpush2.bf16.msra.mxu0 0
    %2926 = vmatprep.mubr.bf16.mxu0 0
    %2927 = vmatmul.mubr.bf16.gmra.mxu0 %v2889
    %v2928 = vpop.f32.mrf.mxu0
    %v2929 = vadd.f32 0.0, %v2928
    %v2930 = vpop.f32.mrf.mxu0
    %v2931 = vpop.f32.mrf.mxu0
    %v2932 = vpop.f32.mrf.mxu0
    %2933 = vdwg.mxu0
    %v2934 = vpack.c.bf16 %v2929, %v2819
    %s2935 = scalar_lea.vmem %s4, 20
    %v2936 = vld [vmem:[%s2935] sm:$0xf]
    %v2938 = vsel %vm268, %v2934, 0
    %v2941 = vsel %vm330, %v2936, 0
    %2943 = vmatprep.subr.bf16.mxu0 0
    %2944 = vmatpush1.bf16.msra.mxu0 0
    %2945 = vmatprep.subr.bf16.mxu0 0
    %2946 = vmatpush1.bf16.msra.mxu0 0
    %2947 = vmatprep.subr.bf16.mxu0 0
    %2948 = vmatpush1.bf16.msra.mxu0 0
    %2949 = vmatprep.subr.bf16.mxu0 0
    %2950 = vmatpush1.bf16.msra.mxu0 0
    %2951 = vmatprep.subr.bf16.mxu0 0
    %2952 = vmatpush1.bf16.msra.mxu0 0
    %2953 = vmatprep.subr.bf16.mxu0 0
    %2954 = vmatpush1.bf16.msra.mxu0 0
    %2955 = vmatprep.subr.bf16.mxu0 0
    %2956 = vmatpush1.bf16.msra.mxu0 0
    %2957 = vmatprep.subr.bf16.mxu0 0
    %2958 = vmatpush1.bf16.msra.mxu0 %v2941
    %2959 = vmatprep.subr.bf16.mxu0 0
    %2960 = vmatpush2.bf16.msra.mxu0 0
    %2961 = vmatprep.subr.bf16.mxu0 0
    %2962 = vmatpush2.bf16.msra.mxu0 0
    %2963 = vmatprep.subr.bf16.mxu0 0
    %2964 = vmatpush2.bf16.msra.mxu0 0
    %2965 = vmatprep.subr.bf16.mxu0 0
    %2966 = vmatpush2.bf16.msra.mxu0 0
    %2967 = vmatprep.subr.bf16.mxu0 0
    %2968 = vmatpush2.bf16.msra.mxu0 0
    %2969 = vmatprep.subr.bf16.mxu0 0
    %2970 = vmatpush2.bf16.msra.mxu0 0
    %2971 = vmatprep.subr.bf16.mxu0 0
    %2972 = vmatpush2.bf16.msra.mxu0 0
    %2973 = vmatprep.subr.bf16.mxu0 0
    %2974 = vmatpush2.bf16.msra.mxu0 0
    %2975 = vmatprep.mubr.bf16.mxu0 0
    %2976 = vmatmul.mubr.bf16.gmra.mxu0 %v2938
    %v2977 = vpop.f32.mrf.mxu0
    %v2978 = vadd.f32 0.0, %v2977
    %v2979 = vpop.f32.mrf.mxu0
    %v2980 = vpop.f32.mrf.mxu0
    %v2981 = vadd.f32 0.0, %v2980
    %v2982 = vpop.f32.mrf.mxu0
    %2983 = vdwg.mxu0
    %v2985 = vsel %vm268, %v2540, 0
    %v2988 = vsel %vm330, %v2542, 0
    %2990 = vmatprep.subr.bf16.mxu0 0
    %2991 = vmatpush1.bf16.msra.mxu0 0
    %2992 = vmatprep.subr.bf16.mxu0 0
    %2993 = vmatpush1.bf16.msra.mxu0 0
    %2994 = vmatprep.subr.bf16.mxu0 0
    %2995 = vmatpush1.bf16.msra.mxu0 0
    %2996 = vmatprep.subr.bf16.mxu0 0
    %2997 = vmatpush1.bf16.msra.mxu0 0
    %2998 = vmatprep.subr.bf16.mxu0 0
    %2999 = vmatpush1.bf16.msra.mxu0 0
    %3000 = vmatprep.subr.bf16.mxu0 0
    %3001 = vmatpush1.bf16.msra.mxu0 0
    %3002 = vmatprep.subr.bf16.mxu0 0
    %3003 = vmatpush1.bf16.msra.mxu0 0
    %3004 = vmatprep.subr.bf16.mxu0 0
    %3005 = vmatpush1.bf16.msra.mxu0 %v2988
    %3006 = vmatprep.subr.bf16.mxu0 0
    %3007 = vmatpush2.bf16.msra.mxu0 0
    %3008 = vmatprep.subr.bf16.mxu0 0
    %3009 = vmatpush2.bf16.msra.mxu0 0
    %3010 = vmatprep.subr.bf16.mxu0 0
    %3011 = vmatpush2.bf16.msra.mxu0 0
    %3012 = vmatprep.subr.bf16.mxu0 0
    %3013 = vmatpush2.bf16.msra.mxu0 0
    %3014 = vmatprep.subr.bf16.mxu0 0
    %3015 = vmatpush2.bf16.msra.mxu0 0
    %3016 = vmatprep.subr.bf16.mxu0 0
    %3017 = vmatpush2.bf16.msra.mxu0 0
    %3018 = vmatprep.subr.bf16.mxu0 0
    %3019 = vmatpush2.bf16.msra.mxu0 0
    %3020 = vmatprep.subr.bf16.mxu0 0
    %3021 = vmatpush2.bf16.msra.mxu0 0
    %3022 = vmatprep.mubr.bf16.mxu0 0
    %3023 = vmatmul.mubr.bf16.gmra.mxu0 %v2985
    %v3024 = vpop.f32.mrf.mxu0
    %v3025 = vadd.f32 %v2978, %v3024
    %v3026 = vpop.f32.mrf.mxu0
    %v3027 = vpop.f32.mrf.mxu0
    %v3028 = vadd.f32 %v2981, %v3027
    %v3029 = vpop.f32.mrf.mxu0
    %3030 = vdwg.mxu0
    %s3031 = scalar_lea.vmem %s1, 96
    %v3032 = vld [vmem:[%s3031] sm:$0xf]
    %v3033 = vld [vmem:[%s3031 + $0x4] sm:$0xf]
    %v3034 = vld [vmem:[%s3031 + $0x8] sm:$0xf]
    %v3035 = vld [vmem:[%s3031 + $0xc] sm:$0xf]
    %v3040 = vunpack.c.l.b16 %v3032
    %v3041 = vunpack.c.l.b16 %v3033
    %v3042 = vunpack.c.l.b16 %v3034
    %v3043 = vunpack.c.l.b16 %v3035
    %v3044 = vpack.c.b16 %v3041, %v3040
    %v3045 = vpack.c.b16 %v3043, %v3042
    %3048 = vmatprep.subr.bf16.mxu0 0
    %3049 = vmatpush1.bf16.msra.mxu0 0
    %3050 = vmatprep.subr.bf16.mxu0 0
    %3051 = vmatpush1.bf16.msra.mxu0 0
    %3052 = vmatprep.subr.bf16.mxu0 0
    %3053 = vmatpush1.bf16.msra.mxu0 0
    %3054 = vmatprep.subr.bf16.mxu0 0
    %3055 = vmatpush1.bf16.msra.mxu0 0
    %3056 = vmatprep.subr.bf16.mxu0 0
    %3057 = vmatpush1.bf16.msra.mxu0 0
    %3058 = vmatprep.subr.bf16.mxu0 0
    %3059 = vmatpush1.bf16.msra.mxu0 0
    %3060 = vmatprep.subr.bf16.mxu0 0
    %3061 = vmatpush1.bf16.msra.mxu0 %v3045
    %3062 = vmatprep.subr.bf16.mxu0 0
    %3063 = vmatpush1.bf16.msra.mxu0 %v3044
    %3064 = vmatprep.subr.bf16.mxu0 0
    %3065 = vmatpush2.bf16.msra.mxu0 0
    %3066 = vmatprep.subr.bf16.mxu0 0
    %3067 = vmatpush2.bf16.msra.mxu0 0
    %3068 = vmatprep.subr.bf16.mxu0 0
    %3069 = vmatpush2.bf16.msra.mxu0 0
    %3070 = vmatprep.subr.bf16.mxu0 0
    %3071 = vmatpush2.bf16.msra.mxu0 0
    %3072 = vmatprep.subr.bf16.mxu0 0
    %3073 = vmatpush2.bf16.msra.mxu0 0
    %3074 = vmatprep.subr.bf16.mxu0 0
    %3075 = vmatpush2.bf16.msra.mxu0 0
    %3076 = vmatprep.subr.bf16.mxu0 0
    %3077 = vmatpush2.bf16.msra.mxu0 0
    %3078 = vmatprep.subr.bf16.mxu0 0
    %3079 = vmatpush2.bf16.msra.mxu0 0
    %3080 = vmatprep.mubr.bf16.mxu0 0
    %3081 = vmatmul.mubr.bf16.gmra.mxu0 %v2164
    %v3082 = vpop.f32.mrf.mxu0
    %v3083 = vadd.f32 0.0, %v3082
    %v3084 = vpop.f32.mrf.mxu0
    %v3085 = vpop.f32.mrf.mxu0
    %v3086 = vadd.f32 0.0, %v3085
    %v3087 = vpop.f32.mrf.mxu0
    %3088 = vdwg.mxu0
    %v3089 = vpack.c.bf16 %v3086, %v3083
    %s3090 = scalar_lea.vmem %s2, 96
    %v3091 = vld [vmem:[%s3090] sm:$0xf]
    %v3092 = vld [vmem:[%s3090 + $0x4] sm:$0xf]
    %v3093 = vld [vmem:[%s3090 + $0x8] sm:$0xf]
    %v3094 = vld [vmem:[%s3090 + $0xc] sm:$0xf]
    %v3099 = vunpack.c.l.b16 %v3091
    %v3100 = vunpack.c.l.b16 %v3092
    %v3101 = vunpack.c.l.b16 %v3093
    %v3102 = vunpack.c.l.b16 %v3094
    %v3103 = vpack.c.b16 %v3100, %v3099
    %v3104 = vpack.c.b16 %v3102, %v3101
    %3107 = vmatprep.subr.bf16.mxu0 0
    %3108 = vmatpush1.bf16.msra.mxu0 0
    %3109 = vmatprep.subr.bf16.mxu0 0
    %3110 = vmatpush1.bf16.msra.mxu0 0
    %3111 = vmatprep.subr.bf16.mxu0 0
    %3112 = vmatpush1.bf16.msra.mxu0 0
    %3113 = vmatprep.subr.bf16.mxu0 0
    %3114 = vmatpush1.bf16.msra.mxu0 0
    %3115 = vmatprep.subr.bf16.mxu0 0
    %3116 = vmatpush1.bf16.msra.mxu0 0
    %3117 = vmatprep.subr.bf16.mxu0 0
    %3118 = vmatpush1.bf16.msra.mxu0 0
    %3119 = vmatprep.subr.bf16.mxu0 0
    %3120 = vmatpush1.bf16.msra.mxu0 %v3104
    %3121 = vmatprep.subr.bf16.mxu0 0
    %3122 = vmatpush1.bf16.msra.mxu0 %v3103
    %3123 = vmatprep.subr.bf16.mxu0 0
    %3124 = vmatpush2.bf16.msra.mxu0 0
    %3125 = vmatprep.subr.bf16.mxu0 0
    %3126 = vmatpush2.bf16.msra.mxu0 0
    %3127 = vmatprep.subr.bf16.mxu0 0
    %3128 = vmatpush2.bf16.msra.mxu0 0
    %3129 = vmatprep.subr.bf16.mxu0 0
    %3130 = vmatpush2.bf16.msra.mxu0 0
    %3131 = vmatprep.subr.bf16.mxu0 0
    %3132 = vmatpush2.bf16.msra.mxu0 0
    %3133 = vmatprep.subr.bf16.mxu0 0
    %3134 = vmatpush2.bf16.msra.mxu0 0
    %3135 = vmatprep.subr.bf16.mxu0 0
    %3136 = vmatpush2.bf16.msra.mxu0 0
    %3137 = vmatprep.subr.bf16.mxu0 0
    %3138 = vmatpush2.bf16.msra.mxu0 0
    %3139 = vmatprep.mubr.bf16.mxu0 0
    %3140 = vmatmul.mubr.bf16.gmra.mxu0 %v2164
    %v3141 = vpop.f32.mrf.mxu0
    %v3142 = vadd.f32 0.0, %v3141
    %v3143 = vpop.f32.mrf.mxu0
    %v3144 = vpop.f32.mrf.mxu0
    %v3145 = vadd.f32 0.0, %v3144
    %v3146 = vpop.f32.mrf.mxu0
    %3147 = vdwg.mxu0
    %v3148 = vpack.c.bf16 %v3145, %v3142
    %s3149 = scalar_lea.vmem %s3, 96
    %v3150 = vld [vmem:[%s3149] sm:$0xf]
    %v3151 = vld [vmem:[%s3149 + $0x4] sm:$0xf]
    %v3152 = vld [vmem:[%s3149 + $0x8] sm:$0xf]
    %v3153 = vld [vmem:[%s3149 + $0xc] sm:$0xf]
    %v3158 = vunpack.c.l.b16 %v3150
    %v3159 = vunpack.c.l.b16 %v3151
    %v3160 = vunpack.c.l.b16 %v3152
    %v3161 = vunpack.c.l.b16 %v3153
    %v3162 = vpack.c.b16 %v3159, %v3158
    %v3163 = vpack.c.b16 %v3161, %v3160
    %3166 = vmatprep.subr.bf16.mxu0 0
    %3167 = vmatpush1.bf16.msra.mxu0 0
    %3168 = vmatprep.subr.bf16.mxu0 0
    %3169 = vmatpush1.bf16.msra.mxu0 0
    %3170 = vmatprep.subr.bf16.mxu0 0
    %3171 = vmatpush1.bf16.msra.mxu0 0
    %3172 = vmatprep.subr.bf16.mxu0 0
    %3173 = vmatpush1.bf16.msra.mxu0 0
    %3174 = vmatprep.subr.bf16.mxu0 0
    %3175 = vmatpush1.bf16.msra.mxu0 0
    %3176 = vmatprep.subr.bf16.mxu0 0
    %3177 = vmatpush1.bf16.msra.mxu0 0
    %3178 = vmatprep.subr.bf16.mxu0 0
    %3179 = vmatpush1.bf16.msra.mxu0 %v3163
    %3180 = vmatprep.subr.bf16.mxu0 0
    %3181 = vmatpush1.bf16.msra.mxu0 %v3162
    %3182 = vmatprep.subr.bf16.mxu0 0
    %3183 = vmatpush2.bf16.msra.mxu0 0
    %3184 = vmatprep.subr.bf16.mxu0 0
    %3185 = vmatpush2.bf16.msra.mxu0 0
    %3186 = vmatprep.subr.bf16.mxu0 0
    %3187 = vmatpush2.bf16.msra.mxu0 0
    %3188 = vmatprep.subr.bf16.mxu0 0
    %3189 = vmatpush2.bf16.msra.mxu0 0
    %3190 = vmatprep.subr.bf16.mxu0 0
    %3191 = vmatpush2.bf16.msra.mxu0 0
    %3192 = vmatprep.subr.bf16.mxu0 0
    %3193 = vmatpush2.bf16.msra.mxu0 0
    %3194 = vmatprep.subr.bf16.mxu0 0
    %3195 = vmatpush2.bf16.msra.mxu0 0
    %3196 = vmatprep.subr.bf16.mxu0 0
    %3197 = vmatpush2.bf16.msra.mxu0 0
    %3198 = vmatprep.mubr.bf16.mxu0 0
    %3199 = vmatmul.mubr.bf16.gmra.mxu0 %v2164
    %v3200 = vpop.f32.mrf.mxu0
    %v3201 = vadd.f32 0.0, %v3200
    %v3202 = vpop.f32.mrf.mxu0
    %v3203 = vpop.f32.mrf.mxu0
    %v3204 = vadd.f32 0.0, %v3203
    %v3205 = vpop.f32.mrf.mxu0
    %3206 = vdwg.mxu0
    %v3207 = vpack.c.bf16 %v3204, %v3201
    %v3209 = vsel %vm268, %v3089, 0
    %v3212 = vsel %vm268, %v3148, 0
    %3214 = vmatprep.subr.bf16.mxu0 0
    %3215 = vmatpush1.bf16.xpose.msra.mxu0 0
    %3216 = vmatprep.subr.bf16.mxu0 0
    %3217 = vmatpush1.bf16.xpose.msra.mxu0 0
    %3218 = vmatprep.subr.bf16.mxu0 0
    %3219 = vmatpush1.bf16.xpose.msra.mxu0 0
    %3220 = vmatprep.subr.bf16.mxu0 0
    %3221 = vmatpush1.bf16.xpose.msra.mxu0 0
    %3222 = vmatprep.subr.bf16.mxu0 0
    %3223 = vmatpush1.bf16.xpose.msra.mxu0 0
    %3224 = vmatprep.subr.bf16.mxu0 0
    %3225 = vmatpush1.bf16.xpose.msra.mxu0 0
    %3226 = vmatprep.subr.bf16.mxu0 0
    %3227 = vmatpush1.bf16.xpose.msra.mxu0 0
    %3228 = vmatprep.subr.bf16.mxu0 0
    %3229 = vmatpush1.bf16.xpose.msra.mxu0 %v3212
    %3230 = vmatprep.subr.bf16.mxu0 0
    %3231 = vmatpush2.bf16.xpose.msra.mxu0 0
    %3232 = vmatprep.subr.bf16.mxu0 0
    %3233 = vmatpush2.bf16.xpose.msra.mxu0 0
    %3234 = vmatprep.subr.bf16.mxu0 0
    %3235 = vmatpush2.bf16.xpose.msra.mxu0 0
    %3236 = vmatprep.subr.bf16.mxu0 0
    %3237 = vmatpush2.bf16.xpose.msra.mxu0 0
    %3238 = vmatprep.subr.bf16.mxu0 0
    %3239 = vmatpush2.bf16.xpose.msra.mxu0 0
    %3240 = vmatprep.subr.bf16.mxu0 0
    %3241 = vmatpush2.bf16.xpose.msra.mxu0 0
    %3242 = vmatprep.subr.bf16.mxu0 0
    %3243 = vmatpush2.bf16.xpose.msra.mxu0 0
    %3244 = vmatprep.subr.bf16.mxu0 0
    %3245 = vmatpush2.bf16.xpose.msra.mxu0 0
    %3246 = vmatprep.mubr.bf16.mxu0 0
    %3247 = vmatmul.mubr.bf16.gmra.mxu0 %v3209
    %v3248 = vpop.f32.mrf.mxu0
    %v3249 = vadd.f32 %v47, %v3248
    %v3250 = vpop.f32.mrf.mxu0
    %v3251 = vpop.f32.mrf.mxu0
    %v3252 = vpop.f32.mrf.mxu0
    %3253 = vdwg.mxu0
    %v3254 = vsel %vm268, %v3249, -inf
    %3255 = vmax.xlane.f32.xlu0 %v3254
    %v3256 = vpop.xlane.xlu0 %3255
    %v3257 = vsub.f32 %v3249, %v3256
    %v3258 = vmul.f32 %v3257, 1.442695
    %v3259 = vpow.pop %v3258
    %v3260 = vsel %vm268, %v3259, 0.0
    %3261 = vadd.xlane.f32.xlu0 %v3260
    %v3262 = vpop.xlane.xlu0 %3261
    %v3263 = vrcp.pop %v3262
    %v3264 = vmul.f32 %v3259, %v3263
    %v3265 = vpack.c.bf16 %v3264, %v3264
    %v3267 = vsel %vm268, %v3265, 0
    %v3270 = vsel %vm330, %v3207, 0
    %3272 = vmatprep.subr.bf16.mxu0 0
    %3273 = vmatpush1.bf16.msra.mxu0 0
    %3274 = vmatprep.subr.bf16.mxu0 0
    %3275 = vmatpush1.bf16.msra.mxu0 0
    %3276 = vmatprep.subr.bf16.mxu0 0
    %3277 = vmatpush1.bf16.msra.mxu0 0
    %3278 = vmatprep.subr.bf16.mxu0 0
    %3279 = vmatpush1.bf16.msra.mxu0 0
    %3280 = vmatprep.subr.bf16.mxu0 0
    %3281 = vmatpush1.bf16.msra.mxu0 0
    %3282 = vmatprep.subr.bf16.mxu0 0
    %3283 = vmatpush1.bf16.msra.mxu0 0
    %3284 = vmatprep.subr.bf16.mxu0 0
    %3285 = vmatpush1.bf16.msra.mxu0 0
    %3286 = vmatprep.subr.bf16.mxu0 0
    %3287 = vmatpush1.bf16.msra.mxu0 %v3270
    %3288 = vmatprep.subr.bf16.mxu0 0
    %3289 = vmatpush2.bf16.msra.mxu0 0
    %3290 = vmatprep.subr.bf16.mxu0 0
    %3291 = vmatpush2.bf16.msra.mxu0 0
    %3292 = vmatprep.subr.bf16.mxu0 0
    %3293 = vmatpush2.bf16.msra.mxu0 0
    %3294 = vmatprep.subr.bf16.mxu0 0
    %3295 = vmatpush2.bf16.msra.mxu0 0
    %3296 = vmatprep.subr.bf16.mxu0 0
    %3297 = vmatpush2.bf16.msra.mxu0 0
    %3298 = vmatprep.subr.bf16.mxu0 0
    %3299 = vmatpush2.bf16.msra.mxu0 0
    %3300 = vmatprep.subr.bf16.mxu0 0
    %3301 = vmatpush2.bf16.msra.mxu0 0
    %3302 = vmatprep.subr.bf16.mxu0 0
    %3303 = vmatpush2.bf16.msra.mxu0 0
    %3304 = vmatprep.mubr.bf16.mxu0 0
    %3305 = vmatmul.mubr.bf16.gmra.mxu0 %v3267
    %v3306 = vpop.f32.mrf.mxu0
    %v3307 = vadd.f32 0.0, %v3306
    %v3308 = vpop.f32.mrf.mxu0
    %v3309 = vpop.f32.mrf.mxu0
    %v3310 = vpop.f32.mrf.mxu0
    %3311 = vdwg.mxu0
    %v3313 = vrot.slane %v3089, 4
    %v3315 = vrot.slane %v3148, 4
    %v3317 = vsel %vm268, %v3313, 0
    %v3320 = vsel %vm268, %v3315, 0
    %3322 = vmatprep.subr.bf16.mxu0 0
    %3323 = vmatpush1.bf16.xpose.msra.mxu0 0
    %3324 = vmatprep.subr.bf16.mxu0 0
    %3325 = vmatpush1.bf16.xpose.msra.mxu0 0
    %3326 = vmatprep.subr.bf16.mxu0 0
    %3327 = vmatpush1.bf16.xpose.msra.mxu0 0
    %3328 = vmatprep.subr.bf16.mxu0 0
    %3329 = vmatpush1.bf16.xpose.msra.mxu0 0
    %3330 = vmatprep.subr.bf16.mxu0 0
    %3331 = vmatpush1.bf16.xpose.msra.mxu0 0
    %3332 = vmatprep.subr.bf16.mxu0 0
    %3333 = vmatpush1.bf16.xpose.msra.mxu0 0
    %3334 = vmatprep.subr.bf16.mxu0 0
    %3335 = vmatpush1.bf16.xpose.msra.mxu0 0
    %3336 = vmatprep.subr.bf16.mxu0 0
    %3337 = vmatpush1.bf16.xpose.msra.mxu0 %v3320
    %3338 = vmatprep.subr.bf16.mxu0 0
    %3339 = vmatpush2.bf16.xpose.msra.mxu0 0
    %3340 = vmatprep.subr.bf16.mxu0 0
    %3341 = vmatpush2.bf16.xpose.msra.mxu0 0
    %3342 = vmatprep.subr.bf16.mxu0 0
    %3343 = vmatpush2.bf16.xpose.msra.mxu0 0
    %3344 = vmatprep.subr.bf16.mxu0 0
    %3345 = vmatpush2.bf16.xpose.msra.mxu0 0
    %3346 = vmatprep.subr.bf16.mxu0 0
    %3347 = vmatpush2.bf16.xpose.msra.mxu0 0
    %3348 = vmatprep.subr.bf16.mxu0 0
    %3349 = vmatpush2.bf16.xpose.msra.mxu0 0
    %3350 = vmatprep.subr.bf16.mxu0 0
    %3351 = vmatpush2.bf16.xpose.msra.mxu0 0
    %3352 = vmatprep.subr.bf16.mxu0 0
    %3353 = vmatpush2.bf16.xpose.msra.mxu0 0
    %3354 = vmatprep.mubr.bf16.mxu0 0
    %3355 = vmatmul.mubr.bf16.gmra.mxu0 %v3317
    %v3356 = vpop.f32.mrf.mxu0
    %v3357 = vadd.f32 %v47, %v3356
    %v3358 = vpop.f32.mrf.mxu0
    %v3359 = vpop.f32.mrf.mxu0
    %v3360 = vpop.f32.mrf.mxu0
    %3361 = vdwg.mxu0
    %v3362 = vsel %vm268, %v3357, -inf
    %3363 = vmax.xlane.f32.xlu0 %v3362
    %v3364 = vpop.xlane.xlu0 %3363
    %v3365 = vsub.f32 %v3357, %v3364
    %v3366 = vmul.f32 %v3365, 1.442695
    %v3367 = vpow.pop %v3366
    %v3368 = vsel %vm268, %v3367, 0.0
    %3369 = vadd.xlane.f32.xlu0 %v3368
    %v3370 = vpop.xlane.xlu0 %3369
    %v3371 = vrcp.pop %v3370
    %v3372 = vmul.f32 %v3367, %v3371
    %v3373 = vpack.c.bf16 %v3372, %v3372
    %v3375 = vrot.slane %v3207, 4
    %v3377 = vsel %vm268, %v3373, 0
    %v3380 = vsel %vm330, %v3375, 0
    %3382 = vmatprep.subr.bf16.mxu0 0
    %3383 = vmatpush1.bf16.msra.mxu0 0
    %3384 = vmatprep.subr.bf16.mxu0 0
    %3385 = vmatpush1.bf16.msra.mxu0 0
    %3386 = vmatprep.subr.bf16.mxu0 0
    %3387 = vmatpush1.bf16.msra.mxu0 0
    %3388 = vmatprep.subr.bf16.mxu0 0
    %3389 = vmatpush1.bf16.msra.mxu0 0
    %3390 = vmatprep.subr.bf16.mxu0 0
    %3391 = vmatpush1.bf16.msra.mxu0 0
    %3392 = vmatprep.subr.bf16.mxu0 0
    %3393 = vmatpush1.bf16.msra.mxu0 0
    %3394 = vmatprep.subr.bf16.mxu0 0
    %3395 = vmatpush1.bf16.msra.mxu0 0
    %3396 = vmatprep.subr.bf16.mxu0 0
    %3397 = vmatpush1.bf16.msra.mxu0 %v3380
    %3398 = vmatprep.subr.bf16.mxu0 0
    %3399 = vmatpush2.bf16.msra.mxu0 0
    %3400 = vmatprep.subr.bf16.mxu0 0
    %3401 = vmatpush2.bf16.msra.mxu0 0
    %3402 = vmatprep.subr.bf16.mxu0 0
    %3403 = vmatpush2.bf16.msra.mxu0 0
    %3404 = vmatprep.subr.bf16.mxu0 0
    %3405 = vmatpush2.bf16.msra.mxu0 0
    %3406 = vmatprep.subr.bf16.mxu0 0
    %3407 = vmatpush2.bf16.msra.mxu0 0
    %3408 = vmatprep.subr.bf16.mxu0 0
    %3409 = vmatpush2.bf16.msra.mxu0 0
    %3410 = vmatprep.subr.bf16.mxu0 0
    %3411 = vmatpush2.bf16.msra.mxu0 0
    %3412 = vmatprep.subr.bf16.mxu0 0
    %3413 = vmatpush2.bf16.msra.mxu0 0
    %3414 = vmatprep.mubr.bf16.mxu0 0
    %3415 = vmatmul.mubr.bf16.gmra.mxu0 %v3377
    %v3416 = vpop.f32.mrf.mxu0
    %v3417 = vadd.f32 0.0, %v3416
    %v3418 = vpop.f32.mrf.mxu0
    %v3419 = vpop.f32.mrf.mxu0
    %v3420 = vpop.f32.mrf.mxu0
    %3421 = vdwg.mxu0
    %v3422 = vpack.c.bf16 %v3417, %v3307
    %s3423 = scalar_lea.vmem %s4, 24
    %v3424 = vld [vmem:[%s3423] sm:$0xf]
    %v3426 = vsel %vm268, %v3422, 0
    %v3429 = vsel %vm330, %v3424, 0
    %3431 = vmatprep.subr.bf16.mxu0 0
    %3432 = vmatpush1.bf16.msra.mxu0 0
    %3433 = vmatprep.subr.bf16.mxu0 0
    %3434 = vmatpush1.bf16.msra.mxu0 0
    %3435 = vmatprep.subr.bf16.mxu0 0
    %3436 = vmatpush1.bf16.msra.mxu0 0
    %3437 = vmatprep.subr.bf16.mxu0 0
    %3438 = vmatpush1.bf16.msra.mxu0 0
    %3439 = vmatprep.subr.bf16.mxu0 0
    %3440 = vmatpush1.bf16.msra.mxu0 0
    %3441 = vmatprep.subr.bf16.mxu0 0
    %3442 = vmatpush1.bf16.msra.mxu0 0
    %3443 = vmatprep.subr.bf16.mxu0 0
    %3444 = vmatpush1.bf16.msra.mxu0 0
    %3445 = vmatprep.subr.bf16.mxu0 0
    %3446 = vmatpush1.bf16.msra.mxu0 %v3429
    %3447 = vmatprep.subr.bf16.mxu0 0
    %3448 = vmatpush2.bf16.msra.mxu0 0
    %3449 = vmatprep.subr.bf16.mxu0 0
    %3450 = vmatpush2.bf16.msra.mxu0 0
    %3451 = vmatprep.subr.bf16.mxu0 0
    %3452 = vmatpush2.bf16.msra.mxu0 0
    %3453 = vmatprep.subr.bf16.mxu0 0
    %3454 = vmatpush2.bf16.msra.mxu0 0
    %3455 = vmatprep.subr.bf16.mxu0 0
    %3456 = vmatpush2.bf16.msra.mxu0 0
    %3457 = vmatprep.subr.bf16.mxu0 0
    %3458 = vmatpush2.bf16.msra.mxu0 0
    %3459 = vmatprep.subr.bf16.mxu0 0
    %3460 = vmatpush2.bf16.msra.mxu0 0
    %3461 = vmatprep.subr.bf16.mxu0 0
    %3462 = vmatpush2.bf16.msra.mxu0 0
    %3463 = vmatprep.mubr.bf16.mxu0 0
    %3464 = vmatmul.mubr.bf16.gmra.mxu0 %v3426
    %v3465 = vpop.f32.mrf.mxu0
    %v3466 = vadd.f32 0.0, %v3465
    %v3467 = vpop.f32.mrf.mxu0
    %v3468 = vpop.f32.mrf.mxu0
    %v3469 = vadd.f32 0.0, %v3468
    %v3470 = vpop.f32.mrf.mxu0
    %3471 = vdwg.mxu0
    %v3472 = vadd.f32 %v3025, %v3466
    %v3473 = vadd.f32 %v3028, %v3469
    %s3474 = scalar_lea.vmem %s1, 112
    %v3475 = vld [vmem:[%s3474] sm:$0xf]
    %v3476 = vld [vmem:[%s3474 + $0x4] sm:$0xf]
    %v3477 = vld [vmem:[%s3474 + $0x8] sm:$0xf]
    %v3478 = vld [vmem:[%s3474 + $0xc] sm:$0xf]
    %v3483 = vunpack.c.l.b16 %v3475
    %v3484 = vunpack.c.l.b16 %v3476
    %v3485 = vunpack.c.l.b16 %v3477
    %v3486 = vunpack.c.l.b16 %v3478
    %v3487 = vpack.c.b16 %v3484, %v3483
    %v3488 = vpack.c.b16 %v3486, %v3485
    %3491 = vmatprep.subr.bf16.mxu0 0
    %3492 = vmatpush1.bf16.msra.mxu0 0
    %3493 = vmatprep.subr.bf16.mxu0 0
    %3494 = vmatpush1.bf16.msra.mxu0 0
    %3495 = vmatprep.subr.bf16.mxu0 0
    %3496 = vmatpush1.bf16.msra.mxu0 0
    %3497 = vmatprep.subr.bf16.mxu0 0
    %3498 = vmatpush1.bf16.msra.mxu0 0
    %3499 = vmatprep.subr.bf16.mxu0 0
    %3500 = vmatpush1.bf16.msra.mxu0 0
    %3501 = vmatprep.subr.bf16.mxu0 0
    %3502 = vmatpush1.bf16.msra.mxu0 0
    %3503 = vmatprep.subr.bf16.mxu0 0
    %3504 = vmatpush1.bf16.msra.mxu0 %v3488
    %3505 = vmatprep.subr.bf16.mxu0 0
    %3506 = vmatpush1.bf16.msra.mxu0 %v3487
    %3507 = vmatprep.subr.bf16.mxu0 0
    %3508 = vmatpush2.bf16.msra.mxu0 0
    %3509 = vmatprep.subr.bf16.mxu0 0
    %3510 = vmatpush2.bf16.msra.mxu0 0
    %3511 = vmatprep.subr.bf16.mxu0 0
    %3512 = vmatpush2.bf16.msra.mxu0 0
    %3513 = vmatprep.subr.bf16.mxu0 0
    %3514 = vmatpush2.bf16.msra.mxu0 0
    %3515 = vmatprep.subr.bf16.mxu0 0
    %3516 = vmatpush2.bf16.msra.mxu0 0
    %3517 = vmatprep.subr.bf16.mxu0 0
    %3518 = vmatpush2.bf16.msra.mxu0 0
    %3519 = vmatprep.subr.bf16.mxu0 0
    %3520 = vmatpush2.bf16.msra.mxu0 0
    %3521 = vmatprep.subr.bf16.mxu0 0
    %3522 = vmatpush2.bf16.msra.mxu0 0
    %3523 = vmatprep.mubr.bf16.mxu0 0
    %3524 = vmatmul.mubr.bf16.gmra.mxu0 %v2164
    %v3525 = vpop.f32.mrf.mxu0
    %v3526 = vadd.f32 0.0, %v3525
    %v3527 = vpop.f32.mrf.mxu0
    %v3528 = vpop.f32.mrf.mxu0
    %v3529 = vadd.f32 0.0, %v3528
    %v3530 = vpop.f32.mrf.mxu0
    %3531 = vdwg.mxu0
    %v3532 = vpack.c.bf16 %v3529, %v3526
    %s3533 = scalar_lea.vmem %s2, 112
    %v3534 = vld [vmem:[%s3533] sm:$0xf]
    %v3535 = vld [vmem:[%s3533 + $0x4] sm:$0xf]
    %v3536 = vld [vmem:[%s3533 + $0x8] sm:$0xf]
    %v3537 = vld [vmem:[%s3533 + $0xc] sm:$0xf]
    %v3542 = vunpack.c.l.b16 %v3534
    %v3543 = vunpack.c.l.b16 %v3535
    %v3544 = vunpack.c.l.b16 %v3536
    %v3545 = vunpack.c.l.b16 %v3537
    %v3546 = vpack.c.b16 %v3543, %v3542
    %v3547 = vpack.c.b16 %v3545, %v3544
    %3550 = vmatprep.subr.bf16.mxu0 0
    %3551 = vmatpush1.bf16.msra.mxu0 0
    %3552 = vmatprep.subr.bf16.mxu0 0
    %3553 = vmatpush1.bf16.msra.mxu0 0
    %3554 = vmatprep.subr.bf16.mxu0 0
    %3555 = vmatpush1.bf16.msra.mxu0 0
    %3556 = vmatprep.subr.bf16.mxu0 0
    %3557 = vmatpush1.bf16.msra.mxu0 0
    %3558 = vmatprep.subr.bf16.mxu0 0
    %3559 = vmatpush1.bf16.msra.mxu0 0
    %3560 = vmatprep.subr.bf16.mxu0 0
    %3561 = vmatpush1.bf16.msra.mxu0 0
    %3562 = vmatprep.subr.bf16.mxu0 0
    %3563 = vmatpush1.bf16.msra.mxu0 %v3547
    %3564 = vmatprep.subr.bf16.mxu0 0
    %3565 = vmatpush1.bf16.msra.mxu0 %v3546
    %3566 = vmatprep.subr.bf16.mxu0 0
    %3567 = vmatpush2.bf16.msra.mxu0 0
    %3568 = vmatprep.subr.bf16.mxu0 0
    %3569 = vmatpush2.bf16.msra.mxu0 0
    %3570 = vmatprep.subr.bf16.mxu0 0
    %3571 = vmatpush2.bf16.msra.mxu0 0
    %3572 = vmatprep.subr.bf16.mxu0 0
    %3573 = vmatpush2.bf16.msra.mxu0 0
    %3574 = vmatprep.subr.bf16.mxu0 0
    %3575 = vmatpush2.bf16.msra.mxu0 0
    %3576 = vmatprep.subr.bf16.mxu0 0
    %3577 = vmatpush2.bf16.msra.mxu0 0
    %3578 = vmatprep.subr.bf16.mxu0 0
    %3579 = vmatpush2.bf16.msra.mxu0 0
    %3580 = vmatprep.subr.bf16.mxu0 0
    %3581 = vmatpush2.bf16.msra.mxu0 0
    %3582 = vmatprep.mubr.bf16.mxu0 0
    %3583 = vmatmul.mubr.bf16.gmra.mxu0 %v2164
    %v3584 = vpop.f32.mrf.mxu0
    %v3585 = vadd.f32 0.0, %v3584
    %v3586 = vpop.f32.mrf.mxu0
    %v3587 = vpop.f32.mrf.mxu0
    %v3588 = vadd.f32 0.0, %v3587
    %v3589 = vpop.f32.mrf.mxu0
    %3590 = vdwg.mxu0
    %v3591 = vpack.c.bf16 %v3588, %v3585
    %s3592 = scalar_lea.vmem %s3, 112
    %v3593 = vld [vmem:[%s3592] sm:$0xf]
    %v3594 = vld [vmem:[%s3592 + $0x4] sm:$0xf]
    %v3595 = vld [vmem:[%s3592 + $0x8] sm:$0xf]
    %v3596 = vld [vmem:[%s3592 + $0xc] sm:$0xf]
    %v3601 = vunpack.c.l.b16 %v3593
    %v3602 = vunpack.c.l.b16 %v3594
    %v3603 = vunpack.c.l.b16 %v3595
    %v3604 = vunpack.c.l.b16 %v3596
    %v3605 = vpack.c.b16 %v3602, %v3601
    %v3606 = vpack.c.b16 %v3604, %v3603
    %3609 = vmatprep.subr.bf16.mxu0 0
    %3610 = vmatpush1.bf16.msra.mxu0 0
    %3611 = vmatprep.subr.bf16.mxu0 0
    %3612 = vmatpush1.bf16.msra.mxu0 0
    %3613 = vmatprep.subr.bf16.mxu0 0
    %3614 = vmatpush1.bf16.msra.mxu0 0
    %3615 = vmatprep.subr.bf16.mxu0 0
    %3616 = vmatpush1.bf16.msra.mxu0 0
    %3617 = vmatprep.subr.bf16.mxu0 0
    %3618 = vmatpush1.bf16.msra.mxu0 0
    %3619 = vmatprep.subr.bf16.mxu0 0
    %3620 = vmatpush1.bf16.msra.mxu0 0
    %3621 = vmatprep.subr.bf16.mxu0 0
    %3622 = vmatpush1.bf16.msra.mxu0 %v3606
    %3623 = vmatprep.subr.bf16.mxu0 0
    %3624 = vmatpush1.bf16.msra.mxu0 %v3605
    %3625 = vmatprep.subr.bf16.mxu0 0
    %3626 = vmatpush2.bf16.msra.mxu0 0
    %3627 = vmatprep.subr.bf16.mxu0 0
    %3628 = vmatpush2.bf16.msra.mxu0 0
    %3629 = vmatprep.subr.bf16.mxu0 0
    %3630 = vmatpush2.bf16.msra.mxu0 0
    %3631 = vmatprep.subr.bf16.mxu0 0
    %3632 = vmatpush2.bf16.msra.mxu0 0
    %3633 = vmatprep.subr.bf16.mxu0 0
    %3634 = vmatpush2.bf16.msra.mxu0 0
    %3635 = vmatprep.subr.bf16.mxu0 0
    %3636 = vmatpush2.bf16.msra.mxu0 0
    %3637 = vmatprep.subr.bf16.mxu0 0
    %3638 = vmatpush2.bf16.msra.mxu0 0
    %3639 = vmatprep.subr.bf16.mxu0 0
    %3640 = vmatpush2.bf16.msra.mxu0 0
    %3641 = vmatprep.mubr.bf16.mxu0 0
    %3642 = vmatmul.mubr.bf16.gmra.mxu0 %v2164
    %v3643 = vpop.f32.mrf.mxu0
    %v3644 = vadd.f32 0.0, %v3643
    %v3645 = vpop.f32.mrf.mxu0
    %v3646 = vpop.f32.mrf.mxu0
    %v3647 = vadd.f32 0.0, %v3646
    %v3648 = vpop.f32.mrf.mxu0
    %3649 = vdwg.mxu0
    %v3650 = vpack.c.bf16 %v3647, %v3644
    %v3652 = vsel %vm268, %v3532, 0
    %v3655 = vsel %vm268, %v3591, 0
    %3657 = vmatprep.subr.bf16.mxu0 0
    %3658 = vmatpush1.bf16.xpose.msra.mxu0 0
    %3659 = vmatprep.subr.bf16.mxu0 0
    %3660 = vmatpush1.bf16.xpose.msra.mxu0 0
    %3661 = vmatprep.subr.bf16.mxu0 0
    %3662 = vmatpush1.bf16.xpose.msra.mxu0 0
    %3663 = vmatprep.subr.bf16.mxu0 0
    %3664 = vmatpush1.bf16.xpose.msra.mxu0 0
    %3665 = vmatprep.subr.bf16.mxu0 0
    %3666 = vmatpush1.bf16.xpose.msra.mxu0 0
    %3667 = vmatprep.subr.bf16.mxu0 0
    %3668 = vmatpush1.bf16.xpose.msra.mxu0 0
    %3669 = vmatprep.subr.bf16.mxu0 0
    %3670 = vmatpush1.bf16.xpose.msra.mxu0 0
    %3671 = vmatprep.subr.bf16.mxu0 0
    %3672 = vmatpush1.bf16.xpose.msra.mxu0 %v3655
    %3673 = vmatprep.subr.bf16.mxu0 0
    %3674 = vmatpush2.bf16.xpose.msra.mxu0 0
    %3675 = vmatprep.subr.bf16.mxu0 0
    %3676 = vmatpush2.bf16.xpose.msra.mxu0 0
    %3677 = vmatprep.subr.bf16.mxu0 0
    %3678 = vmatpush2.bf16.xpose.msra.mxu0 0
    %3679 = vmatprep.subr.bf16.mxu0 0
    %3680 = vmatpush2.bf16.xpose.msra.mxu0 0
    %3681 = vmatprep.subr.bf16.mxu0 0
    %3682 = vmatpush2.bf16.xpose.msra.mxu0 0
    %3683 = vmatprep.subr.bf16.mxu0 0
    %3684 = vmatpush2.bf16.xpose.msra.mxu0 0
    %3685 = vmatprep.subr.bf16.mxu0 0
    %3686 = vmatpush2.bf16.xpose.msra.mxu0 0
    %3687 = vmatprep.subr.bf16.mxu0 0
    %3688 = vmatpush2.bf16.xpose.msra.mxu0 0
    %3689 = vmatprep.mubr.bf16.mxu0 0
    %3690 = vmatmul.mubr.bf16.gmra.mxu0 %v3652
    %v3691 = vpop.f32.mrf.mxu0
    %v3692 = vadd.f32 %v47, %v3691
    %v3693 = vpop.f32.mrf.mxu0
    %v3694 = vpop.f32.mrf.mxu0
    %v3695 = vpop.f32.mrf.mxu0
    %3696 = vdwg.mxu0
    %v3697 = vsel %vm268, %v3692, -inf
    %3698 = vmax.xlane.f32.xlu0 %v3697
    %v3699 = vpop.xlane.xlu0 %3698
    %v3700 = vsub.f32 %v3692, %v3699
    %v3701 = vmul.f32 %v3700, 1.442695
    %v3702 = vpow.pop %v3701
    %v3703 = vsel %vm268, %v3702, 0.0
    %3704 = vadd.xlane.f32.xlu0 %v3703
    %v3705 = vpop.xlane.xlu0 %3704
    %v3706 = vrcp.pop %v3705
    %v3707 = vmul.f32 %v3702, %v3706
    %v3708 = vpack.c.bf16 %v3707, %v3707
    %v3710 = vsel %vm268, %v3708, 0
    %v3713 = vsel %vm330, %v3650, 0
    %3715 = vmatprep.subr.bf16.mxu0 0
    %3716 = vmatpush1.bf16.msra.mxu0 0
    %3717 = vmatprep.subr.bf16.mxu0 0
    %3718 = vmatpush1.bf16.msra.mxu0 0
    %3719 = vmatprep.subr.bf16.mxu0 0
    %3720 = vmatpush1.bf16.msra.mxu0 0
    %3721 = vmatprep.subr.bf16.mxu0 0
    %3722 = vmatpush1.bf16.msra.mxu0 0
    %3723 = vmatprep.subr.bf16.mxu0 0
    %3724 = vmatpush1.bf16.msra.mxu0 0
    %3725 = vmatprep.subr.bf16.mxu0 0
    %3726 = vmatpush1.bf16.msra.mxu0 0
    %3727 = vmatprep.subr.bf16.mxu0 0
    %3728 = vmatpush1.bf16.msra.mxu0 0
    %3729 = vmatprep.subr.bf16.mxu0 0
    %3730 = vmatpush1.bf16.msra.mxu0 %v3713
    %3731 = vmatprep.subr.bf16.mxu0 0
    %3732 = vmatpush2.bf16.msra.mxu0 0
    %3733 = vmatprep.subr.bf16.mxu0 0
    %3734 = vmatpush2.bf16.msra.mxu0 0
    %3735 = vmatprep.subr.bf16.mxu0 0
    %3736 = vmatpush2.bf16.msra.mxu0 0
    %3737 = vmatprep.subr.bf16.mxu0 0
    %3738 = vmatpush2.bf16.msra.mxu0 0
    %3739 = vmatprep.subr.bf16.mxu0 0
    %3740 = vmatpush2.bf16.msra.mxu0 0
    %3741 = vmatprep.subr.bf16.mxu0 0
    %3742 = vmatpush2.bf16.msra.mxu0 0
    %3743 = vmatprep.subr.bf16.mxu0 0
    %3744 = vmatpush2.bf16.msra.mxu0 0
    %3745 = vmatprep.subr.bf16.mxu0 0
    %3746 = vmatpush2.bf16.msra.mxu0 0
    %3747 = vmatprep.mubr.bf16.mxu0 0
    %3748 = vmatmul.mubr.bf16.gmra.mxu0 %v3710
    %v3749 = vpop.f32.mrf.mxu0
    %v3750 = vadd.f32 0.0, %v3749
    %v3751 = vpop.f32.mrf.mxu0
    %v3752 = vpop.f32.mrf.mxu0
    %v3753 = vpop.f32.mrf.mxu0
    %3754 = vdwg.mxu0
    %v3756 = vrot.slane %v3532, 4
    %v3758 = vrot.slane %v3591, 4
    %v3760 = vsel %vm268, %v3756, 0
    %v3763 = vsel %vm268, %v3758, 0
    %3765 = vmatprep.subr.bf16.mxu0 0
    %3766 = vmatpush1.bf16.xpose.msra.mxu0 0
    %3767 = vmatprep.subr.bf16.mxu0 0
    %3768 = vmatpush1.bf16.xpose.msra.mxu0 0
    %3769 = vmatprep.subr.bf16.mxu0 0
    %3770 = vmatpush1.bf16.xpose.msra.mxu0 0
    %3771 = vmatprep.subr.bf16.mxu0 0
    %3772 = vmatpush1.bf16.xpose.msra.mxu0 0
    %3773 = vmatprep.subr.bf16.mxu0 0
    %3774 = vmatpush1.bf16.xpose.msra.mxu0 0
    %3775 = vmatprep.subr.bf16.mxu0 0
    %3776 = vmatpush1.bf16.xpose.msra.mxu0 0
    %3777 = vmatprep.subr.bf16.mxu0 0
    %3778 = vmatpush1.bf16.xpose.msra.mxu0 0
    %3779 = vmatprep.subr.bf16.mxu0 0
    %3780 = vmatpush1.bf16.xpose.msra.mxu0 %v3763
    %3781 = vmatprep.subr.bf16.mxu0 0
    %3782 = vmatpush2.bf16.xpose.msra.mxu0 0
    %3783 = vmatprep.subr.bf16.mxu0 0
    %3784 = vmatpush2.bf16.xpose.msra.mxu0 0
    %3785 = vmatprep.subr.bf16.mxu0 0
    %3786 = vmatpush2.bf16.xpose.msra.mxu0 0
    %3787 = vmatprep.subr.bf16.mxu0 0
    %3788 = vmatpush2.bf16.xpose.msra.mxu0 0
    %3789 = vmatprep.subr.bf16.mxu0 0
    %3790 = vmatpush2.bf16.xpose.msra.mxu0 0
    %3791 = vmatprep.subr.bf16.mxu0 0
    %3792 = vmatpush2.bf16.xpose.msra.mxu0 0
    %3793 = vmatprep.subr.bf16.mxu0 0
    %3794 = vmatpush2.bf16.xpose.msra.mxu0 0
    %3795 = vmatprep.subr.bf16.mxu0 0
    %3796 = vmatpush2.bf16.xpose.msra.mxu0 0
    %3797 = vmatprep.mubr.bf16.mxu0 0
    %3798 = vmatmul.mubr.bf16.gmra.mxu0 %v3760
    %v3799 = vpop.f32.mrf.mxu0
    %v3800 = vadd.f32 %v47, %v3799
    %v3801 = vpop.f32.mrf.mxu0
    %v3802 = vpop.f32.mrf.mxu0
    %v3803 = vpop.f32.mrf.mxu0
    %3804 = vdwg.mxu0
    %v3805 = vsel %vm268, %v3800, -inf
    %3806 = vmax.xlane.f32.xlu0 %v3805
    %v3807 = vpop.xlane.xlu0 %3806
    %v3808 = vsub.f32 %v3800, %v3807
    %v3809 = vmul.f32 %v3808, 1.442695
    %v3810 = vpow.pop %v3809
    %v3811 = vsel %vm268, %v3810, 0.0
    %3812 = vadd.xlane.f32.xlu0 %v3811
    %v3813 = vpop.xlane.xlu0 %3812
    %v3814 = vrcp.pop %v3813
    %v3815 = vmul.f32 %v3810, %v3814
    %v3816 = vpack.c.bf16 %v3815, %v3815
    %v3818 = vrot.slane %v3650, 4
    %v3820 = vsel %vm268, %v3816, 0
    %v3823 = vsel %vm330, %v3818, 0
    %3825 = vmatprep.subr.bf16.mxu0 0
    %3826 = vmatpush1.bf16.msra.mxu0 0
    %3827 = vmatprep.subr.bf16.mxu0 0
    %3828 = vmatpush1.bf16.msra.mxu0 0
    %3829 = vmatprep.subr.bf16.mxu0 0
    %3830 = vmatpush1.bf16.msra.mxu0 0
    %3831 = vmatprep.subr.bf16.mxu0 0
    %3832 = vmatpush1.bf16.msra.mxu0 0
    %3833 = vmatprep.subr.bf16.mxu0 0
    %3834 = vmatpush1.bf16.msra.mxu0 0
    %3835 = vmatprep.subr.bf16.mxu0 0
    %3836 = vmatpush1.bf16.msra.mxu0 0
    %3837 = vmatprep.subr.bf16.mxu0 0
    %3838 = vmatpush1.bf16.msra.mxu0 0
    %3839 = vmatprep.subr.bf16.mxu0 0
    %3840 = vmatpush1.bf16.msra.mxu0 %v3823
    %3841 = vmatprep.subr.bf16.mxu0 0
    %3842 = vmatpush2.bf16.msra.mxu0 0
    %3843 = vmatprep.subr.bf16.mxu0 0
    %3844 = vmatpush2.bf16.msra.mxu0 0
    %3845 = vmatprep.subr.bf16.mxu0 0
    %3846 = vmatpush2.bf16.msra.mxu0 0
    %3847 = vmatprep.subr.bf16.mxu0 0
    %3848 = vmatpush2.bf16.msra.mxu0 0
    %3849 = vmatprep.subr.bf16.mxu0 0
    %3850 = vmatpush2.bf16.msra.mxu0 0
    %3851 = vmatprep.subr.bf16.mxu0 0
    %3852 = vmatpush2.bf16.msra.mxu0 0
    %3853 = vmatprep.subr.bf16.mxu0 0
    %3854 = vmatpush2.bf16.msra.mxu0 0
    %3855 = vmatprep.subr.bf16.mxu0 0
    %3856 = vmatpush2.bf16.msra.mxu0 0
    %3857 = vmatprep.mubr.bf16.mxu0 0
    %3858 = vmatmul.mubr.bf16.gmra.mxu0 %v3820
    %v3859 = vpop.f32.mrf.mxu0
    %v3860 = vadd.f32 0.0, %v3859
    %v3861 = vpop.f32.mrf.mxu0
    %v3862 = vpop.f32.mrf.mxu0
    %v3863 = vpop.f32.mrf.mxu0
    %3864 = vdwg.mxu0
    %v3865 = vpack.c.bf16 %v3860, %v3750
    %s3866 = scalar_lea.vmem %s4, 28
    %v3867 = vld [vmem:[%s3866] sm:$0xf]
    %v3869 = vsel %vm268, %v3865, 0
    %v3872 = vsel %vm330, %v3867, 0
    %3874 = vmatprep.subr.bf16.mxu0 0
    %3875 = vmatpush1.bf16.msra.mxu0 0
    %3876 = vmatprep.subr.bf16.mxu0 0
    %3877 = vmatpush1.bf16.msra.mxu0 0
    %3878 = vmatprep.subr.bf16.mxu0 0
    %3879 = vmatpush1.bf16.msra.mxu0 0
    %3880 = vmatprep.subr.bf16.mxu0 0
    %3881 = vmatpush1.bf16.msra.mxu0 0
    %3882 = vmatprep.subr.bf16.mxu0 0
    %3883 = vmatpush1.bf16.msra.mxu0 0
    %3884 = vmatprep.subr.bf16.mxu0 0
    %3885 = vmatpush1.bf16.msra.mxu0 0
    %3886 = vmatprep.subr.bf16.mxu0 0
    %3887 = vmatpush1.bf16.msra.mxu0 0
    %3888 = vmatprep.subr.bf16.mxu0 0
    %3889 = vmatpush1.bf16.msra.mxu0 %v3872
    %3890 = vmatprep.subr.bf16.mxu0 0
    %3891 = vmatpush2.bf16.msra.mxu0 0
    %3892 = vmatprep.subr.bf16.mxu0 0
    %3893 = vmatpush2.bf16.msra.mxu0 0
    %3894 = vmatprep.subr.bf16.mxu0 0
    %3895 = vmatpush2.bf16.msra.mxu0 0
    %3896 = vmatprep.subr.bf16.mxu0 0
    %3897 = vmatpush2.bf16.msra.mxu0 0
    %3898 = vmatprep.subr.bf16.mxu0 0
    %3899 = vmatpush2.bf16.msra.mxu0 0
    %3900 = vmatprep.subr.bf16.mxu0 0
    %3901 = vmatpush2.bf16.msra.mxu0 0
    %3902 = vmatprep.subr.bf16.mxu0 0
    %3903 = vmatpush2.bf16.msra.mxu0 0
    %3904 = vmatprep.subr.bf16.mxu0 0
    %3905 = vmatpush2.bf16.msra.mxu0 0
    %3906 = vmatprep.mubr.bf16.mxu0 0
    %3907 = vmatmul.mubr.bf16.gmra.mxu0 %v3869
    %v3908 = vpop.f32.mrf.mxu0
    %v3909 = vadd.f32 0.0, %v3908
    %v3910 = vpop.f32.mrf.mxu0
    %v3911 = vpop.f32.mrf.mxu0
    %v3912 = vadd.f32 0.0, %v3911
    %v3913 = vpop.f32.mrf.mxu0
    %3914 = vdwg.mxu0
    %v3915 = vadd.f32 %v3472, %v3909
    %v3916 = vadd.f32 %v3473, %v3912
    %v3917 = vlaneseq
    %v3918 = vshrl.u32 %v3917, 7
    %v3919 = vsub.s32 4, %v3918
    %v3920 = vrot.slane %v2104, %v3919
    %v3921 = vadd.f32 %v3915, %v3920
    %v3922 = vadd.f32 %v3916, %v3920
    %v3923 = vadd.f32 %v3921, %v2101
    %v3924 = vadd.f32 %v3922, %v2102
    %v3925 = vsel %vm50, %v3923, 0.0
    %3926 = vadd.xlane.f32.xlu0 %v3925
    %v3927 = vpop.xlane.xlu0 %3926
    %v3928 = vsel %vm50, %v3924, 0.0
    %3929 = vadd.xlane.f32.xlu0 %v3928
    %v3930 = vpop.xlane.xlu0 %3929
    %v3931 = vmul.f32 %v3927, %v57
    %v3932 = vmul.f32 %v3930, %v57
    %v3933 = vsub.f32 %v3923, %v3931
    %v3934 = vsub.f32 %v3924, %v3932
    %v3935 = vmul.f32 %v3933, %v3933
    %v3936 = vmul.f32 %v3934, %v3934
    %v3937 = vsel %vm50, %v3935, 0.0
    %3938 = vadd.xlane.f32.xlu0 %v3937
    %v3939 = vpop.xlane.xlu0 %3938
    %v3940 = vsel %vm50, %v3936, 0.0
    %3941 = vadd.xlane.f32.xlu0 %v3940
    %v3942 = vpop.xlane.xlu0 %3941
    %v3943 = vmul.f32 %v3939, %v57
    %v3944 = vmul.f32 %v3942, %v57
    %v3945 = vadd.f32 %v3943, 1e-05
    %v3946 = vadd.f32 %v3944, 1e-05
    %v3947 = vrsqrt.pop %v3945
    %v3948 = vrsqrt.pop %v3946
    %v3949 = vmul.f32 %v3933, %v3947
    %v3950 = vmul.f32 %v3934, %v3948
    %v3951 = vlaneseq
    %v3952 = vshrl.u32 %v3951, 7
    %v3953 = vsub.s32 2, %v3952
    %v3954 = vrot.slane %v2104, %v3953
    %v3955 = vmul.f32 %v3954, %v3949
    %v3956 = vmul.f32 %v3954, %v3950
    %v3957 = vlaneseq
    %v3958 = vshrl.u32 %v3957, 7
    %v3959 = vsub.s32 3, %v3958
    %v3960 = vrot.slane %v2104, %v3959
    %v3961 = vadd.f32 %v3955, %v3960
    %v3962 = vadd.f32 %v3956, %v3960
    %v3963 = vpack.c.bf16 %v3962, %v3961
    %s3964 = scalar_lea.vmem %s5, 16
    %v3965 = vld [vmem:[%s3964] sm:$0xf]
    %v3966 = vld [vmem:[%s3964 + $0x4] sm:$0xf]
    %v3967 = vld [vmem:[%s3964 + $0x8] sm:$0xf]
    %v3968 = vld [vmem:[%s3964 + $0xc] sm:$0xf]
    %v3970 = vlaneseq
    %v3971 = vshrl.u32 %v3970, 7
    %v3972 = vsub.s32 0, %v3971
    %v3973 = vrot.slane %v2106, %v3972
    %v3979 = vunpack.c.l.b16 %v3965
    %v3980 = vunpack.c.l.b16 %v3966
    %v3981 = vunpack.c.l.b16 %v3967
    %v3982 = vunpack.c.l.b16 %v3968
    %v3983 = vpack.c.b16 %v3980, %v3979
    %v3984 = vpack.c.b16 %v3982, %v3981
    %v3988 = vsel %vm50, %v3963, 0
    %3990 = vmatprep.subr.bf16.mxu0 0
    %3991 = vmatpush1.bf16.msra.mxu0 0
    %3992 = vmatprep.subr.bf16.mxu0 0
    %3993 = vmatpush1.bf16.msra.mxu0 0
    %3994 = vmatprep.subr.bf16.mxu0 0
    %3995 = vmatpush1.bf16.msra.mxu0 0
    %3996 = vmatprep.subr.bf16.mxu0 0
    %3997 = vmatpush1.bf16.msra.mxu0 0
    %3998 = vmatprep.subr.bf16.mxu0 0
    %3999 = vmatpush1.bf16.msra.mxu0 0
    %4000 = vmatprep.subr.bf16.mxu0 0
    %4001 = vmatpush1.bf16.msra.mxu0 0
    %4002 = vmatprep.subr.bf16.mxu0 0
    %4003 = vmatpush1.bf16.msra.mxu0 %v3984
    %4004 = vmatprep.subr.bf16.mxu0 0
    %4005 = vmatpush1.bf16.msra.mxu0 %v3983
    %4006 = vmatprep.subr.bf16.mxu0 0
    %4007 = vmatpush2.bf16.msra.mxu0 0
    %4008 = vmatprep.subr.bf16.mxu0 0
    %4009 = vmatpush2.bf16.msra.mxu0 0
    %4010 = vmatprep.subr.bf16.mxu0 0
    %4011 = vmatpush2.bf16.msra.mxu0 0
    %4012 = vmatprep.subr.bf16.mxu0 0
    %4013 = vmatpush2.bf16.msra.mxu0 0
    %4014 = vmatprep.subr.bf16.mxu0 0
    %4015 = vmatpush2.bf16.msra.mxu0 0
    %4016 = vmatprep.subr.bf16.mxu0 0
    %4017 = vmatpush2.bf16.msra.mxu0 0
    %4018 = vmatprep.subr.bf16.mxu0 0
    %4019 = vmatpush2.bf16.msra.mxu0 0
    %4020 = vmatprep.subr.bf16.mxu0 0
    %4021 = vmatpush2.bf16.msra.mxu0 0
    %4022 = vmatprep.mubr.bf16.mxu0 0
    %4023 = vmatmul.mubr.bf16.gmra.mxu0 %v3988
    %v4024 = vpop.f32.mrf.mxu0
    %v4025 = vadd.f32 %v3973, %v4024
    %v4026 = vpop.f32.mrf.mxu0
    %v4027 = vpop.f32.mrf.mxu0
    %v4028 = vadd.f32 %v3973, %v4027
    %v4029 = vpop.f32.mrf.mxu0
    %4030 = vdwg.mxu0
    %v4031 = vmul.f32 %v4025, 0.5
    %v4032 = vmul.f32 %v4028, 0.5
    %v4033 = vmul.f32 %v4025, 0.044715
    %v4034 = vmul.f32 %v4028, 0.044715
    %v4035 = vmul.f32 %v4033, %v4025
    %v4036 = vmul.f32 %v4034, %v4028
    %v4037 = vmul.f32 %v4035, %v4025
    %v4038 = vmul.f32 %v4036, %v4028
    %v4039 = vadd.f32 %v4025, %v4037
    %v4040 = vadd.f32 %v4028, %v4038
    %v4041 = vmul.f32 %v4039, 0.7978846
    %v4042 = vmul.f32 %v4040, 0.7978846
    %v4043 = vtanh.pop %v4041
    %v4044 = vtanh.pop %v4042
    %v4045 = vadd.f32 %v4043, 1.0
    %v4046 = vadd.f32 %v4044, 1.0
    %v4047 = vmul.f32 %v4031, %v4045
    %v4048 = vmul.f32 %v4032, %v4046
    %v4049 = vpack.c.bf16 %v4048, %v4047
    %s4050 = scalar_lea.vmem %s6, 64
    %v4051 = vld [vmem:[%s4050] sm:$0xf]
    %v4052 = vld [vmem:[%s4050 + $0x4] sm:$0xf]
    %v4053 = vld [vmem:[%s4050 + $0x8] sm:$0xf]
    %v4054 = vld [vmem:[%s4050 + $0xc] sm:$0xf]
    %v4055 = vld [vmem:[%s4050 + $0x10] sm:$0xf]
    %v4056 = vld [vmem:[%s4050 + $0x14] sm:$0xf]
    %v4057 = vld [vmem:[%s4050 + $0x18] sm:$0xf]
    %v4058 = vld [vmem:[%s4050 + $0x1c] sm:$0xf]
    %v4059 = vld [vmem:[%s4050 + $0x20] sm:$0xf]
    %v4060 = vld [vmem:[%s4050 + $0x24] sm:$0xf]
    %v4061 = vld [vmem:[%s4050 + $0x28] sm:$0xf]
    %v4062 = vld [vmem:[%s4050 + $0x2c] sm:$0xf]
    %v4063 = vld [vmem:[%s4050 + $0x30] sm:$0xf]
    %v4064 = vld [vmem:[%s4050 + $0x34] sm:$0xf]
    %v4065 = vld [vmem:[%s4050 + $0x38] sm:$0xf]
    %v4066 = vld [vmem:[%s4050 + $0x3c] sm:$0xf]
    %v4067 = vlaneseq
    %v4068 = vshrl.u32 %v4067, 7
    %v4069 = vsub.s32 5, %v4068
    %v4070 = vrot.slane %v2104, %v4069
    %v4087 = vunpack.c.l.b16 %v4051
    %v4088 = vunpack.c.l.b16 %v4052
    %v4089 = vunpack.c.l.b16 %v4053
    %v4090 = vunpack.c.l.b16 %v4054
    %v4091 = vunpack.c.l.b16 %v4055
    %v4092 = vunpack.c.l.b16 %v4056
    %v4093 = vunpack.c.l.b16 %v4057
    %v4094 = vunpack.c.l.b16 %v4058
    %v4095 = vunpack.c.l.b16 %v4059
    %v4096 = vunpack.c.l.b16 %v4060
    %v4097 = vunpack.c.l.b16 %v4061
    %v4098 = vunpack.c.l.b16 %v4062
    %v4099 = vunpack.c.l.b16 %v4063
    %v4100 = vunpack.c.l.b16 %v4064
    %v4101 = vunpack.c.l.b16 %v4065
    %v4102 = vunpack.c.l.b16 %v4066
    %v4103 = vpack.c.b16 %v4088, %v4087
    %v4104 = vpack.c.b16 %v4090, %v4089
    %v4105 = vpack.c.b16 %v4092, %v4091
    %v4106 = vpack.c.b16 %v4094, %v4093
    %v4107 = vpack.c.b16 %v4096, %v4095
    %v4108 = vpack.c.b16 %v4098, %v4097
    %v4109 = vpack.c.b16 %v4100, %v4099
    %v4110 = vpack.c.b16 %v4102, %v4101
    %4119 = vmatprep.subr.bf16.mxu0 0
    %4120 = vmatpush1.bf16.msra.mxu0 %v4110
    %4121 = vmatprep.subr.bf16.mxu0 0
    %4122 = vmatpush1.bf16.msra.mxu0 %v4109
    %4123 = vmatprep.subr.bf16.mxu0 0
    %4124 = vmatpush1.bf16.msra.mxu0 %v4108
    %4125 = vmatprep.subr.bf16.mxu0 0
    %4126 = vmatpush1.bf16.msra.mxu0 %v4107
    %4127 = vmatprep.subr.bf16.mxu0 0
    %4128 = vmatpush1.bf16.msra.mxu0 %v4106
    %4129 = vmatprep.subr.bf16.mxu0 0
    %4130 = vmatpush1.bf16.msra.mxu0 %v4105
    %4131 = vmatprep.subr.bf16.mxu0 0
    %4132 = vmatpush1.bf16.msra.mxu0 %v4104
    %4133 = vmatprep.subr.bf16.mxu0 0
    %4134 = vmatpush1.bf16.msra.mxu0 %v4103
    %4135 = vmatprep.subr.bf16.mxu0 0
    %4136 = vmatpush2.bf16.msra.mxu0 0
    %4137 = vmatprep.subr.bf16.mxu0 0
    %4138 = vmatpush2.bf16.msra.mxu0 0
    %4139 = vmatprep.subr.bf16.mxu0 0
    %4140 = vmatpush2.bf16.msra.mxu0 0
    %4141 = vmatprep.subr.bf16.mxu0 0
    %4142 = vmatpush2.bf16.msra.mxu0 0
    %4143 = vmatprep.subr.bf16.mxu0 0
    %4144 = vmatpush2.bf16.msra.mxu0 0
    %4145 = vmatprep.subr.bf16.mxu0 0
    %4146 = vmatpush2.bf16.msra.mxu0 0
    %4147 = vmatprep.subr.bf16.mxu0 0
    %4148 = vmatpush2.bf16.msra.mxu0 0
    %4149 = vmatprep.subr.bf16.mxu0 0
    %4150 = vmatpush2.bf16.msra.mxu0 0
    %4151 = vmatprep.mubr.bf16.mxu0 0
    %4152 = vmatmul.mubr.bf16.gmra.mxu0 %v4049
    %v4153 = vpop.f32.mrf.mxu0
    %v4154 = vadd.f32 %v4070, %v4153
    %v4155 = vpop.f32.mrf.mxu0
    %v4156 = vpop.f32.mrf.mxu0
    %v4157 = vadd.f32 %v4070, %v4156
    %v4158 = vpop.f32.mrf.mxu0
    %4159 = vdwg.mxu0
    %v4160 = vadd.f32 %v4154, %v3923
    %v4161 = vadd.f32 %v4157, %v3924
    %v4162 = vld [vmem:[%s9] sm:$0x3]
    %v4163 = vsel %vm50, %v4160, 0.0
    %4164 = vadd.xlane.f32.xlu0 %v4163
    %v4165 = vpop.xlane.xlu0 %4164
    %v4166 = vsel %vm50, %v4161, 0.0
    %4167 = vadd.xlane.f32.xlu0 %v4166
    %v4168 = vpop.xlane.xlu0 %4167
    %v4169 = vmul.f32 %v4165, %v57
    %v4170 = vmul.f32 %v4168, %v57
    %v4171 = vsub.f32 %v4160, %v4169
    %v4172 = vsub.f32 %v4161, %v4170
    %v4173 = vmul.f32 %v4171, %v4171
    %v4174 = vmul.f32 %v4172, %v4172
    %v4175 = vsel %vm50, %v4173, 0.0
    %4176 = vadd.xlane.f32.xlu0 %v4175
    %v4177 = vpop.xlane.xlu0 %4176
    %v4178 = vsel %vm50, %v4174, 0.0
    %4179 = vadd.xlane.f32.xlu0 %v4178
    %v4180 = vpop.xlane.xlu0 %4179
    %v4181 = vmul.f32 %v4177, %v57
    %v4182 = vmul.f32 %v4180, %v57
    %v4183 = vadd.f32 %v4181, 1e-05
    %v4184 = vadd.f32 %v4182, 1e-05
    %v4185 = vrsqrt.pop %v4183
    %v4186 = vrsqrt.pop %v4184
    %v4187 = vmul.f32 %v4171, %v4185
    %v4188 = vmul.f32 %v4172, %v4186
    %v4189 = vlaneseq
    %v4190 = vshrl.u32 %v4189, 7
    %v4191 = vsub.s32 0, %v4190
    %v4192 = vrot.slane %v4162, %v4191
    %v4193 = vmul.f32 %v4192, %v4187
    %v4194 = vmul.f32 %v4192, %v4188
    %v4195 = vlaneseq
    %v4196 = vshrl.u32 %v4195, 7
    %v4197 = vsub.s32 1, %v4196
    %v4198 = vrot.slane %v4162, %v4197
    %v4199 = vadd.f32 %v4193, %v4198
    %v4200 = vadd.f32 %v4194, %v4198
    %v4201 = vpack.c.bf16 %v4200, %v4199
    %v4202 = vld [vmem:[%s10] sm:$0xf]
    %v4203 = vld [vmem:[%s10 + $0x4] sm:$0xf]
    %v4204 = vld [vmem:[%s10 + $0x8] sm:$0xf]
    %v4205 = vld [vmem:[%s10 + $0xc] sm:$0xf]
    %v4210 = vunpack.c.l.b16 %v4202
    %v4211 = vunpack.c.l.b16 %v4203
    %v4212 = vunpack.c.l.b16 %v4204
    %v4213 = vunpack.c.l.b16 %v4205
    %v4214 = vpack.c.b16 %v4211, %v4210
    %v4215 = vpack.c.b16 %v4213, %v4212
    %v4219 = vsel %vm50, %v4201, 0
    %4221 = vmatprep.subr.bf16.mxu0 0
    %4222 = vmatpush1.bf16.msra.mxu0 0
    %4223 = vmatprep.subr.bf16.mxu0 0
    %4224 = vmatpush1.bf16.msra.mxu0 0
    %4225 = vmatprep.subr.bf16.mxu0 0
    %4226 = vmatpush1.bf16.msra.mxu0 0
    %4227 = vmatprep.subr.bf16.mxu0 0
    %4228 = vmatpush1.bf16.msra.mxu0 0
    %4229 = vmatprep.subr.bf16.mxu0 0
    %4230 = vmatpush1.bf16.msra.mxu0 0
    %4231 = vmatprep.subr.bf16.mxu0 0
    %4232 = vmatpush1.bf16.msra.mxu0 0
    %4233 = vmatprep.subr.bf16.mxu0 0
    %4234 = vmatpush1.bf16.msra.mxu0 %v4215
    %4235 = vmatprep.subr.bf16.mxu0 0
    %4236 = vmatpush1.bf16.msra.mxu0 %v4214
    %4237 = vmatprep.subr.bf16.mxu0 0
    %4238 = vmatpush2.bf16.msra.mxu0 0
    %4239 = vmatprep.subr.bf16.mxu0 0
    %4240 = vmatpush2.bf16.msra.mxu0 0
    %4241 = vmatprep.subr.bf16.mxu0 0
    %4242 = vmatpush2.bf16.msra.mxu0 0
    %4243 = vmatprep.subr.bf16.mxu0 0
    %4244 = vmatpush2.bf16.msra.mxu0 0
    %4245 = vmatprep.subr.bf16.mxu0 0
    %4246 = vmatpush2.bf16.msra.mxu0 0
    %4247 = vmatprep.subr.bf16.mxu0 0
    %4248 = vmatpush2.bf16.msra.mxu0 0
    %4249 = vmatprep.subr.bf16.mxu0 0
    %4250 = vmatpush2.bf16.msra.mxu0 0
    %4251 = vmatprep.subr.bf16.mxu0 0
    %4252 = vmatpush2.bf16.msra.mxu0 0
    %4253 = vmatprep.mubr.bf16.mxu0 0
    %4254 = vmatmul.mubr.bf16.gmra.mxu0 %v4219
    %v4255 = vpop.f32.mrf.mxu0
    %v4256 = vadd.f32 0.0, %v4255
    %v4257 = vpop.f32.mrf.mxu0
    %v4258 = vpop.f32.mrf.mxu0
    %v4259 = vadd.f32 0.0, %v4258
    %v4260 = vpop.f32.mrf.mxu0
    %4261 = vdwg.mxu0
    %4262 = vst [vmem:[#allocation2] sm:$0xff] %v4256
    %4263 = vst [vmem:[#allocation2 + $0x8] sm:$0xff] %v4259
    // Predicated region
    $region46: #{tpu_custom_call.1} parent=1 // pred_check
      _
    $region47: #{tpu_custom_call.1} parent=1 // pred_check_branch
      %4265 = sbr.rel (0) target = $region49
    $region48: #{tpu_custom_call.1} parent=1 // pred_region
      %s4267 = ssub.s32 256, 256
      %4268 = vsyncadd [#allocation3], %s4267
      %s4269 = sshll.u32 [#allocation2], 4
      %s4270 = int_to_ptr.vmem [resolvable:$true] %s4269
      %4275 = dma.vmem_to_hbm [thread:$0]  %s4270, 256, %s11, [#allocation3], 128, 128, 8
    $region49: #{tpu_custom_call.1} parent=1 // pred_fallthru
      _
    // Predicated region
    $region50: #{tpu_custom_call.1} parent=1 // pred_check
      _
    $region51: #{tpu_custom_call.1} parent=1 // pred_check_branch
      %4277 = sbr.rel (0) target = $region53
    $region52: #{tpu_custom_call.1} parent=1 // pred_region
      %4278 = dma.done [#allocation3], 256
    $region53: #{tpu_custom_call.1} parent=1 // pred_fallthru
      _
    %4279 = vsyncpa [#allocation3], 1

</llo_original>
